<compile_context>
chip_gen: v5e
topology: v5e:2x2
jax: 0.10.0
libtpu: 0.0.40
codegen_flags: <defaults>
</compile_context>

<pallas_src>
import numpy as np
import jax
import jax.numpy as jnp
from jax.experimental import pallas as pl


# ----------------------- constant selection matrices ----------------------- #

def _conv_select_T(H, W, stride):
    """Transposed 0/1 tap-selection matrix, shape (H*W, 9*OH*OW).

    Column t*OH*OW + oh*OW + ow selects flattened input pixel
    (stride*oh + kh - 1, stride*ow + kw - 1) for tap t = kh*3 + kw
    (all-zero column if that pixel lies in the zero padding).
    """
    KH = KW = 3
    OH = (H + 2 - KH) // stride + 1
    OW = (W + 2 - KW) // stride + 1
    M = OH * OW
    G = np.zeros((H * W, 9 * M), np.float32)
    for kh in range(KH):
        for kw in range(KW):
            t = kh * KW + kw
            for oh in range(OH):
                for ow in range(OW):
                    h = stride * oh + kh - 1
                    w = stride * ow + kw - 1
                    if 0 <= h < H and 0 <= w < W:
                        G[h * W + w, t * M + oh * OW + ow] = 1.0
    # <=1 nonzero per column => each selection-matmul output element is an exact copy
    # of one bf16 input value, so re-casting the f32 accumulator to bf16 is exact.
    assert (np.count_nonzero(G, axis=0) <= 1).all()
    return G, OH, OW


def _pool_select_T(H, W):
    """MaxPool2d(2, stride=2, padding=1) as 4 transposed selection matrices + bias.

    G[t] (H*W, OH*OW) gathers window tap t = kh*2 + kw; B[t] (1, OH*OW) is -1e30 where
    that tap falls in the padding (so it never wins the max).
    """
    OH = (H + 2 - 2) // 2 + 1
    OW = (W + 2 - 2) // 2 + 1
    P = OH * OW
    G = np.zeros((4, H * W, P), np.float32)
    B = np.zeros((4, 1, P), np.float32)
    for kh in range(2):
        for kw in range(2):
            t = kh * 2 + kw
            for oh in range(OH):
                for ow in range(OW):
                    h = 2 * oh + kh - 1
                    w = 2 * ow + kw - 1
                    if 0 <= h < H and 0 <= w < W:
                        G[t, h * W + w, oh * OW + ow] = 1.0
                    else:
                        B[t, 0, oh * OW + ow] = -1e30
    # every pooling window must contain >=1 in-bounds element, otherwise the -1e30
    # sentinel could leak into the output (holds for 4x4 input with pad=1).
    assert ((G.sum(axis=1) > 0).any(axis=0)).all()
    return G, B, OH, OW


# ------------------------------ fused kernel ------------------------------- #

def _fused_kernel(x_ref, g1_ref, g2_ref, g3_ref, gp_ref, pb_ref,
                  w1_ref, w2_ref, w3_ref, o_ref):
    f32, bf16 = jnp.float32, jnp.bfloat16

    def conv(act_t, g_ref, w_ref):
        # act_t: (N*Cin, S_in)        bf16, channels-major (rows = (sample, channel))
        # g_ref: (S_in, 9*M)          bf16 transposed tap-selection (<=1 nonzero / col)
        # w_ref: (9, N*Cout, N*Cin)   bf16 block-diag-over-batch transposed weights
        m = g_ref.shape[1] // 9
        # One matmul gathers all 9 shifted/strided tap activations for every
        # (sample, channel) row; values are exact copies of bf16 inputs so the
        # bf16 re-cast below is exact.
        taps = jnp.dot(act_t, g_ref[...], preferred_element_type=f32)   # (N*Cin, 9*M)
        taps = taps.astype(bf16)
        acc = jnp.dot(w_ref[0], taps[:, 0:m], preferred_element_type=f32)
        for t in range(1, 9):                          # 9 accumulated MXU matmuls
            acc = acc + jnp.dot(w_ref[t], taps[:, t * m:(t + 1) * m],
                                preferred_element_type=f32)
        return acc                                     # (N*Cout, M) f32

    x = x_ref[...].astype(bf16)                        # (N*C0, H0*W0)
    y1 = conv(x, g1_ref, w1_ref)                       # (N*8,  64)   8x8 spatial
    y2 = conv(y1.astype(bf16), g2_ref, w2_ref)         # (N*32, 16)   4x4 spatial
    y3 = conv(y2.astype(bf16), g3_ref, w3_ref)         # (N*64, 16)   f32, 4x4 spatial

    # MaxPool2d(2, stride=2, padding=1) in f32 directly on the conv3 accumulator:
    # 4 exact 0/1 selection matmuls (one per window tap) + -1e30 bias on padded taps
    # + elementwise max. No bf16 rounding of y3.
    pooled = jnp.dot(y3, gp_ref[0], preferred_element_type=f32) + pb_ref[0]
    for t in range(1, gp_ref.shape[0]):
        cand = jnp.dot(y3, gp_ref[t], preferred_element_type=f32) + pb_ref[t]
        pooled = jnp.maximum(pooled, cand)
    o_ref[...] = pooled                                # (N*c3, 9) f32, NCHW-contiguous


# ------------------------------ model wrapper ------------------------------ #

def simple_conv_model(x_nchw, params):
    """Forward pass of SimpleConvModel. x: (N, 32, H, W) NCHW -> (N, 64, H', W') NCHW."""
    w1, w2, w3 = params                                # HWIO: (3, 3, Cin, Cout)
    N, C0, H0, W0 = x_nchw.shape
    bf16 = jnp.bfloat16

    # Trace-time numpy constants (baked literals, no runtime ops).
    G1, H1, W1d = _conv_select_T(H0, W0, 2)            # conv1: stride 2
    G2, H2, W2d = _conv_select_T(H1, W1d, 2)           # conv2: stride 2
    G3, H3, W3d = _conv_select_T(H2, W2d, 1)           # conv3: stride 1
    GP, PB, HP, WP = _pool_select_T(H3, W3d)           # maxpool 2x2/2, pad 1
    c1, c2, c3 = w1.shape[-1], w2.shape[-1], w3.shape[-1]
    mp = HP * WP

    g1 = jnp.asarray(G1, bf16)
    g2 = jnp.asarray(G2, bf16)
    g3 = jnp.asarray(G3, bf16)
    gp = jnp.asarray(GP, jnp.float32)
    pb = jnp.asarray(PB, jnp.float32)

    # Block-diagonal-over-batch transposed weights: kron(I_N, W_t^T), shape
    # (9, N*Cout, N*Cin). Weight-only preprocessing (tiny, off the activation path;
    # could be packed once and cached).
    eye = jnp.eye(N, dtype=bf16)

    def pack(w):
        cin, cout = w.shape[2], w.shape[3]
        wt = w.reshape(9, cin, cout).astype(bf16)                  # tap-major
        blk = jnp.einsum('ab,tio->taobi', eye, wt)                 # (9,N,Cout,N,Cin)
        return blk.reshape(9, N * cout, N * cin)

    w1b, w2b, w3b = pack(w1), pack(w2), pack(w3)

    # NCHW -> (N*C0, H0*W0): free, contiguity-preserving reshape (no transpose launch).
    x2 = x_nchw.reshape(N * C0, H0 * W0)

    out = pl.pallas_call(
        _fused_kernel,
        out_shape=jax.ShapeDtypeStruct((N * c3, mp), jnp.float32),
        grid=(1,),                                     # whole batch in one step
        in_specs=[
            pl.BlockSpec(x2.shape, lambda i: (0, 0)),
            pl.BlockSpec(g1.shape, lambda i: (0, 0)),
            pl.BlockSpec(g2.shape, lambda i: (0, 0)),
            pl.BlockSpec(g3.shape, lambda i: (0, 0)),
            pl.BlockSpec(gp.shape, lambda i: (0, 0, 0)),
            pl.BlockSpec(pb.shape, lambda i: (0, 0, 0)),
            pl.BlockSpec(w1b.shape, lambda i: (0, 0, 0)),
            pl.BlockSpec(w2b.shape, lambda i: (0, 0, 0)),
            pl.BlockSpec(w3b.shape, lambda i: (0, 0, 0)),
        ],
        out_specs=pl.BlockSpec((N * c3, mp), lambda i: (0, 0)),
    )(x2, g1, g2, g3, gp, pb, w1b, w2b, w3b)

    # Rows are already (sample, channel)-major, cols are (oh, ow): free reshape to NCHW.
    return out.reshape(N, c3, HP, WP)


# ------------------------------- reference --------------------------------- #

def _reference(x_nchw, params):
    w1, w2, w3 = params

    def conv(x, w, s):
        return jax.lax.conv_general_dilated(
            x, w, (s, s), ((1, 1), (1, 1)),
            dimension_numbers=("NCHW", "HWIO", "NCHW"),
            precision=jax.lax.Precision.HIGHEST)

    o = conv(x_nchw, w1, 2)
    o = conv(o, w2, 2)
    o = conv(o, w3, 1)
    o = jax.lax.reduce_window(o, -jnp.inf, jax.lax.max,
                              (1, 1, 2, 2), (1, 1, 2, 2),
                              ((0, 0), (0, 0), (1, 1), (1, 1)))
    return o


# --------------------------------- main ------------------------------------ #

if __name__ == "__main__":
    key = jax.random.PRNGKey(0)
    kx, k1, k2, k3 = jax.random.split(key, 4)

    # Input consistent with Conv2d(in_channels=32): small batch/spatial.
    x = jax.random.normal(kx, (2, 32, 16, 16), jnp.float32)

    def init_w(k, cin, cout):
        # deterministic, fan-in scaled; stored HWIO
        return jax.random.normal(k, (3, 3, cin, cout), jnp.float32) / jnp.sqrt(9.0 * cin)

    params = (init_w(k1, 32, 8), init_w(k2, 8, 32), init_w(k3, 32, 64))

    out = jax.block_until_ready(jax.jit(simple_conv_model)(x, params))
    assert out.shape == (2, 64, 3, 3), f"unexpected output shape {out.shape}"

    ref = jax.block_until_ready(jax.jit(_reference)(x, params))
    assert jnp.allclose(out, ref, atol=2e-2, rtol=2e-2), "mismatch vs lax reference"

    print("KERNEL_OK")
</pallas_src>

<mosaic_0001>
module attributes {stable_mosaic.version = 11 : i64} {
  func.func @_fused_kernel(%arg0: i32, %arg1: memref<64x256xf32, #tpu.memory_space<vmem>>, %arg2: memref<256x576xbf16, #tpu.memory_space<vmem>>, %arg3: memref<64x144xbf16, #tpu.memory_space<vmem>>, %arg4: memref<16x144xbf16, #tpu.memory_space<vmem>>, %arg5: memref<4x16x9xf32, #tpu.memory_space<vmem>>, %arg6: memref<4x1x9xf32, #tpu.memory_space<vmem>>, %arg7: memref<9x16x64xbf16, #tpu.memory_space<vmem>>, %arg8: memref<9x64x16xbf16, #tpu.memory_space<vmem>>, %arg9: memref<9x128x64xbf16, #tpu.memory_space<vmem>>, %arg10: memref<128x9xf32, #tpu.memory_space<vmem>>) attributes {dimension_semantics = [#tpu.dimension_semantics<arbitrary>], iteration_bounds = array<i64: 1>, scalar_prefetch = 0 : i64, scratch_operands = 0 : i64, tpu.core_type = #tpu.core_type<tc>, window_params = [{pipeline_mode = #tpu.pipeline_mode<synchronous>, transform_indices = @transform_0, window_bounds = array<i64: 64, 256>}, {pipeline_mode = #tpu.pipeline_mode<synchronous>, transform_indices = @transform_1, window_bounds = array<i64: 256, 576>}, {pipeline_mode = #tpu.pipeline_mode<synchronous>, transform_indices = @transform_2, window_bounds = array<i64: 64, 144>}, {pipeline_mode = #tpu.pipeline_mode<synchronous>, transform_indices = @transform_3, window_bounds = array<i64: 16, 144>}, {pipeline_mode = #tpu.pipeline_mode<synchronous>, transform_indices = @transform_4, window_bounds = array<i64: 4, 16, 9>}, {pipeline_mode = #tpu.pipeline_mode<synchronous>, transform_indices = @transform_5, window_bounds = array<i64: 4, 1, 9>}, {pipeline_mode = #tpu.pipeline_mode<synchronous>, transform_indices = @transform_6, window_bounds = array<i64: 9, 16, 64>}, {pipeline_mode = #tpu.pipeline_mode<synchronous>, transform_indices = @transform_7, window_bounds = array<i64: 9, 64, 16>}, {pipeline_mode = #tpu.pipeline_mode<synchronous>, transform_indices = @transform_8, window_bounds = array<i64: 9, 128, 64>}, {pipeline_mode = #tpu.pipeline_mode<synchronous>, transform_indices = @transform_9, window_bounds = array<i64: 128, 9>}]} {
    %c0 = arith.constant 0 : index
    %c0_0 = arith.constant 0 : index
    %0 = vector.load %arg1[%c0, %c0_0] : memref<64x256xf32, #tpu.memory_space<vmem>>, vector<64x256xf32>
    %1 = arith.truncf %0 : vector<64x256xf32> to vector<64x256xbf16>
    %c0_1 = arith.constant 0 : index
    %c0_2 = arith.constant 0 : index
    %2 = vector.load %arg2[%c0_1, %c0_2] : memref<256x576xbf16, #tpu.memory_space<vmem>>, vector<256x576xbf16>
    %cst = arith.constant dense<0.000000e+00> : vector<64x576xf32>
    %3 = tpu.matmul %1, %2, %cst {dimension_numbers = #tpu.dot_dimension_numbers<[1], [0], [0], [1], [0, 0, 1, 1], [], []>} : vector<64x256xbf16>, vector<256x576xbf16>, vector<64x576xf32> -> vector<64x576xf32>
    %4 = arith.truncf %3 : vector<64x576xf32> to vector<64x576xbf16>
    %c0_3 = arith.constant 0 : index
    %c0_4 = arith.constant 0 : index
    %c0_5 = arith.constant 0 : index
    %5 = vector.load %arg7[%c0_3, %c0_4, %c0_5] : memref<9x16x64xbf16, #tpu.memory_space<vmem>>, vector<1x16x64xbf16>
    %6 = vector.shape_cast %5 : vector<1x16x64xbf16> to vector<16x64xbf16>
    %7 = vector.extract_strided_slice %4 {offsets = [0, 0], sizes = [64, 64], strides = [1, 1]} : vector<64x576xbf16> to vector<64x64xbf16>
    %cst_6 = arith.constant dense<0.000000e+00> : vector<16x64xf32>
    %8 = tpu.matmul %6, %7, %cst_6 {dimension_numbers = #tpu.dot_dimension_numbers<[1], [0], [0], [1], [0, 0, 1, 1], [], []>} : vector<16x64xbf16>, vector<64x64xbf16>, vector<16x64xf32> -> vector<16x64xf32>
    %c1 = arith.constant 1 : index
    %c0_7 = arith.constant 0 : index
    %c0_8 = arith.constant 0 : index
    %9 = vector.load %arg7[%c1, %c0_7, %c0_8] : memref<9x16x64xbf16, #tpu.memory_space<vmem>>, vector<1x16x64xbf16>
    %10 = vector.shape_cast %9 : vector<1x16x64xbf16> to vector<16x64xbf16>
    %11 = vector.extract_strided_slice %4 {offsets = [0, 64], sizes = [64, 64], strides = [1, 1]} : vector<64x576xbf16> to vector<64x64xbf16>
    %cst_9 = arith.constant dense<0.000000e+00> : vector<16x64xf32>
    %12 = tpu.matmul %10, %11, %cst_9 {dimension_numbers = #tpu.dot_dimension_numbers<[1], [0], [0], [1], [0, 0, 1, 1], [], []>} : vector<16x64xbf16>, vector<64x64xbf16>, vector<16x64xf32> -> vector<16x64xf32>
    %13 = arith.addf %8, %12 : vector<16x64xf32>
    %c2 = arith.constant 2 : index
    %c0_10 = arith.constant 0 : index
    %c0_11 = arith.constant 0 : index
    %14 = vector.load %arg7[%c2, %c0_10, %c0_11] : memref<9x16x64xbf16, #tpu.memory_space<vmem>>, vector<1x16x64xbf16>
    %15 = vector.shape_cast %14 : vector<1x16x64xbf16> to vector<16x64xbf16>
    %16 = vector.extract_strided_slice %4 {offsets = [0, 128], sizes = [64, 64], strides = [1, 1]} : vector<64x576xbf16> to vector<64x64xbf16>
    %cst_12 = arith.constant dense<0.000000e+00> : vector<16x64xf32>
    %17 = tpu.matmul %15, %16, %cst_12 {dimension_numbers = #tpu.dot_dimension_numbers<[1], [0], [0], [1], [0, 0, 1, 1], [], []>} : vector<16x64xbf16>, vector<64x64xbf16>, vector<16x64xf32> -> vector<16x64xf32>
    %18 = arith.addf %13, %17 : vector<16x64xf32>
    %c3 = arith.constant 3 : index
    %c0_13 = arith.constant 0 : index
    %c0_14 = arith.constant 0 : index
    %19 = vector.load %arg7[%c3, %c0_13, %c0_14] : memref<9x16x64xbf16, #tpu.memory_space<vmem>>, vector<1x16x64xbf16>
    %20 = vector.shape_cast %19 : vector<1x16x64xbf16> to vector<16x64xbf16>
    %21 = vector.extract_strided_slice %4 {offsets = [0, 192], sizes = [64, 64], strides = [1, 1]} : vector<64x576xbf16> to vector<64x64xbf16>
    %cst_15 = arith.constant dense<0.000000e+00> : vector<16x64xf32>
    %22 = tpu.matmul %20, %21, %cst_15 {dimension_numbers = #tpu.dot_dimension_numbers<[1], [0], [0], [1], [0, 0, 1, 1], [], []>} : vector<16x64xbf16>, vector<64x64xbf16>, vector<16x64xf32> -> vector<16x64xf32>
    %23 = arith.addf %18, %22 : vector<16x64xf32>
    %c4 = arith.constant 4 : index
    %c0_16 = arith.constant 0 : index
    %c0_17 = arith.constant 0 : index
    %24 = vector.load %arg7[%c4, %c0_16, %c0_17] : memref<9x16x64xbf16, #tpu.memory_space<vmem>>, vector<1x16x64xbf16>
    %25 = vector.shape_cast %24 : vector<1x16x64xbf16> to vector<16x64xbf16>
    %26 = vector.extract_strided_slice %4 {offsets = [0, 256], sizes = [64, 64], strides = [1, 1]} : vector<64x576xbf16> to vector<64x64xbf16>
    %cst_18 = arith.constant dense<0.000000e+00> : vector<16x64xf32>
    %27 = tpu.matmul %25, %26, %cst_18 {dimension_numbers = #tpu.dot_dimension_numbers<[1], [0], [0], [1], [0, 0, 1, 1], [], []>} : vector<16x64xbf16>, vector<64x64xbf16>, vector<16x64xf32> -> vector<16x64xf32>
    %28 = arith.addf %23, %27 : vector<16x64xf32>
    %c5 = arith.constant 5 : index
    %c0_19 = arith.constant 0 : index
    %c0_20 = arith.constant 0 : index
    %29 = vector.load %arg7[%c5, %c0_19, %c0_20] : memref<9x16x64xbf16, #tpu.memory_space<vmem>>, vector<1x16x64xbf16>
    %30 = vector.shape_cast %29 : vector<1x16x64xbf16> to vector<16x64xbf16>
    %31 = vector.extract_strided_slice %4 {offsets = [0, 320], sizes = [64, 64], strides = [1, 1]} : vector<64x576xbf16> to vector<64x64xbf16>
    %cst_21 = arith.constant dense<0.000000e+00> : vector<16x64xf32>
    %32 = tpu.matmul %30, %31, %cst_21 {dimension_numbers = #tpu.dot_dimension_numbers<[1], [0], [0], [1], [0, 0, 1, 1], [], []>} : vector<16x64xbf16>, vector<64x64xbf16>, vector<16x64xf32> -> vector<16x64xf32>
    %33 = arith.addf %28, %32 : vector<16x64xf32>
    %c6 = arith.constant 6 : index
    %c0_22 = arith.constant 0 : index
    %c0_23 = arith.constant 0 : index
    %34 = vector.load %arg7[%c6, %c0_22, %c0_23] : memref<9x16x64xbf16, #tpu.memory_space<vmem>>, vector<1x16x64xbf16>
    %35 = vector.shape_cast %34 : vector<1x16x64xbf16> to vector<16x64xbf16>
    %36 = vector.extract_strided_slice %4 {offsets = [0, 384], sizes = [64, 64], strides = [1, 1]} : vector<64x576xbf16> to vector<64x64xbf16>
    %cst_24 = arith.constant dense<0.000000e+00> : vector<16x64xf32>
    %37 = tpu.matmul %35, %36, %cst_24 {dimension_numbers = #tpu.dot_dimension_numbers<[1], [0], [0], [1], [0, 0, 1, 1], [], []>} : vector<16x64xbf16>, vector<64x64xbf16>, vector<16x64xf32> -> vector<16x64xf32>
    %38 = arith.addf %33, %37 : vector<16x64xf32>
    %c7 = arith.constant 7 : index
    %c0_25 = arith.constant 0 : index
    %c0_26 = arith.constant 0 : index
    %39 = vector.load %arg7[%c7, %c0_25, %c0_26] : memref<9x16x64xbf16, #tpu.memory_space<vmem>>, vector<1x16x64xbf16>
    %40 = vector.shape_cast %39 : vector<1x16x64xbf16> to vector<16x64xbf16>
    %41 = vector.extract_strided_slice %4 {offsets = [0, 448], sizes = [64, 64], strides = [1, 1]} : vector<64x576xbf16> to vector<64x64xbf16>
    %cst_27 = arith.constant dense<0.000000e+00> : vector<16x64xf32>
    %42 = tpu.matmul %40, %41, %cst_27 {dimension_numbers = #tpu.dot_dimension_numbers<[1], [0], [0], [1], [0, 0, 1, 1], [], []>} : vector<16x64xbf16>, vector<64x64xbf16>, vector<16x64xf32> -> vector<16x64xf32>
    %43 = arith.addf %38, %42 : vector<16x64xf32>
    %c8 = arith.constant 8 : index
    %c0_28 = arith.constant 0 : index
    %c0_29 = arith.constant 0 : index
    %44 = vector.load %arg7[%c8, %c0_28, %c0_29] : memref<9x16x64xbf16, #tpu.memory_space<vmem>>, vector<1x16x64xbf16>
    %45 = vector.shape_cast %44 : vector<1x16x64xbf16> to vector<16x64xbf16>
    %46 = vector.extract_strided_slice %4 {offsets = [0, 512], sizes = [64, 64], strides = [1, 1]} : vector<64x576xbf16> to vector<64x64xbf16>
    %cst_30 = arith.constant dense<0.000000e+00> : vector<16x64xf32>
    %47 = tpu.matmul %45, %46, %cst_30 {dimension_numbers = #tpu.dot_dimension_numbers<[1], [0], [0], [1], [0, 0, 1, 1], [], []>} : vector<16x64xbf16>, vector<64x64xbf16>, vector<16x64xf32> -> vector<16x64xf32>
    %48 = arith.addf %43, %47 : vector<16x64xf32>
    %49 = arith.truncf %48 : vector<16x64xf32> to vector<16x64xbf16>
    %c0_31 = arith.constant 0 : index
    %c0_32 = arith.constant 0 : index
    %50 = vector.load %arg3[%c0_31, %c0_32] : memref<64x144xbf16, #tpu.memory_space<vmem>>, vector<64x144xbf16>
    %cst_33 = arith.constant dense<0.000000e+00> : vector<16x144xf32>
    %51 = tpu.matmul %49, %50, %cst_33 {dimension_numbers = #tpu.dot_dimension_numbers<[1], [0], [0], [1], [0, 0, 1, 1], [], []>} : vector<16x64xbf16>, vector<64x144xbf16>, vector<16x144xf32> -> vector<16x144xf32>
    %52 = arith.truncf %51 : vector<16x144xf32> to vector<16x144xbf16>
    %c0_34 = arith.constant 0 : index
    %c0_35 = arith.constant 0 : index
    %c0_36 = arith.constant 0 : index
    %53 = vector.load %arg8[%c0_34, %c0_35, %c0_36] : memref<9x64x16xbf16, #tpu.memory_space<vmem>>, vector<1x64x16xbf16>
    %54 = vector.shape_cast %53 : vector<1x64x16xbf16> to vector<64x16xbf16>
    %55 = vector.extract_strided_slice %52 {offsets = [0, 0], sizes = [16, 16], strides = [1, 1]} : vector<16x144xbf16> to vector<16x16xbf16>
    %cst_37 = arith.constant dense<0.000000e+00> : vector<64x16xf32>
    %56 = tpu.matmul %54, %55, %cst_37 {dimension_numbers = #tpu.dot_dimension_numbers<[1], [0], [0], [1], [0, 0, 1, 1], [], []>} : vector<64x16xbf16>, vector<16x16xbf16>, vector<64x16xf32> -> vector<64x16xf32>
    %c1_38 = arith.constant 1 : index
    %c0_39 = arith.constant 0 : index
    %c0_40 = arith.constant 0 : index
    %57 = vector.load %arg8[%c1_38, %c0_39, %c0_40] : memref<9x64x16xbf16, #tpu.memory_space<vmem>>, vector<1x64x16xbf16>
    %58 = vector.shape_cast %57 : vector<1x64x16xbf16> to vector<64x16xbf16>
    %59 = vector.extract_strided_slice %52 {offsets = [0, 16], sizes = [16, 16], strides = [1, 1]} : vector<16x144xbf16> to vector<16x16xbf16>
    %cst_41 = arith.constant dense<0.000000e+00> : vector<64x16xf32>
    %60 = tpu.matmul %58, %59, %cst_41 {dimension_numbers = #tpu.dot_dimension_numbers<[1], [0], [0], [1], [0, 0, 1, 1], [], []>} : vector<64x16xbf16>, vector<16x16xbf16>, vector<64x16xf32> -> vector<64x16xf32>
    %61 = arith.addf %56, %60 : vector<64x16xf32>
    %c2_42 = arith.constant 2 : index
    %c0_43 = arith.constant 0 : index
    %c0_44 = arith.constant 0 : index
    %62 = vector.load %arg8[%c2_42, %c0_43, %c0_44] : memref<9x64x16xbf16, #tpu.memory_space<vmem>>, vector<1x64x16xbf16>
    %63 = vector.shape_cast %62 : vector<1x64x16xbf16> to vector<64x16xbf16>
    %64 = vector.extract_strided_slice %52 {offsets = [0, 32], sizes = [16, 16], strides = [1, 1]} : vector<16x144xbf16> to vector<16x16xbf16>
    %cst_45 = arith.constant dense<0.000000e+00> : vector<64x16xf32>
    %65 = tpu.matmul %63, %64, %cst_45 {dimension_numbers = #tpu.dot_dimension_numbers<[1], [0], [0], [1], [0, 0, 1, 1], [], []>} : vector<64x16xbf16>, vector<16x16xbf16>, vector<64x16xf32> -> vector<64x16xf32>
    %66 = arith.addf %61, %65 : vector<64x16xf32>
    %c3_46 = arith.constant 3 : index
    %c0_47 = arith.constant 0 : index
    %c0_48 = arith.constant 0 : index
    %67 = vector.load %arg8[%c3_46, %c0_47, %c0_48] : memref<9x64x16xbf16, #tpu.memory_space<vmem>>, vector<1x64x16xbf16>
    %68 = vector.shape_cast %67 : vector<1x64x16xbf16> to vector<64x16xbf16>
    %69 = vector.extract_strided_slice %52 {offsets = [0, 48], sizes = [16, 16], strides = [1, 1]} : vector<16x144xbf16> to vector<16x16xbf16>
    %cst_49 = arith.constant dense<0.000000e+00> : vector<64x16xf32>
    %70 = tpu.matmul %68, %69, %cst_49 {dimension_numbers = #tpu.dot_dimension_numbers<[1], [0], [0], [1], [0, 0, 1, 1], [], []>} : vector<64x16xbf16>, vector<16x16xbf16>, vector<64x16xf32> -> vector<64x16xf32>
    %71 = arith.addf %66, %70 : vector<64x16xf32>
    %c4_50 = arith.constant 4 : index
    %c0_51 = arith.constant 0 : index
    %c0_52 = arith.constant 0 : index
    %72 = vector.load %arg8[%c4_50, %c0_51, %c0_52] : memref<9x64x16xbf16, #tpu.memory_space<vmem>>, vector<1x64x16xbf16>
    %73 = vector.shape_cast %72 : vector<1x64x16xbf16> to vector<64x16xbf16>
    %74 = vector.extract_strided_slice %52 {offsets = [0, 64], sizes = [16, 16], strides = [1, 1]} : vector<16x144xbf16> to vector<16x16xbf16>
    %cst_53 = arith.constant dense<0.000000e+00> : vector<64x16xf32>
    %75 = tpu.matmul %73, %74, %cst_53 {dimension_numbers = #tpu.dot_dimension_numbers<[1], [0], [0], [1], [0, 0, 1, 1], [], []>} : vector<64x16xbf16>, vector<16x16xbf16>, vector<64x16xf32> -> vector<64x16xf32>
    %76 = arith.addf %71, %75 : vector<64x16xf32>
    %c5_54 = arith.constant 5 : index
    %c0_55 = arith.constant 0 : index
    %c0_56 = arith.constant 0 : index
    %77 = vector.load %arg8[%c5_54, %c0_55, %c0_56] : memref<9x64x16xbf16, #tpu.memory_space<vmem>>, vector<1x64x16xbf16>
    %78 = vector.shape_cast %77 : vector<1x64x16xbf16> to vector<64x16xbf16>
    %79 = vector.extract_strided_slice %52 {offsets = [0, 80], sizes = [16, 16], strides = [1, 1]} : vector<16x144xbf16> to vector<16x16xbf16>
    %cst_57 = arith.constant dense<0.000000e+00> : vector<64x16xf32>
    %80 = tpu.matmul %78, %79, %cst_57 {dimension_numbers = #tpu.dot_dimension_numbers<[1], [0], [0], [1], [0, 0, 1, 1], [], []>} : vector<64x16xbf16>, vector<16x16xbf16>, vector<64x16xf32> -> vector<64x16xf32>
    %81 = arith.addf %76, %80 : vector<64x16xf32>
    %c6_58 = arith.constant 6 : index
    %c0_59 = arith.constant 0 : index
    %c0_60 = arith.constant 0 : index
    %82 = vector.load %arg8[%c6_58, %c0_59, %c0_60] : memref<9x64x16xbf16, #tpu.memory_space<vmem>>, vector<1x64x16xbf16>
    %83 = vector.shape_cast %82 : vector<1x64x16xbf16> to vector<64x16xbf16>
    %84 = vector.extract_strided_slice %52 {offsets = [0, 96], sizes = [16, 16], strides = [1, 1]} : vector<16x144xbf16> to vector<16x16xbf16>
    %cst_61 = arith.constant dense<0.000000e+00> : vector<64x16xf32>
    %85 = tpu.matmul %83, %84, %cst_61 {dimension_numbers = #tpu.dot_dimension_numbers<[1], [0], [0], [1], [0, 0, 1, 1], [], []>} : vector<64x16xbf16>, vector<16x16xbf16>, vector<64x16xf32> -> vector<64x16xf32>
    %86 = arith.addf %81, %85 : vector<64x16xf32>
    %c7_62 = arith.constant 7 : index
    %c0_63 = arith.constant 0 : index
    %c0_64 = arith.constant 0 : index
    %87 = vector.load %arg8[%c7_62, %c0_63, %c0_64] : memref<9x64x16xbf16, #tpu.memory_space<vmem>>, vector<1x64x16xbf16>
    %88 = vector.shape_cast %87 : vector<1x64x16xbf16> to vector<64x16xbf16>
    %89 = vector.extract_strided_slice %52 {offsets = [0, 112], sizes = [16, 16], strides = [1, 1]} : vector<16x144xbf16> to vector<16x16xbf16>
    %cst_65 = arith.constant dense<0.000000e+00> : vector<64x16xf32>
    %90 = tpu.matmul %88, %89, %cst_65 {dimension_numbers = #tpu.dot_dimension_numbers<[1], [0], [0], [1], [0, 0, 1, 1], [], []>} : vector<64x16xbf16>, vector<16x16xbf16>, vector<64x16xf32> -> vector<64x16xf32>
    %91 = arith.addf %86, %90 : vector<64x16xf32>
    %c8_66 = arith.constant 8 : index
    %c0_67 = arith.constant 0 : index
    %c0_68 = arith.constant 0 : index
    %92 = vector.load %arg8[%c8_66, %c0_67, %c0_68] : memref<9x64x16xbf16, #tpu.memory_space<vmem>>, vector<1x64x16xbf16>
    %93 = vector.shape_cast %92 : vector<1x64x16xbf16> to vector<64x16xbf16>
    %94 = vector.extract_strided_slice %52 {offsets = [0, 128], sizes = [16, 16], strides = [1, 1]} : vector<16x144xbf16> to vector<16x16xbf16>
    %cst_69 = arith.constant dense<0.000000e+00> : vector<64x16xf32>
    %95 = tpu.matmul %93, %94, %cst_69 {dimension_numbers = #tpu.dot_dimension_numbers<[1], [0], [0], [1], [0, 0, 1, 1], [], []>} : vector<64x16xbf16>, vector<16x16xbf16>, vector<64x16xf32> -> vector<64x16xf32>
    %96 = arith.addf %91, %95 : vector<64x16xf32>
    %97 = arith.truncf %96 : vector<64x16xf32> to vector<64x16xbf16>
    %c0_70 = arith.constant 0 : index
    %c0_71 = arith.constant 0 : index
    %98 = vector.load %arg4[%c0_70, %c0_71] : memref<16x144xbf16, #tpu.memory_space<vmem>>, vector<16x144xbf16>
    %cst_72 = arith.constant dense<0.000000e+00> : vector<64x144xf32>
    %99 = tpu.matmul %97, %98, %cst_72 {dimension_numbers = #tpu.dot_dimension_numbers<[1], [0], [0], [1], [0, 0, 1, 1], [], []>} : vector<64x16xbf16>, vector<16x144xbf16>, vector<64x144xf32> -> vector<64x144xf32>
    %100 = arith.truncf %99 : vector<64x144xf32> to vector<64x144xbf16>
    %c0_73 = arith.constant 0 : index
    %c0_74 = arith.constant 0 : index
    %c0_75 = arith.constant 0 : index
    %101 = vector.load %arg9[%c0_73, %c0_74, %c0_75] : memref<9x128x64xbf16, #tpu.memory_space<vmem>>, vector<1x128x64xbf16>
    %102 = vector.shape_cast %101 : vector<1x128x64xbf16> to vector<128x64xbf16>
    %103 = vector.extract_strided_slice %100 {offsets = [0, 0], sizes = [64, 16], strides = [1, 1]} : vector<64x144xbf16> to vector<64x16xbf16>
    %cst_76 = arith.constant dense<0.000000e+00> : vector<128x16xf32>
    %104 = tpu.matmul %102, %103, %cst_76 {dimension_numbers = #tpu.dot_dimension_numbers<[1], [0], [0], [1], [0, 0, 1, 1], [], []>} : vector<128x64xbf16>, vector<64x16xbf16>, vector<128x16xf32> -> vector<128x16xf32>
    %c1_77 = arith.constant 1 : index
    %c0_78 = arith.constant 0 : index
    %c0_79 = arith.constant 0 : index
    %105 = vector.load %arg9[%c1_77, %c0_78, %c0_79] : memref<9x128x64xbf16, #tpu.memory_space<vmem>>, vector<1x128x64xbf16>
    %106 = vector.shape_cast %105 : vector<1x128x64xbf16> to vector<128x64xbf16>
    %107 = vector.extract_strided_slice %100 {offsets = [0, 16], sizes = [64, 16], strides = [1, 1]} : vector<64x144xbf16> to vector<64x16xbf16>
    %cst_80 = arith.constant dense<0.000000e+00> : vector<128x16xf32>
    %108 = tpu.matmul %106, %107, %cst_80 {dimension_numbers = #tpu.dot_dimension_numbers<[1], [0], [0], [1], [0, 0, 1, 1], [], []>} : vector<128x64xbf16>, vector<64x16xbf16>, vector<128x16xf32> -> vector<128x16xf32>
    %109 = arith.addf %104, %108 : vector<128x16xf32>
    %c2_81 = arith.constant 2 : index
    %c0_82 = arith.constant 0 : index
    %c0_83 = arith.constant 0 : index
    %110 = vector.load %arg9[%c2_81, %c0_82, %c0_83] : memref<9x128x64xbf16, #tpu.memory_space<vmem>>, vector<1x128x64xbf16>
    %111 = vector.shape_cast %110 : vector<1x128x64xbf16> to vector<128x64xbf16>
    %112 = vector.extract_strided_slice %100 {offsets = [0, 32], sizes = [64, 16], strides = [1, 1]} : vector<64x144xbf16> to vector<64x16xbf16>
    %cst_84 = arith.constant dense<0.000000e+00> : vector<128x16xf32>
    %113 = tpu.matmul %111, %112, %cst_84 {dimension_numbers = #tpu.dot_dimension_numbers<[1], [0], [0], [1], [0, 0, 1, 1], [], []>} : vector<128x64xbf16>, vector<64x16xbf16>, vector<128x16xf32> -> vector<128x16xf32>
    %114 = arith.addf %109, %113 : vector<128x16xf32>
    %c3_85 = arith.constant 3 : index
    %c0_86 = arith.constant 0 : index
    %c0_87 = arith.constant 0 : index
    %115 = vector.load %arg9[%c3_85, %c0_86, %c0_87] : memref<9x128x64xbf16, #tpu.memory_space<vmem>>, vector<1x128x64xbf16>
    %116 = vector.shape_cast %115 : vector<1x128x64xbf16> to vector<128x64xbf16>
    %117 = vector.extract_strided_slice %100 {offsets = [0, 48], sizes = [64, 16], strides = [1, 1]} : vector<64x144xbf16> to vector<64x16xbf16>
    %cst_88 = arith.constant dense<0.000000e+00> : vector<128x16xf32>
    %118 = tpu.matmul %116, %117, %cst_88 {dimension_numbers = #tpu.dot_dimension_numbers<[1], [0], [0], [1], [0, 0, 1, 1], [], []>} : vector<128x64xbf16>, vector<64x16xbf16>, vector<128x16xf32> -> vector<128x16xf32>
    %119 = arith.addf %114, %118 : vector<128x16xf32>
    %c4_89 = arith.constant 4 : index
    %c0_90 = arith.constant 0 : index
    %c0_91 = arith.constant 0 : index
    %120 = vector.load %arg9[%c4_89, %c0_90, %c0_91] : memref<9x128x64xbf16, #tpu.memory_space<vmem>>, vector<1x128x64xbf16>
    %121 = vector.shape_cast %120 : vector<1x128x64xbf16> to vector<128x64xbf16>
    %122 = vector.extract_strided_slice %100 {offsets = [0, 64], sizes = [64, 16], strides = [1, 1]} : vector<64x144xbf16> to vector<64x16xbf16>
    %cst_92 = arith.constant dense<0.000000e+00> : vector<128x16xf32>
    %123 = tpu.matmul %121, %122, %cst_92 {dimension_numbers = #tpu.dot_dimension_numbers<[1], [0], [0], [1], [0, 0, 1, 1], [], []>} : vector<128x64xbf16>, vector<64x16xbf16>, vector<128x16xf32> -> vector<128x16xf32>
    %124 = arith.addf %119, %123 : vector<128x16xf32>
    %c5_93 = arith.constant 5 : index
    %c0_94 = arith.constant 0 : index
    %c0_95 = arith.constant 0 : index
    %125 = vector.load %arg9[%c5_93, %c0_94, %c0_95] : memref<9x128x64xbf16, #tpu.memory_space<vmem>>, vector<1x128x64xbf16>
    %126 = vector.shape_cast %125 : vector<1x128x64xbf16> to vector<128x64xbf16>
    %127 = vector.extract_strided_slice %100 {offsets = [0, 80], sizes = [64, 16], strides = [1, 1]} : vector<64x144xbf16> to vector<64x16xbf16>
    %cst_96 = arith.constant dense<0.000000e+00> : vector<128x16xf32>
    %128 = tpu.matmul %126, %127, %cst_96 {dimension_numbers = #tpu.dot_dimension_numbers<[1], [0], [0], [1], [0, 0, 1, 1], [], []>} : vector<128x64xbf16>, vector<64x16xbf16>, vector<128x16xf32> -> vector<128x16xf32>
    %129 = arith.addf %124, %128 : vector<128x16xf32>
    %c6_97 = arith.constant 6 : index
    %c0_98 = arith.constant 0 : index
    %c0_99 = arith.constant 0 : index
    %130 = vector.load %arg9[%c6_97, %c0_98, %c0_99] : memref<9x128x64xbf16, #tpu.memory_space<vmem>>, vector<1x128x64xbf16>
    %131 = vector.shape_cast %130 : vector<1x128x64xbf16> to vector<128x64xbf16>
    %132 = vector.extract_strided_slice %100 {offsets = [0, 96], sizes = [64, 16], strides = [1, 1]} : vector<64x144xbf16> to vector<64x16xbf16>
    %cst_100 = arith.constant dense<0.000000e+00> : vector<128x16xf32>
    %133 = tpu.matmul %131, %132, %cst_100 {dimension_numbers = #tpu.dot_dimension_numbers<[1], [0], [0], [1], [0, 0, 1, 1], [], []>} : vector<128x64xbf16>, vector<64x16xbf16>, vector<128x16xf32> -> vector<128x16xf32>
    %134 = arith.addf %129, %133 : vector<128x16xf32>
    %c7_101 = arith.constant 7 : index
    %c0_102 = arith.constant 0 : index
    %c0_103 = arith.constant 0 : index
    %135 = vector.load %arg9[%c7_101, %c0_102, %c0_103] : memref<9x128x64xbf16, #tpu.memory_space<vmem>>, vector<1x128x64xbf16>
    %136 = vector.shape_cast %135 : vector<1x128x64xbf16> to vector<128x64xbf16>
    %137 = vector.extract_strided_slice %100 {offsets = [0, 112], sizes = [64, 16], strides = [1, 1]} : vector<64x144xbf16> to vector<64x16xbf16>
    %cst_104 = arith.constant dense<0.000000e+00> : vector<128x16xf32>
    %138 = tpu.matmul %136, %137, %cst_104 {dimension_numbers = #tpu.dot_dimension_numbers<[1], [0], [0], [1], [0, 0, 1, 1], [], []>} : vector<128x64xbf16>, vector<64x16xbf16>, vector<128x16xf32> -> vector<128x16xf32>
    %139 = arith.addf %134, %138 : vector<128x16xf32>
    %c8_105 = arith.constant 8 : index
    %c0_106 = arith.constant 0 : index
    %c0_107 = arith.constant 0 : index
    %140 = vector.load %arg9[%c8_105, %c0_106, %c0_107] : memref<9x128x64xbf16, #tpu.memory_space<vmem>>, vector<1x128x64xbf16>
    %141 = vector.shape_cast %140 : vector<1x128x64xbf16> to vector<128x64xbf16>
    %142 = vector.extract_strided_slice %100 {offsets = [0, 128], sizes = [64, 16], strides = [1, 1]} : vector<64x144xbf16> to vector<64x16xbf16>
    %cst_108 = arith.constant dense<0.000000e+00> : vector<128x16xf32>
    %143 = tpu.matmul %141, %142, %cst_108 {dimension_numbers = #tpu.dot_dimension_numbers<[1], [0], [0], [1], [0, 0, 1, 1], [], []>} : vector<128x64xbf16>, vector<64x16xbf16>, vector<128x16xf32> -> vector<128x16xf32>
    %144 = arith.addf %139, %143 : vector<128x16xf32>
    %c0_109 = arith.constant 0 : index
    %c0_110 = arith.constant 0 : index
    %c0_111 = arith.constant 0 : index
    %145 = vector.load %arg5[%c0_109, %c0_110, %c0_111] : memref<4x16x9xf32, #tpu.memory_space<vmem>>, vector<1x16x9xf32>
    %146 = vector.shape_cast %145 : vector<1x16x9xf32> to vector<16x9xf32>
    %cst_112 = arith.constant dense<0.000000e+00> : vector<128x9xf32>
    %147 = tpu.matmul %144, %146, %cst_112 {dimension_numbers = #tpu.dot_dimension_numbers<[1], [0], [0], [1], [0, 0, 1, 1], [], []>} : vector<128x16xf32>, vector<16x9xf32>, vector<128x9xf32> -> vector<128x9xf32>
    %c0_113 = arith.constant 0 : index
    %c0_114 = arith.constant 0 : index
    %c0_115 = arith.constant 0 : index
    %148 = vector.load %arg6[%c0_113, %c0_114, %c0_115] : memref<4x1x9xf32, #tpu.memory_space<vmem>>, vector<1x1x9xf32>
    %149 = vector.shape_cast %148 : vector<1x1x9xf32> to vector<1x9xf32>
    %150 = vector.broadcast %149 : vector<1x9xf32> to vector<128x9xf32>
    %151 = arith.addf %147, %150 : vector<128x9xf32>
    %c1_116 = arith.constant 1 : index
    %c0_117 = arith.constant 0 : index
    %c0_118 = arith.constant 0 : index
    %152 = vector.load %arg5[%c1_116, %c0_117, %c0_118] : memref<4x16x9xf32, #tpu.memory_space<vmem>>, vector<1x16x9xf32>
    %153 = vector.shape_cast %152 : vector<1x16x9xf32> to vector<16x9xf32>
    %cst_119 = arith.constant dense<0.000000e+00> : vector<128x9xf32>
    %154 = tpu.matmul %144, %153, %cst_119 {dimension_numbers = #tpu.dot_dimension_numbers<[1], [0], [0], [1], [0, 0, 1, 1], [], []>} : vector<128x16xf32>, vector<16x9xf32>, vector<128x9xf32> -> vector<128x9xf32>
    %c1_120 = arith.constant 1 : index
    %c0_121 = arith.constant 0 : index
    %c0_122 = arith.constant 0 : index
    %155 = vector.load %arg6[%c1_120, %c0_121, %c0_122] : memref<4x1x9xf32, #tpu.memory_space<vmem>>, vector<1x1x9xf32>
    %156 = vector.shape_cast %155 : vector<1x1x9xf32> to vector<1x9xf32>
    %157 = vector.broadcast %156 : vector<1x9xf32> to vector<128x9xf32>
    %158 = arith.addf %154, %157 : vector<128x9xf32>
    %159 = arith.maximumf %151, %158 : vector<128x9xf32>
    %c2_123 = arith.constant 2 : index
    %c0_124 = arith.constant 0 : index
    %c0_125 = arith.constant 0 : index
    %160 = vector.load %arg5[%c2_123, %c0_124, %c0_125] : memref<4x16x9xf32, #tpu.memory_space<vmem>>, vector<1x16x9xf32>
    %161 = vector.shape_cast %160 : vector<1x16x9xf32> to vector<16x9xf32>
    %cst_126 = arith.constant dense<0.000000e+00> : vector<128x9xf32>
    %162 = tpu.matmul %144, %161, %cst_126 {dimension_numbers = #tpu.dot_dimension_numbers<[1], [0], [0], [1], [0, 0, 1, 1], [], []>} : vector<128x16xf32>, vector<16x9xf32>, vector<128x9xf32> -> vector<128x9xf32>
    %c2_127 = arith.constant 2 : index
    %c0_128 = arith.constant 0 : index
    %c0_129 = arith.constant 0 : index
    %163 = vector.load %arg6[%c2_127, %c0_128, %c0_129] : memref<4x1x9xf32, #tpu.memory_space<vmem>>, vector<1x1x9xf32>
    %164 = vector.shape_cast %163 : vector<1x1x9xf32> to vector<1x9xf32>
    %165 = vector.broadcast %164 : vector<1x9xf32> to vector<128x9xf32>
    %166 = arith.addf %162, %165 : vector<128x9xf32>
    %167 = arith.maximumf %159, %166 : vector<128x9xf32>
    %c3_130 = arith.constant 3 : index
    %c0_131 = arith.constant 0 : index
    %c0_132 = arith.constant 0 : index
    %168 = vector.load %arg5[%c3_130, %c0_131, %c0_132] : memref<4x16x9xf32, #tpu.memory_space<vmem>>, vector<1x16x9xf32>
    %169 = vector.shape_cast %168 : vector<1x16x9xf32> to vector<16x9xf32>
    %cst_133 = arith.constant dense<0.000000e+00> : vector<128x9xf32>
    %170 = tpu.matmul %144, %169, %cst_133 {dimension_numbers = #tpu.dot_dimension_numbers<[1], [0], [0], [1], [0, 0, 1, 1], [], []>} : vector<128x16xf32>, vector<16x9xf32>, vector<128x9xf32> -> vector<128x9xf32>
    %c3_134 = arith.constant 3 : index
    %c0_135 = arith.constant 0 : index
    %c0_136 = arith.constant 0 : index
    %171 = vector.load %arg6[%c3_134, %c0_135, %c0_136] : memref<4x1x9xf32, #tpu.memory_space<vmem>>, vector<1x1x9xf32>
    %172 = vector.shape_cast %171 : vector<1x1x9xf32> to vector<1x9xf32>
    %173 = vector.broadcast %172 : vector<1x9xf32> to vector<128x9xf32>
    %174 = arith.addf %170, %173 : vector<128x9xf32>
    %175 = arith.maximumf %167, %174 : vector<128x9xf32>
    %c0_137 = arith.constant 0 : index
    %c0_138 = arith.constant 0 : index
    %176 = vector.load %arg10[%c0_137, %c0_138] : memref<128x9xf32, #tpu.memory_space<vmem>>, vector<128x9xf32>
    tpu.vector_store %arg10[%c0_137, %c0_138], %175 {strides = array<i32>} : memref<128x9xf32, #tpu.memory_space<vmem>>, vector<128x9xf32>,
    return
  }
  func.func @transform_0(%arg0: i32) -> (i32, i32) {
    %c0_i32 = arith.constant 0 : i32
    %c0_i32_0 = arith.constant 0 : i32
    %c0_i32_1 = arith.constant 0 : i32
    return %c0_i32, %c0_i32_0 : i32, i32
  }
  func.func @transform_1(%arg0: i32) -> (i32, i32) {
    %c0_i32 = arith.constant 0 : i32
    %c0_i32_0 = arith.constant 0 : i32
    %c0_i32_1 = arith.constant 0 : i32
    return %c0_i32, %c0_i32_0 : i32, i32
  }
  func.func @transform_2(%arg0: i32) -> (i32, i32) {
    %c0_i32 = arith.constant 0 : i32
    %c0_i32_0 = arith.constant 0 : i32
    %c0_i32_1 = arith.constant 0 : i32
    return %c0_i32, %c0_i32_0 : i32, i32
  }
  func.func @transform_3(%arg0: i32) -> (i32, i32) {
    %c0_i32 = arith.constant 0 : i32
    %c0_i32_0 = arith.constant 0 : i32
    %c0_i32_1 = arith.constant 0 : i32
    return %c0_i32, %c0_i32_0 : i32, i32
  }
  func.func @transform_4(%arg0: i32) -> (i32, i32, i32) {
    %c0_i32 = arith.constant 0 : i32
    %c0_i32_0 = arith.constant 0 : i32
    %c0_i32_1 = arith.constant 0 : i32
    %c0_i32_2 = arith.constant 0 : i32
    return %c0_i32, %c0_i32_0, %c0_i32_1 : i32, i32, i32
  }
  func.func @transform_5(%arg0: i32) -> (i32, i32, i32) {
    %c0_i32 = arith.constant 0 : i32
    %c0_i32_0 = arith.constant 0 : i32
    %c0_i32_1 = arith.constant 0 : i32
    %c0_i32_2 = arith.constant 0 : i32
    return %c0_i32, %c0_i32_0, %c0_i32_1 : i32, i32, i32
  }
  func.func @transform_6(%arg0: i32) -> (i32, i32, i32) {
    %c0_i32 = arith.constant 0 : i32
    %c0_i32_0 = arith.constant 0 : i32
    %c0_i32_1 = arith.constant 0 : i32
    %c0_i32_2 = arith.constant 0 : i32
    return %c0_i32, %c0_i32_0, %c0_i32_1 : i32, i32, i32
  }
  func.func @transform_7(%arg0: i32) -> (i32, i32, i32) {
    %c0_i32 = arith.constant 0 : i32
    %c0_i32_0 = arith.constant 0 : i32
    %c0_i32_1 = arith.constant 0 : i32
    %c0_i32_2 = arith.constant 0 : i32
    return %c0_i32, %c0_i32_0, %c0_i32_1 : i32, i32, i32
  }
  func.func @transform_8(%arg0: i32) -> (i32, i32, i32) {
    %c0_i32 = arith.constant 0 : i32
    %c0_i32_0 = arith.constant 0 : i32
    %c0_i32_1 = arith.constant 0 : i32
    %c0_i32_2 = arith.constant 0 : i32
    return %c0_i32, %c0_i32_0, %c0_i32_1 : i32, i32, i32
  }
  func.func @transform_9(%arg0: i32) -> (i32, i32) {
    %c0_i32 = arith.constant 0 : i32
    %c0_i32_0 = arith.constant 0 : i32
    %c0_i32_1 = arith.constant 0 : i32
    return %c0_i32, %c0_i32_0 : i32, i32
  }
}

</mosaic_0001>

<llo_original>
// kernel: simple_conv_model.1
$region0: #{simple_conv_model.1}
  #allocation0 [shape = 'u32[]', space=smem, size = 0x4, offset = 0x4, fixed_abs, tag = 'smem constant byte address 0x4 - core index']
  #allocation1 [shape = 'u32[72,128]{1,0:T(1,128)}', space=vmem, size = 0x9000, scoped, tag = 'internal scratch']
  %s0 = inlined_call_operand.vmem [shape: f32[64,256], index: 0, kind: input, shape index: {}]
  %s1 = inlined_call_operand.vmem [shape: bf16[256,576], index: 1, kind: input, shape index: {}]
  %s2 = inlined_call_operand.vmem [shape: bf16[64,144], index: 2, kind: input, shape index: {}]
  %s3 = inlined_call_operand.vmem [shape: bf16[16,144], index: 3, kind: input, shape index: {}]
  %s4 = inlined_call_operand.vmem [shape: f32[4,16,9], index: 4, kind: input, shape index: {}]
  %s5 = inlined_call_operand.vmem [shape: f32[4,1,9], index: 5, kind: input, shape index: {}]
  %s6 = inlined_call_operand.vmem [shape: bf16[9,16,64], index: 6, kind: input, shape index: {}]
  %s7 = inlined_call_operand.vmem [shape: bf16[9,64,16], index: 7, kind: input, shape index: {}]
  %s8 = inlined_call_operand.vmem [shape: bf16[9,128,64], index: 8, kind: input, shape index: {}]
  %s9 = inlined_call_operand.vmem [shape: f32[128,9], index: 9, kind: output, shape index: {}]
  %s10 = sld [smem:[#allocation0]]
  $region46: #{simple_conv_model.1} parent=0
    _
  %s12 = ssub.s32 1, %s10
  %s13 = scalar_select 0, %s12, %s10
  // Predicated region
  $region2: #{simple_conv_model.1} parent=0 // pred_check
    _
  $region3: #{simple_conv_model.1} parent=0 // pred_check_branch
    %15 = sbr.rel (0) target = $region5
  $region4: #{simple_conv_model.1} parent=0 // pred_region
    _
  $region5: #{simple_conv_model.1} parent=0 // pred_fallthru
    _
  // Predicated region
  $region6: #{simple_conv_model.1} parent=0 // pred_check
    _
  $region7: #{simple_conv_model.1} parent=0 // pred_check_branch
    %17 = sbr.rel (0) target = $region9
  $region8: #{simple_conv_model.1} parent=0 // pred_region
    _
  $region9: #{simple_conv_model.1} parent=0 // pred_fallthru
    _
  // Predicated region
  $region10: #{simple_conv_model.1} parent=0 // pred_check
    _
  $region11: #{simple_conv_model.1} parent=0 // pred_check_branch
    %19 = sbr.rel (0) target = $region13
  $region12: #{simple_conv_model.1} parent=0 // pred_region
    _
  $region13: #{simple_conv_model.1} parent=0 // pred_fallthru
    _
  // Predicated region
  $region14: #{simple_conv_model.1} parent=0 // pred_check
    _
  $region15: #{simple_conv_model.1} parent=0 // pred_check_branch
    %21 = sbr.rel (0) target = $region17
  $region16: #{simple_conv_model.1} parent=0 // pred_region
    _
  $region17: #{simple_conv_model.1} parent=0 // pred_fallthru
    _
  // Predicated region
  $region18: #{simple_conv_model.1} parent=0 // pred_check
    _
  $region19: #{simple_conv_model.1} parent=0 // pred_check_branch
    %23 = sbr.rel (0) target = $region21
  $region20: #{simple_conv_model.1} parent=0 // pred_region
    _
  $region21: #{simple_conv_model.1} parent=0 // pred_fallthru
    _
  // Predicated region
  $region22: #{simple_conv_model.1} parent=0 // pred_check
    _
  $region23: #{simple_conv_model.1} parent=0 // pred_check_branch
    %25 = sbr.rel (0) target = $region25
  $region24: #{simple_conv_model.1} parent=0 // pred_region
    _
  $region25: #{simple_conv_model.1} parent=0 // pred_fallthru
    _
  // Predicated region
  $region26: #{simple_conv_model.1} parent=0 // pred_check
    _
  $region27: #{simple_conv_model.1} parent=0 // pred_check_branch
    %27 = sbr.rel (0) target = $region29
  $region28: #{simple_conv_model.1} parent=0 // pred_region
    _
  $region29: #{simple_conv_model.1} parent=0 // pred_fallthru
    _
  // Predicated region
  $region30: #{simple_conv_model.1} parent=0 // pred_check
    _
  $region31: #{simple_conv_model.1} parent=0 // pred_check_branch
    %29 = sbr.rel (0) target = $region33
  $region32: #{simple_conv_model.1} parent=0 // pred_region
    _
  $region33: #{simple_conv_model.1} parent=0 // pred_fallthru
    _
  // Predicated region
  $region34: #{simple_conv_model.1} parent=0 // pred_check
    _
  $region35: #{simple_conv_model.1} parent=0 // pred_check_branch
    %31 = sbr.rel (0) target = $region37
  $region36: #{simple_conv_model.1} parent=0 // pred_region
    _
  $region37: #{simple_conv_model.1} parent=0 // pred_fallthru
    _
  %v33 = vld [vmem:[%s0] sm:$0xff]
  %v34 = vld [vmem:[%s0 + $0x8] sm:$0xff]
  %v35 = vld [vmem:[%s0 + $0x10] sm:$0xff]
  %v36 = vld [vmem:[%s0 + $0x18] sm:$0xff]
  %v37 = vld [vmem:[%s0 + $0x20] sm:$0xff]
  %v38 = vld [vmem:[%s0 + $0x28] sm:$0xff]
  %v39 = vld [vmem:[%s0 + $0x30] sm:$0xff]
  %v40 = vld [vmem:[%s0 + $0x38] sm:$0xff]
  %v41 = vld [vmem:[%s0 + $0x40] sm:$0xff]
  %v42 = vld [vmem:[%s0 + $0x48] sm:$0xff]
  %v43 = vld [vmem:[%s0 + $0x50] sm:$0xff]
  %v44 = vld [vmem:[%s0 + $0x58] sm:$0xff]
  %v45 = vld [vmem:[%s0 + $0x60] sm:$0xff]
  %v46 = vld [vmem:[%s0 + $0x68] sm:$0xff]
  %v47 = vld [vmem:[%s0 + $0x70] sm:$0xff]
  %v48 = vld [vmem:[%s0 + $0x78] sm:$0xff]
  %v49 = vpack.c.bf16 %v35, %v33
  %v50 = vpack.c.bf16 %v36, %v34
  %v51 = vpack.c.bf16 %v39, %v37
  %v52 = vpack.c.bf16 %v40, %v38
  %v53 = vpack.c.bf16 %v43, %v41
  %v54 = vpack.c.bf16 %v44, %v42
  %v55 = vpack.c.bf16 %v47, %v45
  %v56 = vpack.c.bf16 %v48, %v46
  %v57 = vld [vmem:[%s1] sm:$0xff]
  %v58 = vld [vmem:[%s1 + $0x8] sm:$0xff]
  %v59 = vld [vmem:[%s1 + $0x10] sm:$0xf]
  %v60 = vld [vmem:[%s1 + $0x14] sm:$0xff]
  %v61 = vld [vmem:[%s1 + $0x1c] sm:$0xff]
  %v62 = vld [vmem:[%s1 + $0x24] sm:$0xf]
  %v63 = vld [vmem:[%s1 + $0x28] sm:$0xff]
  %v64 = vld [vmem:[%s1 + $0x30] sm:$0xff]
  %v65 = vld [vmem:[%s1 + $0x38] sm:$0xf]
  %v66 = vld [vmem:[%s1 + $0x3c] sm:$0xff]
  %v67 = vld [vmem:[%s1 + $0x44] sm:$0xff]
  %v68 = vld [vmem:[%s1 + $0x4c] sm:$0xf]
  %v69 = vld [vmem:[%s1 + $0x50] sm:$0xff]
  %v70 = vld [vmem:[%s1 + $0x58] sm:$0xff]
  %v71 = vld [vmem:[%s1 + $0x60] sm:$0xf]
  %v72 = vld [vmem:[%s1 + $0x64] sm:$0xff]
  %v73 = vld [vmem:[%s1 + $0x6c] sm:$0xff]
  %v74 = vld [vmem:[%s1 + $0x74] sm:$0xf]
  %v75 = vld [vmem:[%s1 + $0x78] sm:$0xff]
  %v76 = vld [vmem:[%s1 + $0x80] sm:$0xff]
  %v77 = vld [vmem:[%s1 + $0x88] sm:$0xf]
  %v78 = vld [vmem:[%s1 + $0x8c] sm:$0xff]
  %v79 = vld [vmem:[%s1 + $0x94] sm:$0xff]
  %v80 = vld [vmem:[%s1 + $0x9c] sm:$0xf]
  %v81 = vld [vmem:[%s1 + $0xa0] sm:$0xff]
  %v82 = vld [vmem:[%s1 + $0xa8] sm:$0xff]
  %v83 = vld [vmem:[%s1 + $0xb0] sm:$0xf]
  %v84 = vld [vmem:[%s1 + $0xb4] sm:$0xff]
  %v85 = vld [vmem:[%s1 + $0xbc] sm:$0xff]
  %v86 = vld [vmem:[%s1 + $0xc4] sm:$0xf]
  %v87 = vld [vmem:[%s1 + $0xc8] sm:$0xff]
  %v88 = vld [vmem:[%s1 + $0xd0] sm:$0xff]
  %v89 = vld [vmem:[%s1 + $0xd8] sm:$0xf]
  %v90 = vld [vmem:[%s1 + $0xdc] sm:$0xff]
  %v91 = vld [vmem:[%s1 + $0xe4] sm:$0xff]
  %v92 = vld [vmem:[%s1 + $0xec] sm:$0xf]
  %v93 = vld [vmem:[%s1 + $0xf0] sm:$0xff]
  %v94 = vld [vmem:[%s1 + $0xf8] sm:$0xff]
  %v95 = vld [vmem:[%s1 + $0x100] sm:$0xf]
  %v96 = vld [vmem:[%s1 + $0x104] sm:$0xff]
  %v97 = vld [vmem:[%s1 + $0x10c] sm:$0xff]
  %v98 = vld [vmem:[%s1 + $0x114] sm:$0xf]
  %v99 = vld [vmem:[%s1 + $0x118] sm:$0xff]
  %v100 = vld [vmem:[%s1 + $0x120] sm:$0xff]
  %v101 = vld [vmem:[%s1 + $0x128] sm:$0xf]
  %v102 = vld [vmem:[%s1 + $0x12c] sm:$0xff]
  %v103 = vld [vmem:[%s1 + $0x134] sm:$0xff]
  %v104 = vld [vmem:[%s1 + $0x13c] sm:$0xf]
  %v105 = vld [vmem:[%s1 + $0x140] sm:$0xff]
  %v106 = vld [vmem:[%s1 + $0x148] sm:$0xff]
  %v107 = vld [vmem:[%s1 + $0x150] sm:$0xf]
  %v108 = vld [vmem:[%s1 + $0x154] sm:$0xff]
  %v109 = vld [vmem:[%s1 + $0x15c] sm:$0xff]
  %v110 = vld [vmem:[%s1 + $0x164] sm:$0xf]
  %v111 = vld [vmem:[%s1 + $0x168] sm:$0xff]
  %v112 = vld [vmem:[%s1 + $0x170] sm:$0xff]
  %v113 = vld [vmem:[%s1 + $0x178] sm:$0xf]
  %v114 = vld [vmem:[%s1 + $0x17c] sm:$0xff]
  %v115 = vld [vmem:[%s1 + $0x184] sm:$0xff]
  %v116 = vld [vmem:[%s1 + $0x18c] sm:$0xf]
  %v117 = vld [vmem:[%s1 + $0x190] sm:$0xff]
  %v118 = vld [vmem:[%s1 + $0x198] sm:$0xff]
  %v119 = vld [vmem:[%s1 + $0x1a0] sm:$0xf]
  %v120 = vld [vmem:[%s1 + $0x1a4] sm:$0xff]
  %v121 = vld [vmem:[%s1 + $0x1ac] sm:$0xff]
  %v122 = vld [vmem:[%s1 + $0x1b4] sm:$0xf]
  %v123 = vld [vmem:[%s1 + $0x1b8] sm:$0xff]
  %v124 = vld [vmem:[%s1 + $0x1c0] sm:$0xff]
  %v125 = vld [vmem:[%s1 + $0x1c8] sm:$0xf]
  %v126 = vld [vmem:[%s1 + $0x1cc] sm:$0xff]
  %v127 = vld [vmem:[%s1 + $0x1d4] sm:$0xff]
  %v128 = vld [vmem:[%s1 + $0x1dc] sm:$0xf]
  %v129 = vld [vmem:[%s1 + $0x1e0] sm:$0xff]
  %v130 = vld [vmem:[%s1 + $0x1e8] sm:$0xff]
  %v131 = vld [vmem:[%s1 + $0x1f0] sm:$0xf]
  %v132 = vld [vmem:[%s1 + $0x1f4] sm:$0xff]
  %v133 = vld [vmem:[%s1 + $0x1fc] sm:$0xff]
  %v134 = vld [vmem:[%s1 + $0x204] sm:$0xf]
  %v135 = vld [vmem:[%s1 + $0x208] sm:$0xff]
  %v136 = vld [vmem:[%s1 + $0x210] sm:$0xff]
  %v137 = vld [vmem:[%s1 + $0x218] sm:$0xf]
  %v138 = vld [vmem:[%s1 + $0x21c] sm:$0xff]
  %v139 = vld [vmem:[%s1 + $0x224] sm:$0xff]
  %v140 = vld [vmem:[%s1 + $0x22c] sm:$0xf]
  %v141 = vld [vmem:[%s1 + $0x230] sm:$0xff]
  %v142 = vld [vmem:[%s1 + $0x238] sm:$0xff]
  %v143 = vld [vmem:[%s1 + $0x240] sm:$0xf]
  %v144 = vld [vmem:[%s1 + $0x244] sm:$0xff]
  %v145 = vld [vmem:[%s1 + $0x24c] sm:$0xff]
  %v146 = vld [vmem:[%s1 + $0x254] sm:$0xf]
  %v147 = vld [vmem:[%s1 + $0x258] sm:$0xff]
  %v148 = vld [vmem:[%s1 + $0x260] sm:$0xff]
  %v149 = vld [vmem:[%s1 + $0x268] sm:$0xf]
  %v150 = vld [vmem:[%s1 + $0x26c] sm:$0xff]
  %v151 = vld [vmem:[%s1 + $0x274] sm:$0xff]
  %v152 = vld [vmem:[%s1 + $0x27c] sm:$0xf]
  %v249 = vunpack.c.l.b16 %v57
  %v250 = vunpack.c.h.b16 %v57
  %v251 = vunpack.c.l.b16 %v58
  %v252 = vunpack.c.h.b16 %v58
  %v253 = vunpack.c.l.b16 %v59
  %v254 = vunpack.c.l.b16 %v60
  %v255 = vunpack.c.h.b16 %v60
  %v256 = vunpack.c.l.b16 %v61
  %v257 = vunpack.c.h.b16 %v61
  %v258 = vunpack.c.l.b16 %v62
  %v259 = vunpack.c.l.b16 %v63
  %v260 = vunpack.c.h.b16 %v63
  %v261 = vunpack.c.l.b16 %v64
  %v262 = vunpack.c.h.b16 %v64
  %v263 = vunpack.c.l.b16 %v65
  %v264 = vunpack.c.l.b16 %v66
  %v265 = vunpack.c.h.b16 %v66
  %v266 = vunpack.c.l.b16 %v67
  %v267 = vunpack.c.h.b16 %v67
  %v268 = vunpack.c.l.b16 %v68
  %v269 = vunpack.c.l.b16 %v69
  %v270 = vunpack.c.h.b16 %v69
  %v271 = vunpack.c.l.b16 %v70
  %v272 = vunpack.c.h.b16 %v70
  %v273 = vunpack.c.l.b16 %v71
  %v274 = vunpack.c.l.b16 %v72
  %v275 = vunpack.c.h.b16 %v72
  %v276 = vunpack.c.l.b16 %v73
  %v277 = vunpack.c.h.b16 %v73
  %v278 = vunpack.c.l.b16 %v74
  %v279 = vunpack.c.l.b16 %v75
  %v280 = vunpack.c.h.b16 %v75
  %v281 = vunpack.c.l.b16 %v76
  %v282 = vunpack.c.h.b16 %v76
  %v283 = vunpack.c.l.b16 %v77
  %v284 = vunpack.c.l.b16 %v78
  %v285 = vunpack.c.h.b16 %v78
  %v286 = vunpack.c.l.b16 %v79
  %v287 = vunpack.c.h.b16 %v79
  %v288 = vunpack.c.l.b16 %v80
  %v289 = vunpack.c.l.b16 %v81
  %v290 = vunpack.c.h.b16 %v81
  %v291 = vunpack.c.l.b16 %v82
  %v292 = vunpack.c.h.b16 %v82
  %v293 = vunpack.c.l.b16 %v83
  %v294 = vunpack.c.l.b16 %v84
  %v295 = vunpack.c.h.b16 %v84
  %v296 = vunpack.c.l.b16 %v85
  %v297 = vunpack.c.h.b16 %v85
  %v298 = vunpack.c.l.b16 %v86
  %v299 = vunpack.c.l.b16 %v87
  %v300 = vunpack.c.h.b16 %v87
  %v301 = vunpack.c.l.b16 %v88
  %v302 = vunpack.c.h.b16 %v88
  %v303 = vunpack.c.l.b16 %v89
  %v304 = vunpack.c.l.b16 %v90
  %v305 = vunpack.c.h.b16 %v90
  %v306 = vunpack.c.l.b16 %v91
  %v307 = vunpack.c.h.b16 %v91
  %v308 = vunpack.c.l.b16 %v92
  %v309 = vunpack.c.l.b16 %v93
  %v310 = vunpack.c.h.b16 %v93
  %v311 = vunpack.c.l.b16 %v94
  %v312 = vunpack.c.h.b16 %v94
  %v313 = vunpack.c.l.b16 %v95
  %v314 = vunpack.c.l.b16 %v96
  %v315 = vunpack.c.h.b16 %v96
  %v316 = vunpack.c.l.b16 %v97
  %v317 = vunpack.c.h.b16 %v97
  %v318 = vunpack.c.l.b16 %v98
  %v319 = vunpack.c.l.b16 %v99
  %v320 = vunpack.c.h.b16 %v99
  %v321 = vunpack.c.l.b16 %v100
  %v322 = vunpack.c.h.b16 %v100
  %v323 = vunpack.c.l.b16 %v101
  %v324 = vunpack.c.l.b16 %v102
  %v325 = vunpack.c.h.b16 %v102
  %v326 = vunpack.c.l.b16 %v103
  %v327 = vunpack.c.h.b16 %v103
  %v328 = vunpack.c.l.b16 %v104
  %v329 = vunpack.c.l.b16 %v105
  %v330 = vunpack.c.h.b16 %v105
  %v331 = vunpack.c.l.b16 %v106
  %v332 = vunpack.c.h.b16 %v106
  %v333 = vunpack.c.l.b16 %v107
  %v334 = vunpack.c.l.b16 %v108
  %v335 = vunpack.c.h.b16 %v108
  %v336 = vunpack.c.l.b16 %v109
  %v337 = vunpack.c.h.b16 %v109
  %v338 = vunpack.c.l.b16 %v110
  %v339 = vunpack.c.l.b16 %v111
  %v340 = vunpack.c.h.b16 %v111
  %v341 = vunpack.c.l.b16 %v112
  %v342 = vunpack.c.h.b16 %v112
  %v343 = vunpack.c.l.b16 %v113
  %v344 = vunpack.c.l.b16 %v114
  %v345 = vunpack.c.h.b16 %v114
  %v346 = vunpack.c.l.b16 %v115
  %v347 = vunpack.c.h.b16 %v115
  %v348 = vunpack.c.l.b16 %v116
  %v349 = vunpack.c.l.b16 %v117
  %v350 = vunpack.c.h.b16 %v117
  %v351 = vunpack.c.l.b16 %v118
  %v352 = vunpack.c.h.b16 %v118
  %v353 = vunpack.c.l.b16 %v119
  %v354 = vunpack.c.l.b16 %v120
  %v355 = vunpack.c.h.b16 %v120
  %v356 = vunpack.c.l.b16 %v121
  %v357 = vunpack.c.h.b16 %v121
  %v358 = vunpack.c.l.b16 %v122
  %v359 = vunpack.c.l.b16 %v123
  %v360 = vunpack.c.h.b16 %v123
  %v361 = vunpack.c.l.b16 %v124
  %v362 = vunpack.c.h.b16 %v124
  %v363 = vunpack.c.l.b16 %v125
  %v364 = vunpack.c.l.b16 %v126
  %v365 = vunpack.c.h.b16 %v126
  %v366 = vunpack.c.l.b16 %v127
  %v367 = vunpack.c.h.b16 %v127
  %v368 = vunpack.c.l.b16 %v128
  %v369 = vunpack.c.l.b16 %v129
  %v370 = vunpack.c.h.b16 %v129
  %v371 = vunpack.c.l.b16 %v130
  %v372 = vunpack.c.h.b16 %v130
  %v373 = vunpack.c.l.b16 %v131
  %v374 = vunpack.c.l.b16 %v132
  %v375 = vunpack.c.h.b16 %v132
  %v376 = vunpack.c.l.b16 %v133
  %v377 = vunpack.c.h.b16 %v133
  %v378 = vunpack.c.l.b16 %v134
  %v379 = vunpack.c.l.b16 %v135
  %v380 = vunpack.c.h.b16 %v135
  %v381 = vunpack.c.l.b16 %v136
  %v382 = vunpack.c.h.b16 %v136
  %v383 = vunpack.c.l.b16 %v137
  %v384 = vunpack.c.l.b16 %v138
  %v385 = vunpack.c.h.b16 %v138
  %v386 = vunpack.c.l.b16 %v139
  %v387 = vunpack.c.h.b16 %v139
  %v388 = vunpack.c.l.b16 %v140
  %v389 = vunpack.c.l.b16 %v141
  %v390 = vunpack.c.h.b16 %v141
  %v391 = vunpack.c.l.b16 %v142
  %v392 = vunpack.c.h.b16 %v142
  %v393 = vunpack.c.l.b16 %v143
  %v394 = vunpack.c.l.b16 %v144
  %v395 = vunpack.c.h.b16 %v144
  %v396 = vunpack.c.l.b16 %v145
  %v397 = vunpack.c.h.b16 %v145
  %v398 = vunpack.c.l.b16 %v146
  %v399 = vunpack.c.l.b16 %v147
  %v400 = vunpack.c.h.b16 %v147
  %v401 = vunpack.c.l.b16 %v148
  %v402 = vunpack.c.h.b16 %v148
  %v403 = vunpack.c.l.b16 %v149
  %v404 = vunpack.c.l.b16 %v150
  %v405 = vunpack.c.h.b16 %v150
  %v406 = vunpack.c.l.b16 %v151
  %v407 = vunpack.c.h.b16 %v151
  %v408 = vunpack.c.l.b16 %v152
  %v409 = vpack.c.b16 %v254, %v249
  %v410 = vpack.c.b16 %v255, %v250
  %v411 = vpack.c.b16 %v256, %v251
  %v412 = vpack.c.b16 %v257, %v252
  %v413 = vpack.c.b16 %v258, %v253
  %v414 = vpack.c.b16 %v264, %v259
  %v415 = vpack.c.b16 %v265, %v260
  %v416 = vpack.c.b16 %v266, %v261
  %v417 = vpack.c.b16 %v267, %v262
  %v418 = vpack.c.b16 %v268, %v263
  %v419 = vpack.c.b16 %v274, %v269
  %v420 = vpack.c.b16 %v275, %v270
  %v421 = vpack.c.b16 %v276, %v271
  %v422 = vpack.c.b16 %v277, %v272
  %v423 = vpack.c.b16 %v278, %v273
  %v424 = vpack.c.b16 %v284, %v279
  %v425 = vpack.c.b16 %v285, %v280
  %v426 = vpack.c.b16 %v286, %v281
  %v427 = vpack.c.b16 %v287, %v282
  %v428 = vpack.c.b16 %v288, %v283
  %v429 = vpack.c.b16 %v294, %v289
  %v430 = vpack.c.b16 %v295, %v290
  %v431 = vpack.c.b16 %v296, %v291
  %v432 = vpack.c.b16 %v297, %v292
  %v433 = vpack.c.b16 %v298, %v293
  %v434 = vpack.c.b16 %v304, %v299
  %v435 = vpack.c.b16 %v305, %v300
  %v436 = vpack.c.b16 %v306, %v301
  %v437 = vpack.c.b16 %v307, %v302
  %v438 = vpack.c.b16 %v308, %v303
  %v439 = vpack.c.b16 %v314, %v309
  %v440 = vpack.c.b16 %v315, %v310
  %v441 = vpack.c.b16 %v316, %v311
  %v442 = vpack.c.b16 %v317, %v312
  %v443 = vpack.c.b16 %v318, %v313
  %v444 = vpack.c.b16 %v324, %v319
  %v445 = vpack.c.b16 %v325, %v320
  %v446 = vpack.c.b16 %v326, %v321
  %v447 = vpack.c.b16 %v327, %v322
  %v448 = vpack.c.b16 %v328, %v323
  %v449 = vpack.c.b16 %v334, %v329
  %v450 = vpack.c.b16 %v335, %v330
  %v451 = vpack.c.b16 %v336, %v331
  %v452 = vpack.c.b16 %v337, %v332
  %v453 = vpack.c.b16 %v338, %v333
  %v454 = vpack.c.b16 %v344, %v339
  %v455 = vpack.c.b16 %v345, %v340
  %v456 = vpack.c.b16 %v346, %v341
  %v457 = vpack.c.b16 %v347, %v342
  %v458 = vpack.c.b16 %v348, %v343
  %v459 = vpack.c.b16 %v354, %v349
  %v460 = vpack.c.b16 %v355, %v350
  %v461 = vpack.c.b16 %v356, %v351
  %v462 = vpack.c.b16 %v357, %v352
  %v463 = vpack.c.b16 %v358, %v353
  %v464 = vpack.c.b16 %v364, %v359
  %v465 = vpack.c.b16 %v365, %v360
  %v466 = vpack.c.b16 %v366, %v361
  %v467 = vpack.c.b16 %v367, %v362
  %v468 = vpack.c.b16 %v368, %v363
  %v469 = vpack.c.b16 %v374, %v369
  %v470 = vpack.c.b16 %v375, %v370
  %v471 = vpack.c.b16 %v376, %v371
  %v472 = vpack.c.b16 %v377, %v372
  %v473 = vpack.c.b16 %v378, %v373
  %v474 = vpack.c.b16 %v384, %v379
  %v475 = vpack.c.b16 %v385, %v380
  %v476 = vpack.c.b16 %v386, %v381
  %v477 = vpack.c.b16 %v387, %v382
  %v478 = vpack.c.b16 %v388, %v383
  %v479 = vpack.c.b16 %v394, %v389
  %v480 = vpack.c.b16 %v395, %v390
  %v481 = vpack.c.b16 %v396, %v391
  %v482 = vpack.c.b16 %v397, %v392
  %v483 = vpack.c.b16 %v398, %v393
  %v484 = vpack.c.b16 %v404, %v399
  %v485 = vpack.c.b16 %v405, %v400
  %v486 = vpack.c.b16 %v406, %v401
  %v487 = vpack.c.b16 %v407, %v402
  %v488 = vpack.c.b16 %v408, %v403
  %569 = vmatpush.bf16.msra.mxu0 %v444
  %570 = vmatpush.bf16.msra.mxu0 %v439
  %571 = vmatpush.bf16.msra.mxu0 %v434
  %572 = vmatpush.bf16.msra.mxu0 %v429
  %573 = vmatpush.bf16.msra.mxu0 %v424
  %574 = vmatpush.bf16.msra.mxu0 %v419
  %575 = vmatpush.bf16.msra.mxu0 %v414
  %576 = vmatpush.bf16.msra.mxu0 %v409
  %577 = vmatmul.bf16.gmra.mxu0 %v49
  %v578 = vpop.f32.mrf.mxu0
  %v579 = vadd.f32 0.0, %v578
  %v580 = vpop.f32.mrf.mxu0
  %v581 = vadd.f32 0.0, %v580
  %582 = vmatmul.bf16.gmra.mxu0 %v51
  %v583 = vpop.f32.mrf.mxu0
  %v584 = vadd.f32 0.0, %v583
  %v585 = vpop.f32.mrf.mxu0
  %v586 = vadd.f32 0.0, %v585
  %587 = vmatmul.bf16.gmra.mxu0 %v53
  %v588 = vpop.f32.mrf.mxu0
  %v589 = vadd.f32 0.0, %v588
  %v590 = vpop.f32.mrf.mxu0
  %v591 = vadd.f32 0.0, %v590
  %592 = vmatmul.bf16.gmra.mxu0 %v55
  %v593 = vpop.f32.mrf.mxu0
  %v594 = vadd.f32 0.0, %v593
  %v595 = vpop.f32.mrf.mxu0
  %v596 = vadd.f32 0.0, %v595
  %597 = vdwg.mxu0
  %598 = vmatpush.bf16.msra.mxu0 %v484
  %599 = vmatpush.bf16.msra.mxu0 %v479
  %600 = vmatpush.bf16.msra.mxu0 %v474
  %601 = vmatpush.bf16.msra.mxu0 %v469
  %602 = vmatpush.bf16.msra.mxu0 %v464
  %603 = vmatpush.bf16.msra.mxu0 %v459
  %604 = vmatpush.bf16.msra.mxu0 %v454
  %605 = vmatpush.bf16.msra.mxu0 %v449
  %606 = vmatmul.bf16.gmra.mxu0 %v50
  %v607 = vpop.f32.mrf.mxu0
  %v608 = vadd.f32 %v579, %v607
  %v609 = vpop.f32.mrf.mxu0
  %v610 = vadd.f32 %v581, %v609
  %611 = vmatmul.bf16.gmra.mxu0 %v52
  %v612 = vpop.f32.mrf.mxu0
  %v613 = vadd.f32 %v584, %v612
  %v614 = vpop.f32.mrf.mxu0
  %v615 = vadd.f32 %v586, %v614
  %616 = vmatmul.bf16.gmra.mxu0 %v54
  %v617 = vpop.f32.mrf.mxu0
  %v618 = vadd.f32 %v589, %v617
  %v619 = vpop.f32.mrf.mxu0
  %v620 = vadd.f32 %v591, %v619
  %621 = vmatmul.bf16.gmra.mxu0 %v56
  %v622 = vpop.f32.mrf.mxu0
  %v623 = vadd.f32 %v594, %v622
  %v624 = vpop.f32.mrf.mxu0
  %v625 = vadd.f32 %v596, %v624
  %626 = vdwg.mxu0
  %627 = vmatpush.bf16.msra.mxu0 %v445
  %628 = vmatpush.bf16.msra.mxu0 %v440
  %629 = vmatpush.bf16.msra.mxu0 %v435
  %630 = vmatpush.bf16.msra.mxu0 %v430
  %631 = vmatpush.bf16.msra.mxu0 %v425
  %632 = vmatpush.bf16.msra.mxu0 %v420
  %633 = vmatpush.bf16.msra.mxu0 %v415
  %634 = vmatpush.bf16.msra.mxu0 %v410
  %635 = vmatmul.bf16.gmra.mxu0 %v49
  %v636 = vpop.f32.mrf.mxu0
  %v637 = vadd.f32 0.0, %v636
  %v638 = vpop.f32.mrf.mxu0
  %v639 = vadd.f32 0.0, %v638
  %640 = vmatmul.bf16.gmra.mxu0 %v51
  %v641 = vpop.f32.mrf.mxu0
  %v642 = vadd.f32 0.0, %v641
  %v643 = vpop.f32.mrf.mxu0
  %v644 = vadd.f32 0.0, %v643
  %645 = vmatmul.bf16.gmra.mxu0 %v53
  %v646 = vpop.f32.mrf.mxu0
  %v647 = vadd.f32 0.0, %v646
  %v648 = vpop.f32.mrf.mxu0
  %v649 = vadd.f32 0.0, %v648
  %650 = vmatmul.bf16.gmra.mxu0 %v55
  %v651 = vpop.f32.mrf.mxu0
  %v652 = vadd.f32 0.0, %v651
  %v653 = vpop.f32.mrf.mxu0
  %v654 = vadd.f32 0.0, %v653
  %655 = vdwg.mxu0
  %656 = vmatpush.bf16.msra.mxu0 %v485
  %657 = vmatpush.bf16.msra.mxu0 %v480
  %658 = vmatpush.bf16.msra.mxu0 %v475
  %659 = vmatpush.bf16.msra.mxu0 %v470
  %660 = vmatpush.bf16.msra.mxu0 %v465
  %661 = vmatpush.bf16.msra.mxu0 %v460
  %662 = vmatpush.bf16.msra.mxu0 %v455
  %663 = vmatpush.bf16.msra.mxu0 %v450
  %664 = vmatmul.bf16.gmra.mxu0 %v50
  %v665 = vpop.f32.mrf.mxu0
  %v666 = vadd.f32 %v637, %v665
  %v667 = vpop.f32.mrf.mxu0
  %v668 = vadd.f32 %v639, %v667
  %669 = vmatmul.bf16.gmra.mxu0 %v52
  %v670 = vpop.f32.mrf.mxu0
  %v671 = vadd.f32 %v642, %v670
  %v672 = vpop.f32.mrf.mxu0
  %v673 = vadd.f32 %v644, %v672
  %674 = vmatmul.bf16.gmra.mxu0 %v54
  %v675 = vpop.f32.mrf.mxu0
  %v676 = vadd.f32 %v647, %v675
  %v677 = vpop.f32.mrf.mxu0
  %v678 = vadd.f32 %v649, %v677
  %679 = vmatmul.bf16.gmra.mxu0 %v56
  %v680 = vpop.f32.mrf.mxu0
  %v681 = vadd.f32 %v652, %v680
  %v682 = vpop.f32.mrf.mxu0
  %v683 = vadd.f32 %v654, %v682
  %684 = vdwg.mxu0
  %685 = vmatpush.bf16.msra.mxu0 %v446
  %686 = vmatpush.bf16.msra.mxu0 %v441
  %687 = vmatpush.bf16.msra.mxu0 %v436
  %688 = vmatpush.bf16.msra.mxu0 %v431
  %689 = vmatpush.bf16.msra.mxu0 %v426
  %690 = vmatpush.bf16.msra.mxu0 %v421
  %691 = vmatpush.bf16.msra.mxu0 %v416
  %692 = vmatpush.bf16.msra.mxu0 %v411
  %693 = vmatmul.bf16.gmra.mxu0 %v49
  %v694 = vpop.f32.mrf.mxu0
  %v695 = vadd.f32 0.0, %v694
  %v696 = vpop.f32.mrf.mxu0
  %v697 = vadd.f32 0.0, %v696
  %698 = vmatmul.bf16.gmra.mxu0 %v51
  %v699 = vpop.f32.mrf.mxu0
  %v700 = vadd.f32 0.0, %v699
  %v701 = vpop.f32.mrf.mxu0
  %v702 = vadd.f32 0.0, %v701
  %703 = vmatmul.bf16.gmra.mxu0 %v53
  %v704 = vpop.f32.mrf.mxu0
  %v705 = vadd.f32 0.0, %v704
  %v706 = vpop.f32.mrf.mxu0
  %v707 = vadd.f32 0.0, %v706
  %708 = vmatmul.bf16.gmra.mxu0 %v55
  %v709 = vpop.f32.mrf.mxu0
  %v710 = vadd.f32 0.0, %v709
  %v711 = vpop.f32.mrf.mxu0
  %v712 = vadd.f32 0.0, %v711
  %713 = vdwg.mxu0
  %714 = vmatpush.bf16.msra.mxu0 %v486
  %715 = vmatpush.bf16.msra.mxu0 %v481
  %716 = vmatpush.bf16.msra.mxu0 %v476
  %717 = vmatpush.bf16.msra.mxu0 %v471
  %718 = vmatpush.bf16.msra.mxu0 %v466
  %719 = vmatpush.bf16.msra.mxu0 %v461
  %720 = vmatpush.bf16.msra.mxu0 %v456
  %721 = vmatpush.bf16.msra.mxu0 %v451
  %722 = vmatmul.bf16.gmra.mxu0 %v50
  %v723 = vpop.f32.mrf.mxu0
  %v724 = vadd.f32 %v695, %v723
  %v725 = vpop.f32.mrf.mxu0
  %v726 = vadd.f32 %v697, %v725
  %727 = vmatmul.bf16.gmra.mxu0 %v52
  %v728 = vpop.f32.mrf.mxu0
  %v729 = vadd.f32 %v700, %v728
  %v730 = vpop.f32.mrf.mxu0
  %v731 = vadd.f32 %v702, %v730
  %732 = vmatmul.bf16.gmra.mxu0 %v54
  %v733 = vpop.f32.mrf.mxu0
  %v734 = vadd.f32 %v705, %v733
  %v735 = vpop.f32.mrf.mxu0
  %v736 = vadd.f32 %v707, %v735
  %737 = vmatmul.bf16.gmra.mxu0 %v56
  %v738 = vpop.f32.mrf.mxu0
  %v739 = vadd.f32 %v710, %v738
  %v740 = vpop.f32.mrf.mxu0
  %v741 = vadd.f32 %v712, %v740
  %742 = vdwg.mxu0
  %743 = vmatpush.bf16.msra.mxu0 %v447
  %744 = vmatpush.bf16.msra.mxu0 %v442
  %745 = vmatpush.bf16.msra.mxu0 %v437
  %746 = vmatpush.bf16.msra.mxu0 %v432
  %747 = vmatpush.bf16.msra.mxu0 %v427
  %748 = vmatpush.bf16.msra.mxu0 %v422
  %749 = vmatpush.bf16.msra.mxu0 %v417
  %750 = vmatpush.bf16.msra.mxu0 %v412
  %751 = vmatmul.bf16.gmra.mxu0 %v49
  %v752 = vpop.f32.mrf.mxu0
  %v753 = vadd.f32 0.0, %v752
  %v754 = vpop.f32.mrf.mxu0
  %v755 = vadd.f32 0.0, %v754
  %756 = vmatmul.bf16.gmra.mxu0 %v51
  %v757 = vpop.f32.mrf.mxu0
  %v758 = vadd.f32 0.0, %v757
  %v759 = vpop.f32.mrf.mxu0
  %v760 = vadd.f32 0.0, %v759
  %761 = vmatmul.bf16.gmra.mxu0 %v53
  %v762 = vpop.f32.mrf.mxu0
  %v763 = vadd.f32 0.0, %v762
  %v764 = vpop.f32.mrf.mxu0
  %v765 = vadd.f32 0.0, %v764
  %766 = vmatmul.bf16.gmra.mxu0 %v55
  %v767 = vpop.f32.mrf.mxu0
  %v768 = vadd.f32 0.0, %v767
  %v769 = vpop.f32.mrf.mxu0
  %v770 = vadd.f32 0.0, %v769
  %771 = vdwg.mxu0
  %772 = vmatpush.bf16.msra.mxu0 %v487
  %773 = vmatpush.bf16.msra.mxu0 %v482
  %774 = vmatpush.bf16.msra.mxu0 %v477
  %775 = vmatpush.bf16.msra.mxu0 %v472
  %776 = vmatpush.bf16.msra.mxu0 %v467
  %777 = vmatpush.bf16.msra.mxu0 %v462
  %778 = vmatpush.bf16.msra.mxu0 %v457
  %779 = vmatpush.bf16.msra.mxu0 %v452
  %780 = vmatmul.bf16.gmra.mxu0 %v50
  %v781 = vpop.f32.mrf.mxu0
  %v782 = vadd.f32 %v753, %v781
  %v783 = vpop.f32.mrf.mxu0
  %v784 = vadd.f32 %v755, %v783
  %785 = vmatmul.bf16.gmra.mxu0 %v52
  %v786 = vpop.f32.mrf.mxu0
  %v787 = vadd.f32 %v758, %v786
  %v788 = vpop.f32.mrf.mxu0
  %v789 = vadd.f32 %v760, %v788
  %790 = vmatmul.bf16.gmra.mxu0 %v54
  %v791 = vpop.f32.mrf.mxu0
  %v792 = vadd.f32 %v763, %v791
  %v793 = vpop.f32.mrf.mxu0
  %v794 = vadd.f32 %v765, %v793
  %795 = vmatmul.bf16.gmra.mxu0 %v56
  %v796 = vpop.f32.mrf.mxu0
  %v797 = vadd.f32 %v768, %v796
  %v798 = vpop.f32.mrf.mxu0
  %v799 = vadd.f32 %v770, %v798
  %800 = vdwg.mxu0
  %801 = vmatpush.bf16.msra.mxu0 %v448
  %802 = vmatpush.bf16.msra.mxu0 %v443
  %803 = vmatpush.bf16.msra.mxu0 %v438
  %804 = vmatpush.bf16.msra.mxu0 %v433
  %805 = vmatpush.bf16.msra.mxu0 %v428
  %806 = vmatpush.bf16.msra.mxu0 %v423
  %807 = vmatpush.bf16.msra.mxu0 %v418
  %808 = vmatpush.bf16.msra.mxu0 %v413
  %809 = vmatmul.bf16.gmra.mxu0 %v49
  %v810 = vpop.f32.mrf.mxu0
  %v811 = vadd.f32 0.0, %v810
  %v812 = vpop.f32.mrf.mxu0
  %v813 = vadd.f32 0.0, %v812
  %814 = vmatmul.bf16.gmra.mxu0 %v51
  %v815 = vpop.f32.mrf.mxu0
  %v816 = vadd.f32 0.0, %v815
  %v817 = vpop.f32.mrf.mxu0
  %v818 = vadd.f32 0.0, %v817
  %819 = vmatmul.bf16.gmra.mxu0 %v53
  %v820 = vpop.f32.mrf.mxu0
  %v821 = vadd.f32 0.0, %v820
  %v822 = vpop.f32.mrf.mxu0
  %v823 = vadd.f32 0.0, %v822
  %824 = vmatmul.bf16.gmra.mxu0 %v55
  %v825 = vpop.f32.mrf.mxu0
  %v826 = vadd.f32 0.0, %v825
  %v827 = vpop.f32.mrf.mxu0
  %v828 = vadd.f32 0.0, %v827
  %829 = vdwg.mxu0
  %830 = vmatpush.bf16.msra.mxu0 %v488
  %831 = vmatpush.bf16.msra.mxu0 %v483
  %832 = vmatpush.bf16.msra.mxu0 %v478
  %833 = vmatpush.bf16.msra.mxu0 %v473
  %834 = vmatpush.bf16.msra.mxu0 %v468
  %835 = vmatpush.bf16.msra.mxu0 %v463
  %836 = vmatpush.bf16.msra.mxu0 %v458
  %837 = vmatpush.bf16.msra.mxu0 %v453
  %838 = vmatmul.bf16.gmra.mxu0 %v50
  %v839 = vpop.f32.mrf.mxu0
  %v840 = vadd.f32 %v811, %v839
  %v841 = vpop.f32.mrf.mxu0
  %v842 = vadd.f32 %v813, %v841
  %843 = vmatmul.bf16.gmra.mxu0 %v52
  %v844 = vpop.f32.mrf.mxu0
  %v845 = vadd.f32 %v816, %v844
  %v846 = vpop.f32.mrf.mxu0
  %v847 = vadd.f32 %v818, %v846
  %848 = vmatmul.bf16.gmra.mxu0 %v54
  %v849 = vpop.f32.mrf.mxu0
  %v850 = vadd.f32 %v821, %v849
  %v851 = vpop.f32.mrf.mxu0
  %v852 = vadd.f32 %v823, %v851
  %853 = vmatmul.bf16.gmra.mxu0 %v56
  %v854 = vpop.f32.mrf.mxu0
  %v855 = vadd.f32 %v826, %v854
  %v856 = vpop.f32.mrf.mxu0
  %v857 = vadd.f32 %v828, %v856
  %858 = vdwg.mxu0
  %v859 = vpack.c.bf16 %v666, %v608
  %v860 = vpack.c.bf16 %v782, %v724
  %v861 = vpack.c.bf16 %v840, %v840
  %v862 = vpack.c.bf16 %v668, %v610
  %v863 = vpack.c.bf16 %v784, %v726
  %v864 = vpack.c.bf16 %v842, %v842
  %v865 = vpack.c.bf16 %v671, %v613
  %v866 = vpack.c.bf16 %v787, %v729
  %v867 = vpack.c.bf16 %v845, %v845
  %v868 = vpack.c.bf16 %v673, %v615
  %v869 = vpack.c.bf16 %v789, %v731
  %v870 = vpack.c.bf16 %v847, %v847
  %v871 = vpack.c.bf16 %v676, %v618
  %v872 = vpack.c.bf16 %v792, %v734
  %v873 = vpack.c.bf16 %v850, %v850
  %v874 = vpack.c.bf16 %v678, %v620
  %v875 = vpack.c.bf16 %v794, %v736
  %v876 = vpack.c.bf16 %v852, %v852
  %v877 = vpack.c.bf16 %v681, %v623
  %v878 = vpack.c.bf16 %v797, %v739
  %v879 = vpack.c.bf16 %v855, %v855
  %v880 = vpack.c.bf16 %v683, %v625
  %v881 = vpack.c.bf16 %v799, %v741
  %v882 = vpack.c.bf16 %v857, %v857
  %v883 = vld [vmem:[%s6] sm:$0xf]
  %v884 = vld [vmem:[%s6 + $0x4] sm:$0xf]
  %s885 = scalar_lea.vmem %s6, 8
  %v886 = vld [vmem:[%s885] sm:$0xf]
  %v887 = vld [vmem:[%s885 + $0x4] sm:$0xf]
  %v890 = vunpack.c.l.b16 %v886
  %v891 = vunpack.c.l.b16 %v887
  %v892 = vpack.c.b16 %v891, %v890
  %v901 = vunpack.c.l.b16 %v859
  %v902 = vunpack.c.l.b16 %v862
  %v903 = vunpack.c.l.b16 %v865
  %v904 = vunpack.c.l.b16 %v868
  %v905 = vunpack.c.l.b16 %v871
  %v906 = vunpack.c.l.b16 %v874
  %v907 = vunpack.c.l.b16 %v877
  %v908 = vunpack.c.l.b16 %v880
  %v909 = vpack.c.b16 %v902, %v901
  %v910 = vpack.c.b16 %v904, %v903
  %v911 = vpack.c.b16 %v906, %v905
  %v912 = vpack.c.b16 %v908, %v907
  %913 = vrot.lane.b32.xlu0 %v909, 64
  %v914 = vpop.permute.xlu0 %913
  %915 = vrot.lane.b32.xlu0 %v910, 64
  %v916 = vpop.permute.xlu0 %915
  %917 = vrot.lane.b32.xlu0 %v911, 64
  %v918 = vpop.permute.xlu0 %917
  %919 = vrot.lane.b32.xlu0 %v912, 64
  %v920 = vpop.permute.xlu0 %919
  %vm925 = vcmask 523264
  %v927 = vsel %vm925, %v892, 0
  %929 = vmatpush.bf16.msra.mxu0 0
  %930 = vmatpush.bf16.msra.mxu0 0
  %931 = vmatpush.bf16.msra.mxu0 0
  %932 = vmatpush.bf16.msra.mxu0 0
  %933 = vmatpush.bf16.msra.mxu0 %v920
  %934 = vmatpush.bf16.msra.mxu0 %v918
  %935 = vmatpush.bf16.msra.mxu0 %v916
  %936 = vmatpush.bf16.msra.mxu0 %v914
  %937 = vmatmul.bf16.gmra.mxu0 %v927
  %v938 = vpop.f32.mrf.mxu0
  %v939 = vadd.f32 0.0, %v938
  %v940 = vpop.f32.mrf.mxu0
  %v941 = vadd.f32 0.0, %v940
  %942 = vdwg.mxu0
  %v945 = vunpack.c.l.b16 %v883
  %v946 = vunpack.c.l.b16 %v884
  %v947 = vpack.c.b16 %v946, %v945
  %v953 = vsel %vm925, %v947, 0
  %955 = vmatpush.bf16.msra.mxu0 0
  %956 = vmatpush.bf16.msra.mxu0 0
  %957 = vmatpush.bf16.msra.mxu0 0
  %958 = vmatpush.bf16.msra.mxu0 0
  %959 = vmatpush.bf16.msra.mxu0 %v912
  %960 = vmatpush.bf16.msra.mxu0 %v911
  %961 = vmatpush.bf16.msra.mxu0 %v910
  %962 = vmatpush.bf16.msra.mxu0 %v909
  %963 = vmatmul.bf16.gmra.mxu0 %v953
  %v964 = vpop.f32.mrf.mxu0
  %v965 = vadd.f32 %v939, %v964
  %v966 = vpop.f32.mrf.mxu0
  %v967 = vadd.f32 %v941, %v966
  %968 = vdwg.mxu0
  %s969 = scalar_lea.vmem %s6, 16
  %v970 = vld [vmem:[%s969] sm:$0xf]
  %v971 = vld [vmem:[%s969 + $0x4] sm:$0xf]
  %v974 = vunpack.c.l.b16 %v970
  %v975 = vunpack.c.l.b16 %v971
  %v976 = vpack.c.b16 %v975, %v974
  %v977 = vunpack.c.h.b16 %v859
  %v978 = vunpack.c.h.b16 %v862
  %v979 = vunpack.c.h.b16 %v865
  %v980 = vunpack.c.h.b16 %v868
  %v981 = vunpack.c.h.b16 %v871
  %v982 = vunpack.c.h.b16 %v874
  %v983 = vunpack.c.h.b16 %v877
  %v984 = vunpack.c.h.b16 %v880
  %v985 = vpack.c.b16 %v978, %v977
  %v986 = vpack.c.b16 %v980, %v979
  %v987 = vpack.c.b16 %v982, %v981
  %v988 = vpack.c.b16 %v984, %v983
  %v994 = vsel %vm925, %v976, 0
  %996 = vmatpush.bf16.msra.mxu0 0
  %997 = vmatpush.bf16.msra.mxu0 0
  %998 = vmatpush.bf16.msra.mxu0 0
  %999 = vmatpush.bf16.msra.mxu0 0
  %1000 = vmatpush.bf16.msra.mxu0 %v988
  %1001 = vmatpush.bf16.msra.mxu0 %v987
  %1002 = vmatpush.bf16.msra.mxu0 %v986
  %1003 = vmatpush.bf16.msra.mxu0 %v985
  %1004 = vmatmul.bf16.gmra.mxu0 %v994
  %v1005 = vpop.f32.mrf.mxu0
  %v1006 = vadd.f32 0.0, %v1005
  %v1007 = vpop.f32.mrf.mxu0
  %v1008 = vadd.f32 0.0, %v1007
  %1009 = vdwg.mxu0
  %v1010 = vadd.f32 %v965, %v1006
  %v1011 = vadd.f32 %v967, %v1008
  %s1012 = scalar_lea.vmem %s6, 24
  %v1013 = vld [vmem:[%s1012] sm:$0xf]
  %v1014 = vld [vmem:[%s1012 + $0x4] sm:$0xf]
  %v1017 = vunpack.c.l.b16 %v1013
  %v1018 = vunpack.c.l.b16 %v1014
  %v1019 = vpack.c.b16 %v1018, %v1017
  %1020 = vrot.lane.b32.xlu0 %v985, 64
  %v1021 = vpop.permute.xlu0 %1020
  %1022 = vrot.lane.b32.xlu0 %v986, 64
  %v1023 = vpop.permute.xlu0 %1022
  %1024 = vrot.lane.b32.xlu0 %v987, 64
  %v1025 = vpop.permute.xlu0 %1024
  %1026 = vrot.lane.b32.xlu0 %v988, 64
  %v1027 = vpop.permute.xlu0 %1026
  %v1033 = vsel %vm925, %v1019, 0
  %1035 = vmatpush.bf16.msra.mxu0 0
  %1036 = vmatpush.bf16.msra.mxu0 0
  %1037 = vmatpush.bf16.msra.mxu0 0
  %1038 = vmatpush.bf16.msra.mxu0 0
  %1039 = vmatpush.bf16.msra.mxu0 %v1027
  %1040 = vmatpush.bf16.msra.mxu0 %v1025
  %1041 = vmatpush.bf16.msra.mxu0 %v1023
  %1042 = vmatpush.bf16.msra.mxu0 %v1021
  %1043 = vmatmul.bf16.gmra.mxu0 %v1033
  %v1044 = vpop.f32.mrf.mxu0
  %v1045 = vadd.f32 0.0, %v1044
  %v1046 = vpop.f32.mrf.mxu0
  %v1047 = vadd.f32 0.0, %v1046
  %1048 = vdwg.mxu0
  %v1049 = vadd.f32 %v1010, %v1045
  %v1050 = vadd.f32 %v1011, %v1047
  %s1051 = scalar_lea.vmem %s6, 32
  %v1052 = vld [vmem:[%s1051] sm:$0xf]
  %v1053 = vld [vmem:[%s1051 + $0x4] sm:$0xf]
  %v1056 = vunpack.c.l.b16 %v1052
  %v1057 = vunpack.c.l.b16 %v1053
  %v1058 = vpack.c.b16 %v1057, %v1056
  %v1067 = vunpack.c.l.b16 %v860
  %v1068 = vunpack.c.l.b16 %v863
  %v1069 = vunpack.c.l.b16 %v866
  %v1070 = vunpack.c.l.b16 %v869
  %v1071 = vunpack.c.l.b16 %v872
  %v1072 = vunpack.c.l.b16 %v875
  %v1073 = vunpack.c.l.b16 %v878
  %v1074 = vunpack.c.l.b16 %v881
  %v1075 = vpack.c.b16 %v1068, %v1067
  %v1076 = vpack.c.b16 %v1070, %v1069
  %v1077 = vpack.c.b16 %v1072, %v1071
  %v1078 = vpack.c.b16 %v1074, %v1073
  %v1084 = vsel %vm925, %v1058, 0
  %1086 = vmatpush.bf16.msra.mxu0 0
  %1087 = vmatpush.bf16.msra.mxu0 0
  %1088 = vmatpush.bf16.msra.mxu0 0
  %1089 = vmatpush.bf16.msra.mxu0 0
  %1090 = vmatpush.bf16.msra.mxu0 %v1078
  %1091 = vmatpush.bf16.msra.mxu0 %v1077
  %1092 = vmatpush.bf16.msra.mxu0 %v1076
  %1093 = vmatpush.bf16.msra.mxu0 %v1075
  %1094 = vmatmul.bf16.gmra.mxu0 %v1084
  %v1095 = vpop.f32.mrf.mxu0
  %v1096 = vadd.f32 0.0, %v1095
  %v1097 = vpop.f32.mrf.mxu0
  %v1098 = vadd.f32 0.0, %v1097
  %1099 = vdwg.mxu0
  %v1100 = vadd.f32 %v1049, %v1096
  %v1101 = vadd.f32 %v1050, %v1098
  %s1102 = scalar_lea.vmem %s6, 40
  %v1103 = vld [vmem:[%s1102] sm:$0xf]
  %v1104 = vld [vmem:[%s1102 + $0x4] sm:$0xf]
  %v1107 = vunpack.c.l.b16 %v1103
  %v1108 = vunpack.c.l.b16 %v1104
  %v1109 = vpack.c.b16 %v1108, %v1107
  %1110 = vrot.lane.b32.xlu0 %v1075, 64
  %v1111 = vpop.permute.xlu0 %1110
  %1112 = vrot.lane.b32.xlu0 %v1076, 64
  %v1113 = vpop.permute.xlu0 %1112
  %1114 = vrot.lane.b32.xlu0 %v1077, 64
  %v1115 = vpop.permute.xlu0 %1114
  %1116 = vrot.lane.b32.xlu0 %v1078, 64
  %v1117 = vpop.permute.xlu0 %1116
  %v1123 = vsel %vm925, %v1109, 0
  %1125 = vmatpush.bf16.msra.mxu0 0
  %1126 = vmatpush.bf16.msra.mxu0 0
  %1127 = vmatpush.bf16.msra.mxu0 0
  %1128 = vmatpush.bf16.msra.mxu0 0
  %1129 = vmatpush.bf16.msra.mxu0 %v1117
  %1130 = vmatpush.bf16.msra.mxu0 %v1115
  %1131 = vmatpush.bf16.msra.mxu0 %v1113
  %1132 = vmatpush.bf16.msra.mxu0 %v1111
  %1133 = vmatmul.bf16.gmra.mxu0 %v1123
  %v1134 = vpop.f32.mrf.mxu0
  %v1135 = vadd.f32 0.0, %v1134
  %v1136 = vpop.f32.mrf.mxu0
  %v1137 = vadd.f32 0.0, %v1136
  %1138 = vdwg.mxu0
  %v1139 = vadd.f32 %v1100, %v1135
  %v1140 = vadd.f32 %v1101, %v1137
  %s1141 = scalar_lea.vmem %s6, 48
  %v1142 = vld [vmem:[%s1141] sm:$0xf]
  %v1143 = vld [vmem:[%s1141 + $0x4] sm:$0xf]
  %v1146 = vunpack.c.l.b16 %v1142
  %v1147 = vunpack.c.l.b16 %v1143
  %v1148 = vpack.c.b16 %v1147, %v1146
  %v1149 = vunpack.c.h.b16 %v860
  %v1150 = vunpack.c.h.b16 %v863
  %v1151 = vunpack.c.h.b16 %v866
  %v1152 = vunpack.c.h.b16 %v869
  %v1153 = vunpack.c.h.b16 %v872
  %v1154 = vunpack.c.h.b16 %v875
  %v1155 = vunpack.c.h.b16 %v878
  %v1156 = vunpack.c.h.b16 %v881
  %v1157 = vpack.c.b16 %v1150, %v1149
  %v1158 = vpack.c.b16 %v1152, %v1151
  %v1159 = vpack.c.b16 %v1154, %v1153
  %v1160 = vpack.c.b16 %v1156, %v1155
  %v1166 = vsel %vm925, %v1148, 0
  %1168 = vmatpush.bf16.msra.mxu0 0
  %1169 = vmatpush.bf16.msra.mxu0 0
  %1170 = vmatpush.bf16.msra.mxu0 0
  %1171 = vmatpush.bf16.msra.mxu0 0
  %1172 = vmatpush.bf16.msra.mxu0 %v1160
  %1173 = vmatpush.bf16.msra.mxu0 %v1159
  %1174 = vmatpush.bf16.msra.mxu0 %v1158
  %1175 = vmatpush.bf16.msra.mxu0 %v1157
  %1176 = vmatmul.bf16.gmra.mxu0 %v1166
  %v1177 = vpop.f32.mrf.mxu0
  %v1178 = vadd.f32 0.0, %v1177
  %v1179 = vpop.f32.mrf.mxu0
  %v1180 = vadd.f32 0.0, %v1179
  %1181 = vdwg.mxu0
  %v1182 = vadd.f32 %v1139, %v1178
  %v1183 = vadd.f32 %v1140, %v1180
  %s1184 = scalar_lea.vmem %s6, 56
  %v1185 = vld [vmem:[%s1184] sm:$0xf]
  %v1186 = vld [vmem:[%s1184 + $0x4] sm:$0xf]
  %v1189 = vunpack.c.l.b16 %v1185
  %v1190 = vunpack.c.l.b16 %v1186
  %v1191 = vpack.c.b16 %v1190, %v1189
  %1192 = vrot.lane.b32.xlu0 %v1157, 64
  %v1193 = vpop.permute.xlu0 %1192
  %1194 = vrot.lane.b32.xlu0 %v1158, 64
  %v1195 = vpop.permute.xlu0 %1194
  %1196 = vrot.lane.b32.xlu0 %v1159, 64
  %v1197 = vpop.permute.xlu0 %1196
  %1198 = vrot.lane.b32.xlu0 %v1160, 64
  %v1199 = vpop.permute.xlu0 %1198
  %v1205 = vsel %vm925, %v1191, 0
  %1207 = vmatpush.bf16.msra.mxu0 0
  %1208 = vmatpush.bf16.msra.mxu0 0
  %1209 = vmatpush.bf16.msra.mxu0 0
  %1210 = vmatpush.bf16.msra.mxu0 0
  %1211 = vmatpush.bf16.msra.mxu0 %v1199
  %1212 = vmatpush.bf16.msra.mxu0 %v1197
  %1213 = vmatpush.bf16.msra.mxu0 %v1195
  %1214 = vmatpush.bf16.msra.mxu0 %v1193
  %1215 = vmatmul.bf16.gmra.mxu0 %v1205
  %v1216 = vpop.f32.mrf.mxu0
  %v1217 = vadd.f32 0.0, %v1216
  %v1218 = vpop.f32.mrf.mxu0
  %v1219 = vadd.f32 0.0, %v1218
  %1220 = vdwg.mxu0
  %v1221 = vadd.f32 %v1182, %v1217
  %v1222 = vadd.f32 %v1183, %v1219
  %s1223 = scalar_lea.vmem %s6, 64
  %v1224 = vld [vmem:[%s1223] sm:$0xf]
  %v1225 = vld [vmem:[%s1223 + $0x4] sm:$0xf]
  %v1228 = vunpack.c.l.b16 %v1224
  %v1229 = vunpack.c.l.b16 %v1225
  %v1230 = vpack.c.b16 %v1229, %v1228
  %v1239 = vunpack.c.l.b16 %v861
  %v1240 = vunpack.c.l.b16 %v864
  %v1241 = vunpack.c.l.b16 %v867
  %v1242 = vunpack.c.l.b16 %v870
  %v1243 = vunpack.c.l.b16 %v873
  %v1244 = vunpack.c.l.b16 %v876
  %v1245 = vunpack.c.l.b16 %v879
  %v1246 = vunpack.c.l.b16 %v882
  %v1247 = vpack.c.b16 %v1240, %v1239
  %v1248 = vpack.c.b16 %v1242, %v1241
  %v1249 = vpack.c.b16 %v1244, %v1243
  %v1250 = vpack.c.b16 %v1246, %v1245
  %v1256 = vsel %vm925, %v1230, 0
  %1258 = vmatpush.bf16.msra.mxu0 0
  %1259 = vmatpush.bf16.msra.mxu0 0
  %1260 = vmatpush.bf16.msra.mxu0 0
  %1261 = vmatpush.bf16.msra.mxu0 0
  %1262 = vmatpush.bf16.msra.mxu0 %v1250
  %1263 = vmatpush.bf16.msra.mxu0 %v1249
  %1264 = vmatpush.bf16.msra.mxu0 %v1248
  %1265 = vmatpush.bf16.msra.mxu0 %v1247
  %1266 = vmatmul.bf16.gmra.mxu0 %v1256
  %v1267 = vpop.f32.mrf.mxu0
  %v1268 = vadd.f32 0.0, %v1267
  %v1269 = vpop.f32.mrf.mxu0
  %v1270 = vadd.f32 0.0, %v1269
  %1271 = vdwg.mxu0
  %v1272 = vadd.f32 %v1221, %v1268
  %v1273 = vadd.f32 %v1222, %v1270
  %v1274 = vpack.c.bf16 %v1273, %v1272
  %v1275 = vld [vmem:[%s2] sm:$0xff]
  %v1276 = vld [vmem:[%s2 + $0x8] sm:$0xff]
  %v1277 = vld [vmem:[%s2 + $0x10] sm:$0xff]
  %v1278 = vld [vmem:[%s2 + $0x18] sm:$0xff]
  %v1279 = vld [vmem:[%s2 + $0x20] sm:$0xff]
  %v1280 = vld [vmem:[%s2 + $0x28] sm:$0xff]
  %v1281 = vld [vmem:[%s2 + $0x30] sm:$0xff]
  %v1282 = vld [vmem:[%s2 + $0x38] sm:$0xff]
  %v1291 = vunpack.c.l.b16 %v1275
  %v1292 = vunpack.c.h.b16 %v1275
  %v1293 = vunpack.c.l.b16 %v1276
  %v1294 = vunpack.c.h.b16 %v1276
  %v1295 = vunpack.c.l.b16 %v1277
  %v1296 = vunpack.c.h.b16 %v1277
  %v1297 = vunpack.c.l.b16 %v1278
  %v1298 = vunpack.c.h.b16 %v1278
  %v1299 = vunpack.c.l.b16 %v1279
  %v1300 = vunpack.c.h.b16 %v1279
  %v1301 = vunpack.c.l.b16 %v1280
  %v1302 = vunpack.c.h.b16 %v1280
  %v1303 = vunpack.c.l.b16 %v1281
  %v1304 = vunpack.c.h.b16 %v1281
  %v1305 = vunpack.c.l.b16 %v1282
  %v1306 = vunpack.c.h.b16 %v1282
  %v1307 = vpack.c.b16 %v1293, %v1291
  %v1308 = vpack.c.b16 %v1294, %v1292
  %v1309 = vpack.c.b16 %v1297, %v1295
  %v1310 = vpack.c.b16 %v1298, %v1296
  %v1311 = vpack.c.b16 %v1301, %v1299
  %v1312 = vpack.c.b16 %v1302, %v1300
  %v1313 = vpack.c.b16 %v1305, %v1303
  %v1314 = vpack.c.b16 %v1306, %v1304
  %v1324 = vsel %vm925, %v1274, 0
  %1326 = vmatpush.bf16.msra.mxu0 0
  %1327 = vmatpush.bf16.msra.mxu0 0
  %1328 = vmatpush.bf16.msra.mxu0 0
  %1329 = vmatpush.bf16.msra.mxu0 0
  %1330 = vmatpush.bf16.msra.mxu0 %v1313
  %1331 = vmatpush.bf16.msra.mxu0 %v1311
  %1332 = vmatpush.bf16.msra.mxu0 %v1309
  %1333 = vmatpush.bf16.msra.mxu0 %v1307
  %1334 = vmatmul.bf16.gmra.mxu0 %v1324
  %v1335 = vpop.f32.mrf.mxu0
  %v1336 = vadd.f32 0.0, %v1335
  %v1337 = vpop.f32.mrf.mxu0
  %v1338 = vadd.f32 0.0, %v1337
  %1339 = vdwg.mxu0
  %1340 = vmatpush.bf16.msra.mxu0 0
  %1341 = vmatpush.bf16.msra.mxu0 0
  %1342 = vmatpush.bf16.msra.mxu0 0
  %1343 = vmatpush.bf16.msra.mxu0 0
  %1344 = vmatpush.bf16.msra.mxu0 %v1314
  %1345 = vmatpush.bf16.msra.mxu0 %v1312
  %1346 = vmatpush.bf16.msra.mxu0 %v1310
  %1347 = vmatpush.bf16.msra.mxu0 %v1308
  %1348 = vmatmul.bf16.gmra.mxu0 %v1324
  %v1349 = vpop.f32.mrf.mxu0
  %v1350 = vadd.f32 0.0, %v1349
  %v1351 = vpop.f32.mrf.mxu0
  %v1352 = vadd.f32 0.0, %v1351
  %1353 = vdwg.mxu0
  %v1354 = vpack.c.bf16 %v1350, %v1336
  %v1355 = vpack.c.bf16 %v1352, %v1338
  %v1356 = vld [vmem:[%s7] sm:$0xf]
  %v1357 = vld [vmem:[%s7 + $0x4] sm:$0xf]
  %v1358 = vld [vmem:[%s7 + $0x8] sm:$0xf]
  %v1359 = vld [vmem:[%s7 + $0xc] sm:$0xf]
  %v1360 = vld [vmem:[%s7 + $0x10] sm:$0xf]
  %v1361 = vld [vmem:[%s7 + $0x14] sm:$0xf]
  %v1362 = vld [vmem:[%s7 + $0x18] sm:$0xf]
  %v1363 = vld [vmem:[%s7 + $0x1c] sm:$0xf]
  %s1364 = scalar_lea.vmem %s7, 32
  %v1365 = vld [vmem:[%s1364] sm:$0xf]
  %v1366 = vld [vmem:[%s1364 + $0x4] sm:$0xf]
  %v1367 = vld [vmem:[%s1364 + $0x8] sm:$0xf]
  %v1368 = vld [vmem:[%s1364 + $0xc] sm:$0xf]
  %v1369 = vld [vmem:[%s1364 + $0x10] sm:$0xf]
  %v1370 = vld [vmem:[%s1364 + $0x14] sm:$0xf]
  %v1371 = vld [vmem:[%s1364 + $0x18] sm:$0xf]
  %v1372 = vld [vmem:[%s1364 + $0x1c] sm:$0xf]
  %v1381 = vunpack.c.l.b16 %v1365
  %v1382 = vunpack.c.l.b16 %v1366
  %v1383 = vunpack.c.l.b16 %v1367
  %v1384 = vunpack.c.l.b16 %v1368
  %v1385 = vunpack.c.l.b16 %v1369
  %v1386 = vunpack.c.l.b16 %v1370
  %v1387 = vunpack.c.l.b16 %v1371
  %v1388 = vunpack.c.l.b16 %v1372
  %v1389 = vpack.c.b16 %v1382, %v1381
  %v1390 = vpack.c.b16 %v1384, %v1383
  %v1391 = vpack.c.b16 %v1386, %v1385
  %v1392 = vpack.c.b16 %v1388, %v1387
  %v1395 = vunpack.c.l.b16 %v1354
  %v1396 = vunpack.c.l.b16 %v1355
  %v1397 = vpack.c.b16 %v1396, %v1395
  %1398 = vrot.lane.b32.xlu0 %v1397, 112
  %v1399 = vpop.permute.xlu0 %1398
  %vm1401 = vcmask 130048
  %v1403 = vsel %vm1401, %v1389, 0
  %v1406 = vsel %vm1401, %v1390, 0
  %v1409 = vsel %vm1401, %v1391, 0
  %v1412 = vsel %vm1401, %v1392, 0
  %1414 = vmatpush.bf16.msra.mxu0 0
  %1415 = vmatpush.bf16.msra.mxu0 0
  %1416 = vmatpush.bf16.msra.mxu0 0
  %1417 = vmatpush.bf16.msra.mxu0 0
  %1418 = vmatpush.bf16.msra.mxu0 0
  %1419 = vmatpush.bf16.msra.mxu0 0
  %1420 = vmatpush.bf16.msra.mxu0 0
  %1421 = vmatpush.bf16.msra.mxu0 %v1399
  %1422 = vmatmul.bf16.gmra.mxu0 %v1403
  %v1423 = vpop.f32.mrf.mxu0
  %v1424 = vadd.f32 0.0, %v1423
  %v1425 = vpop.f32.mrf.mxu0
  %v1426 = vadd.f32 0.0, %v1425
  %1427 = vmatmul.bf16.gmra.mxu0 %v1406
  %v1428 = vpop.f32.mrf.mxu0
  %v1429 = vadd.f32 0.0, %v1428
  %v1430 = vpop.f32.mrf.mxu0
  %v1431 = vadd.f32 0.0, %v1430
  %1432 = vmatmul.bf16.gmra.mxu0 %v1409
  %v1433 = vpop.f32.mrf.mxu0
  %v1434 = vadd.f32 0.0, %v1433
  %v1435 = vpop.f32.mrf.mxu0
  %v1436 = vadd.f32 0.0, %v1435
  %1437 = vmatmul.bf16.gmra.mxu0 %v1412
  %v1438 = vpop.f32.mrf.mxu0
  %v1439 = vadd.f32 0.0, %v1438
  %v1440 = vpop.f32.mrf.mxu0
  %v1441 = vadd.f32 0.0, %v1440
  %1442 = vdwg.mxu0
  %v1451 = vunpack.c.l.b16 %v1356
  %v1452 = vunpack.c.l.b16 %v1357
  %v1453 = vunpack.c.l.b16 %v1358
  %v1454 = vunpack.c.l.b16 %v1359
  %v1455 = vunpack.c.l.b16 %v1360
  %v1456 = vunpack.c.l.b16 %v1361
  %v1457 = vunpack.c.l.b16 %v1362
  %v1458 = vunpack.c.l.b16 %v1363
  %v1459 = vpack.c.b16 %v1452, %v1451
  %v1460 = vpack.c.b16 %v1454, %v1453
  %v1461 = vpack.c.b16 %v1456, %v1455
  %v1462 = vpack.c.b16 %v1458, %v1457
  %v1465 = vsel %vm1401, %v1459, 0
  %v1468 = vsel %vm1401, %v1460, 0
  %v1471 = vsel %vm1401, %v1461, 0
  %v1474 = vsel %vm1401, %v1462, 0
  %1476 = vmatpush.bf16.msra.mxu0 0
  %1477 = vmatpush.bf16.msra.mxu0 0
  %1478 = vmatpush.bf16.msra.mxu0 0
  %1479 = vmatpush.bf16.msra.mxu0 0
  %1480 = vmatpush.bf16.msra.mxu0 0
  %1481 = vmatpush.bf16.msra.mxu0 0
  %1482 = vmatpush.bf16.msra.mxu0 0
  %1483 = vmatpush.bf16.msra.mxu0 %v1397
  %1484 = vmatmul.bf16.gmra.mxu0 %v1465
  %v1485 = vpop.f32.mrf.mxu0
  %v1486 = vadd.f32 %v1424, %v1485
  %v1487 = vpop.f32.mrf.mxu0
  %v1488 = vadd.f32 %v1426, %v1487
  %1489 = vmatmul.bf16.gmra.mxu0 %v1468
  %v1490 = vpop.f32.mrf.mxu0
  %v1491 = vadd.f32 %v1429, %v1490
  %v1492 = vpop.f32.mrf.mxu0
  %v1493 = vadd.f32 %v1431, %v1492
  %1494 = vmatmul.bf16.gmra.mxu0 %v1471
  %v1495 = vpop.f32.mrf.mxu0
  %v1496 = vadd.f32 %v1434, %v1495
  %v1497 = vpop.f32.mrf.mxu0
  %v1498 = vadd.f32 %v1436, %v1497
  %1499 = vmatmul.bf16.gmra.mxu0 %v1474
  %v1500 = vpop.f32.mrf.mxu0
  %v1501 = vadd.f32 %v1439, %v1500
  %v1502 = vpop.f32.mrf.mxu0
  %v1503 = vadd.f32 %v1441, %v1502
  %1504 = vdwg.mxu0
  %s1505 = scalar_lea.vmem %s7, 64
  %v1506 = vld [vmem:[%s1505] sm:$0xf]
  %v1507 = vld [vmem:[%s1505 + $0x4] sm:$0xf]
  %v1508 = vld [vmem:[%s1505 + $0x8] sm:$0xf]
  %v1509 = vld [vmem:[%s1505 + $0xc] sm:$0xf]
  %v1510 = vld [vmem:[%s1505 + $0x10] sm:$0xf]
  %v1511 = vld [vmem:[%s1505 + $0x14] sm:$0xf]
  %v1512 = vld [vmem:[%s1505 + $0x18] sm:$0xf]
  %v1513 = vld [vmem:[%s1505 + $0x1c] sm:$0xf]
  %v1522 = vunpack.c.l.b16 %v1506
  %v1523 = vunpack.c.l.b16 %v1507
  %v1524 = vunpack.c.l.b16 %v1508
  %v1525 = vunpack.c.l.b16 %v1509
  %v1526 = vunpack.c.l.b16 %v1510
  %v1527 = vunpack.c.l.b16 %v1511
  %v1528 = vunpack.c.l.b16 %v1512
  %v1529 = vunpack.c.l.b16 %v1513
  %v1530 = vpack.c.b16 %v1523, %v1522
  %v1531 = vpack.c.b16 %v1525, %v1524
  %v1532 = vpack.c.b16 %v1527, %v1526
  %v1533 = vpack.c.b16 %v1529, %v1528
  %1534 = vrot.lane.b32.xlu0 %v1397, 96
  %v1535 = vpop.permute.xlu0 %1534
  %v1538 = vsel %vm1401, %v1530, 0
  %v1541 = vsel %vm1401, %v1531, 0
  %v1544 = vsel %vm1401, %v1532, 0
  %v1547 = vsel %vm1401, %v1533, 0
  %1549 = vmatpush.bf16.msra.mxu0 0
  %1550 = vmatpush.bf16.msra.mxu0 0
  %1551 = vmatpush.bf16.msra.mxu0 0
  %1552 = vmatpush.bf16.msra.mxu0 0
  %1553 = vmatpush.bf16.msra.mxu0 0
  %1554 = vmatpush.bf16.msra.mxu0 0
  %1555 = vmatpush.bf16.msra.mxu0 0
  %1556 = vmatpush.bf16.msra.mxu0 %v1535
  %1557 = vmatmul.bf16.gmra.mxu0 %v1538
  %v1558 = vpop.f32.mrf.mxu0
  %v1559 = vadd.f32 0.0, %v1558
  %v1560 = vpop.f32.mrf.mxu0
  %v1561 = vadd.f32 0.0, %v1560
  %1562 = vmatmul.bf16.gmra.mxu0 %v1541
  %v1563 = vpop.f32.mrf.mxu0
  %v1564 = vadd.f32 0.0, %v1563
  %v1565 = vpop.f32.mrf.mxu0
  %v1566 = vadd.f32 0.0, %v1565
  %1567 = vmatmul.bf16.gmra.mxu0 %v1544
  %v1568 = vpop.f32.mrf.mxu0
  %v1569 = vadd.f32 0.0, %v1568
  %v1570 = vpop.f32.mrf.mxu0
  %v1571 = vadd.f32 0.0, %v1570
  %1572 = vmatmul.bf16.gmra.mxu0 %v1547
  %v1573 = vpop.f32.mrf.mxu0
  %v1574 = vadd.f32 0.0, %v1573
  %v1575 = vpop.f32.mrf.mxu0
  %v1576 = vadd.f32 0.0, %v1575
  %1577 = vdwg.mxu0
  %v1578 = vadd.f32 %v1486, %v1559
  %v1579 = vadd.f32 %v1488, %v1561
  %v1580 = vadd.f32 %v1491, %v1564
  %v1581 = vadd.f32 %v1493, %v1566
  %v1582 = vadd.f32 %v1496, %v1569
  %v1583 = vadd.f32 %v1498, %v1571
  %v1584 = vadd.f32 %v1501, %v1574
  %v1585 = vadd.f32 %v1503, %v1576
  %s1586 = scalar_lea.vmem %s7, 96
  %v1587 = vld [vmem:[%s1586] sm:$0xf]
  %v1588 = vld [vmem:[%s1586 + $0x4] sm:$0xf]
  %v1589 = vld [vmem:[%s1586 + $0x8] sm:$0xf]
  %v1590 = vld [vmem:[%s1586 + $0xc] sm:$0xf]
  %v1591 = vld [vmem:[%s1586 + $0x10] sm:$0xf]
  %v1592 = vld [vmem:[%s1586 + $0x14] sm:$0xf]
  %v1593 = vld [vmem:[%s1586 + $0x18] sm:$0xf]
  %v1594 = vld [vmem:[%s1586 + $0x1c] sm:$0xf]
  %v1603 = vunpack.c.l.b16 %v1587
  %v1604 = vunpack.c.l.b16 %v1588
  %v1605 = vunpack.c.l.b16 %v1589
  %v1606 = vunpack.c.l.b16 %v1590
  %v1607 = vunpack.c.l.b16 %v1591
  %v1608 = vunpack.c.l.b16 %v1592
  %v1609 = vunpack.c.l.b16 %v1593
  %v1610 = vunpack.c.l.b16 %v1594
  %v1611 = vpack.c.b16 %v1604, %v1603
  %v1612 = vpack.c.b16 %v1606, %v1605
  %v1613 = vpack.c.b16 %v1608, %v1607
  %v1614 = vpack.c.b16 %v1610, %v1609
  %1615 = vrot.lane.b32.xlu0 %v1397, 80
  %v1616 = vpop.permute.xlu0 %1615
  %v1619 = vsel %vm1401, %v1611, 0
  %v1622 = vsel %vm1401, %v1612, 0
  %v1625 = vsel %vm1401, %v1613, 0
  %v1628 = vsel %vm1401, %v1614, 0
  %1630 = vmatpush.bf16.msra.mxu0 0
  %1631 = vmatpush.bf16.msra.mxu0 0
  %1632 = vmatpush.bf16.msra.mxu0 0
  %1633 = vmatpush.bf16.msra.mxu0 0
  %1634 = vmatpush.bf16.msra.mxu0 0
  %1635 = vmatpush.bf16.msra.mxu0 0
  %1636 = vmatpush.bf16.msra.mxu0 0
  %1637 = vmatpush.bf16.msra.mxu0 %v1616
  %1638 = vmatmul.bf16.gmra.mxu0 %v1619
  %v1639 = vpop.f32.mrf.mxu0
  %v1640 = vadd.f32 0.0, %v1639
  %v1641 = vpop.f32.mrf.mxu0
  %v1642 = vadd.f32 0.0, %v1641
  %1643 = vmatmul.bf16.gmra.mxu0 %v1622
  %v1644 = vpop.f32.mrf.mxu0
  %v1645 = vadd.f32 0.0, %v1644
  %v1646 = vpop.f32.mrf.mxu0
  %v1647 = vadd.f32 0.0, %v1646
  %1648 = vmatmul.bf16.gmra.mxu0 %v1625
  %v1649 = vpop.f32.mrf.mxu0
  %v1650 = vadd.f32 0.0, %v1649
  %v1651 = vpop.f32.mrf.mxu0
  %v1652 = vadd.f32 0.0, %v1651
  %1653 = vmatmul.bf16.gmra.mxu0 %v1628
  %v1654 = vpop.f32.mrf.mxu0
  %v1655 = vadd.f32 0.0, %v1654
  %v1656 = vpop.f32.mrf.mxu0
  %v1657 = vadd.f32 0.0, %v1656
  %1658 = vdwg.mxu0
  %v1659 = vadd.f32 %v1578, %v1640
  %v1660 = vadd.f32 %v1579, %v1642
  %v1661 = vadd.f32 %v1580, %v1645
  %v1662 = vadd.f32 %v1581, %v1647
  %v1663 = vadd.f32 %v1582, %v1650
  %v1664 = vadd.f32 %v1583, %v1652
  %v1665 = vadd.f32 %v1584, %v1655
  %v1666 = vadd.f32 %v1585, %v1657
  %s1667 = scalar_lea.vmem %s7, 128
  %v1668 = vld [vmem:[%s1667] sm:$0xf]
  %v1669 = vld [vmem:[%s1667 + $0x4] sm:$0xf]
  %v1670 = vld [vmem:[%s1667 + $0x8] sm:$0xf]
  %v1671 = vld [vmem:[%s1667 + $0xc] sm:$0xf]
  %v1672 = vld [vmem:[%s1667 + $0x10] sm:$0xf]
  %v1673 = vld [vmem:[%s1667 + $0x14] sm:$0xf]
  %v1674 = vld [vmem:[%s1667 + $0x18] sm:$0xf]
  %v1675 = vld [vmem:[%s1667 + $0x1c] sm:$0xf]
  %v1684 = vunpack.c.l.b16 %v1668
  %v1685 = vunpack.c.l.b16 %v1669
  %v1686 = vunpack.c.l.b16 %v1670
  %v1687 = vunpack.c.l.b16 %v1671
  %v1688 = vunpack.c.l.b16 %v1672
  %v1689 = vunpack.c.l.b16 %v1673
  %v1690 = vunpack.c.l.b16 %v1674
  %v1691 = vunpack.c.l.b16 %v1675
  %v1692 = vpack.c.b16 %v1685, %v1684
  %v1693 = vpack.c.b16 %v1687, %v1686
  %v1694 = vpack.c.b16 %v1689, %v1688
  %v1695 = vpack.c.b16 %v1691, %v1690
  %1696 = vrot.lane.b32.xlu0 %v1397, 64
  %v1697 = vpop.permute.xlu0 %1696
  %v1700 = vsel %vm1401, %v1692, 0
  %v1703 = vsel %vm1401, %v1693, 0
  %v1706 = vsel %vm1401, %v1694, 0
  %v1709 = vsel %vm1401, %v1695, 0
  %1711 = vmatpush.bf16.msra.mxu0 0
  %1712 = vmatpush.bf16.msra.mxu0 0
  %1713 = vmatpush.bf16.msra.mxu0 0
  %1714 = vmatpush.bf16.msra.mxu0 0
  %1715 = vmatpush.bf16.msra.mxu0 0
  %1716 = vmatpush.bf16.msra.mxu0 0
  %1717 = vmatpush.bf16.msra.mxu0 0
  %1718 = vmatpush.bf16.msra.mxu0 %v1697
  %1719 = vmatmul.bf16.gmra.mxu0 %v1700
  %v1720 = vpop.f32.mrf.mxu0
  %v1721 = vadd.f32 0.0, %v1720
  %v1722 = vpop.f32.mrf.mxu0
  %v1723 = vadd.f32 0.0, %v1722
  %1724 = vmatmul.bf16.gmra.mxu0 %v1703
  %v1725 = vpop.f32.mrf.mxu0
  %v1726 = vadd.f32 0.0, %v1725
  %v1727 = vpop.f32.mrf.mxu0
  %v1728 = vadd.f32 0.0, %v1727
  %1729 = vmatmul.bf16.gmra.mxu0 %v1706
  %v1730 = vpop.f32.mrf.mxu0
  %v1731 = vadd.f32 0.0, %v1730
  %v1732 = vpop.f32.mrf.mxu0
  %v1733 = vadd.f32 0.0, %v1732
  %1734 = vmatmul.bf16.gmra.mxu0 %v1709
  %v1735 = vpop.f32.mrf.mxu0
  %v1736 = vadd.f32 0.0, %v1735
  %v1737 = vpop.f32.mrf.mxu0
  %v1738 = vadd.f32 0.0, %v1737
  %1739 = vdwg.mxu0
  %v1740 = vadd.f32 %v1659, %v1721
  %v1741 = vadd.f32 %v1660, %v1723
  %v1742 = vadd.f32 %v1661, %v1726
  %v1743 = vadd.f32 %v1662, %v1728
  %v1744 = vadd.f32 %v1663, %v1731
  %v1745 = vadd.f32 %v1664, %v1733
  %v1746 = vadd.f32 %v1665, %v1736
  %v1747 = vadd.f32 %v1666, %v1738
  %s1748 = scalar_lea.vmem %s7, 160
  %v1749 = vld [vmem:[%s1748] sm:$0xf]
  %v1750 = vld [vmem:[%s1748 + $0x4] sm:$0xf]
  %v1751 = vld [vmem:[%s1748 + $0x8] sm:$0xf]
  %v1752 = vld [vmem:[%s1748 + $0xc] sm:$0xf]
  %v1753 = vld [vmem:[%s1748 + $0x10] sm:$0xf]
  %v1754 = vld [vmem:[%s1748 + $0x14] sm:$0xf]
  %v1755 = vld [vmem:[%s1748 + $0x18] sm:$0xf]
  %v1756 = vld [vmem:[%s1748 + $0x1c] sm:$0xf]
  %v1765 = vunpack.c.l.b16 %v1749
  %v1766 = vunpack.c.l.b16 %v1750
  %v1767 = vunpack.c.l.b16 %v1751
  %v1768 = vunpack.c.l.b16 %v1752
  %v1769 = vunpack.c.l.b16 %v1753
  %v1770 = vunpack.c.l.b16 %v1754
  %v1771 = vunpack.c.l.b16 %v1755
  %v1772 = vunpack.c.l.b16 %v1756
  %v1773 = vpack.c.b16 %v1766, %v1765
  %v1774 = vpack.c.b16 %v1768, %v1767
  %v1775 = vpack.c.b16 %v1770, %v1769
  %v1776 = vpack.c.b16 %v1772, %v1771
  %1777 = vrot.lane.b32.xlu0 %v1397, 48
  %v1778 = vpop.permute.xlu0 %1777
  %v1781 = vsel %vm1401, %v1773, 0
  %v1784 = vsel %vm1401, %v1774, 0
  %v1787 = vsel %vm1401, %v1775, 0
  %v1790 = vsel %vm1401, %v1776, 0
  %1792 = vmatpush.bf16.msra.mxu0 0
  %1793 = vmatpush.bf16.msra.mxu0 0
  %1794 = vmatpush.bf16.msra.mxu0 0
  %1795 = vmatpush.bf16.msra.mxu0 0
  %1796 = vmatpush.bf16.msra.mxu0 0
  %1797 = vmatpush.bf16.msra.mxu0 0
  %1798 = vmatpush.bf16.msra.mxu0 0
  %1799 = vmatpush.bf16.msra.mxu0 %v1778
  %1800 = vmatmul.bf16.gmra.mxu0 %v1781
  %v1801 = vpop.f32.mrf.mxu0
  %v1802 = vadd.f32 0.0, %v1801
  %v1803 = vpop.f32.mrf.mxu0
  %v1804 = vadd.f32 0.0, %v1803
  %1805 = vmatmul.bf16.gmra.mxu0 %v1784
  %v1806 = vpop.f32.mrf.mxu0
  %v1807 = vadd.f32 0.0, %v1806
  %v1808 = vpop.f32.mrf.mxu0
  %v1809 = vadd.f32 0.0, %v1808
  %1810 = vmatmul.bf16.gmra.mxu0 %v1787
  %v1811 = vpop.f32.mrf.mxu0
  %v1812 = vadd.f32 0.0, %v1811
  %v1813 = vpop.f32.mrf.mxu0
  %v1814 = vadd.f32 0.0, %v1813
  %1815 = vmatmul.bf16.gmra.mxu0 %v1790
  %v1816 = vpop.f32.mrf.mxu0
  %v1817 = vadd.f32 0.0, %v1816
  %v1818 = vpop.f32.mrf.mxu0
  %v1819 = vadd.f32 0.0, %v1818
  %1820 = vdwg.mxu0
  %v1821 = vadd.f32 %v1740, %v1802
  %v1822 = vadd.f32 %v1741, %v1804
  %v1823 = vadd.f32 %v1742, %v1807
  %v1824 = vadd.f32 %v1743, %v1809
  %v1825 = vadd.f32 %v1744, %v1812
  %v1826 = vadd.f32 %v1745, %v1814
  %v1827 = vadd.f32 %v1746, %v1817
  %v1828 = vadd.f32 %v1747, %v1819
  %s1829 = scalar_lea.vmem %s7, 192
  %v1830 = vld [vmem:[%s1829] sm:$0xf]
  %v1831 = vld [vmem:[%s1829 + $0x4] sm:$0xf]
  %v1832 = vld [vmem:[%s1829 + $0x8] sm:$0xf]
  %v1833 = vld [vmem:[%s1829 + $0xc] sm:$0xf]
  %v1834 = vld [vmem:[%s1829 + $0x10] sm:$0xf]
  %v1835 = vld [vmem:[%s1829 + $0x14] sm:$0xf]
  %v1836 = vld [vmem:[%s1829 + $0x18] sm:$0xf]
  %v1837 = vld [vmem:[%s1829 + $0x1c] sm:$0xf]
  %v1846 = vunpack.c.l.b16 %v1830
  %v1847 = vunpack.c.l.b16 %v1831
  %v1848 = vunpack.c.l.b16 %v1832
  %v1849 = vunpack.c.l.b16 %v1833
  %v1850 = vunpack.c.l.b16 %v1834
  %v1851 = vunpack.c.l.b16 %v1835
  %v1852 = vunpack.c.l.b16 %v1836
  %v1853 = vunpack.c.l.b16 %v1837
  %v1854 = vpack.c.b16 %v1847, %v1846
  %v1855 = vpack.c.b16 %v1849, %v1848
  %v1856 = vpack.c.b16 %v1851, %v1850
  %v1857 = vpack.c.b16 %v1853, %v1852
  %1858 = vrot.lane.b32.xlu0 %v1397, 32
  %v1859 = vpop.permute.xlu0 %1858
  %v1862 = vsel %vm1401, %v1854, 0
  %v1865 = vsel %vm1401, %v1855, 0
  %v1868 = vsel %vm1401, %v1856, 0
  %v1871 = vsel %vm1401, %v1857, 0
  %1873 = vmatpush.bf16.msra.mxu0 0
  %1874 = vmatpush.bf16.msra.mxu0 0
  %1875 = vmatpush.bf16.msra.mxu0 0
  %1876 = vmatpush.bf16.msra.mxu0 0
  %1877 = vmatpush.bf16.msra.mxu0 0
  %1878 = vmatpush.bf16.msra.mxu0 0
  %1879 = vmatpush.bf16.msra.mxu0 0
  %1880 = vmatpush.bf16.msra.mxu0 %v1859
  %1881 = vmatmul.bf16.gmra.mxu0 %v1862
  %v1882 = vpop.f32.mrf.mxu0
  %v1883 = vadd.f32 0.0, %v1882
  %v1884 = vpop.f32.mrf.mxu0
  %v1885 = vadd.f32 0.0, %v1884
  %1886 = vmatmul.bf16.gmra.mxu0 %v1865
  %v1887 = vpop.f32.mrf.mxu0
  %v1888 = vadd.f32 0.0, %v1887
  %v1889 = vpop.f32.mrf.mxu0
  %v1890 = vadd.f32 0.0, %v1889
  %1891 = vmatmul.bf16.gmra.mxu0 %v1868
  %v1892 = vpop.f32.mrf.mxu0
  %v1893 = vadd.f32 0.0, %v1892
  %v1894 = vpop.f32.mrf.mxu0
  %v1895 = vadd.f32 0.0, %v1894
  %1896 = vmatmul.bf16.gmra.mxu0 %v1871
  %v1897 = vpop.f32.mrf.mxu0
  %v1898 = vadd.f32 0.0, %v1897
  %v1899 = vpop.f32.mrf.mxu0
  %v1900 = vadd.f32 0.0, %v1899
  %1901 = vdwg.mxu0
  %v1902 = vadd.f32 %v1821, %v1883
  %v1903 = vadd.f32 %v1822, %v1885
  %v1904 = vadd.f32 %v1823, %v1888
  %v1905 = vadd.f32 %v1824, %v1890
  %v1906 = vadd.f32 %v1825, %v1893
  %v1907 = vadd.f32 %v1826, %v1895
  %v1908 = vadd.f32 %v1827, %v1898
  %v1909 = vadd.f32 %v1828, %v1900
  %s1910 = scalar_lea.vmem %s7, 224
  %v1911 = vld [vmem:[%s1910] sm:$0xf]
  %v1912 = vld [vmem:[%s1910 + $0x4] sm:$0xf]
  %v1913 = vld [vmem:[%s1910 + $0x8] sm:$0xf]
  %v1914 = vld [vmem:[%s1910 + $0xc] sm:$0xf]
  %v1915 = vld [vmem:[%s1910 + $0x10] sm:$0xf]
  %v1916 = vld [vmem:[%s1910 + $0x14] sm:$0xf]
  %v1917 = vld [vmem:[%s1910 + $0x18] sm:$0xf]
  %v1918 = vld [vmem:[%s1910 + $0x1c] sm:$0xf]
  %v1927 = vunpack.c.l.b16 %v1911
  %v1928 = vunpack.c.l.b16 %v1912
  %v1929 = vunpack.c.l.b16 %v1913
  %v1930 = vunpack.c.l.b16 %v1914
  %v1931 = vunpack.c.l.b16 %v1915
  %v1932 = vunpack.c.l.b16 %v1916
  %v1933 = vunpack.c.l.b16 %v1917
  %v1934 = vunpack.c.l.b16 %v1918
  %v1935 = vpack.c.b16 %v1928, %v1927
  %v1936 = vpack.c.b16 %v1930, %v1929
  %v1937 = vpack.c.b16 %v1932, %v1931
  %v1938 = vpack.c.b16 %v1934, %v1933
  %1939 = vrot.lane.b32.xlu0 %v1397, 16
  %v1940 = vpop.permute.xlu0 %1939
  %v1943 = vsel %vm1401, %v1935, 0
  %v1946 = vsel %vm1401, %v1936, 0
  %v1949 = vsel %vm1401, %v1937, 0
  %v1952 = vsel %vm1401, %v1938, 0
  %1954 = vmatpush.bf16.msra.mxu0 0
  %1955 = vmatpush.bf16.msra.mxu0 0
  %1956 = vmatpush.bf16.msra.mxu0 0
  %1957 = vmatpush.bf16.msra.mxu0 0
  %1958 = vmatpush.bf16.msra.mxu0 0
  %1959 = vmatpush.bf16.msra.mxu0 0
  %1960 = vmatpush.bf16.msra.mxu0 0
  %1961 = vmatpush.bf16.msra.mxu0 %v1940
  %1962 = vmatmul.bf16.gmra.mxu0 %v1943
  %v1963 = vpop.f32.mrf.mxu0
  %v1964 = vadd.f32 0.0, %v1963
  %v1965 = vpop.f32.mrf.mxu0
  %v1966 = vadd.f32 0.0, %v1965
  %1967 = vmatmul.bf16.gmra.mxu0 %v1946
  %v1968 = vpop.f32.mrf.mxu0
  %v1969 = vadd.f32 0.0, %v1968
  %v1970 = vpop.f32.mrf.mxu0
  %v1971 = vadd.f32 0.0, %v1970
  %1972 = vmatmul.bf16.gmra.mxu0 %v1949
  %v1973 = vpop.f32.mrf.mxu0
  %v1974 = vadd.f32 0.0, %v1973
  %v1975 = vpop.f32.mrf.mxu0
  %v1976 = vadd.f32 0.0, %v1975
  %1977 = vmatmul.bf16.gmra.mxu0 %v1952
  %v1978 = vpop.f32.mrf.mxu0
  %v1979 = vadd.f32 0.0, %v1978
  %v1980 = vpop.f32.mrf.mxu0
  %v1981 = vadd.f32 0.0, %v1980
  %1982 = vdwg.mxu0
  %v1983 = vadd.f32 %v1902, %v1964
  %v1984 = vadd.f32 %v1903, %v1966
  %v1985 = vadd.f32 %v1904, %v1969
  %v1986 = vadd.f32 %v1905, %v1971
  %v1987 = vadd.f32 %v1906, %v1974
  %v1988 = vadd.f32 %v1907, %v1976
  %v1989 = vadd.f32 %v1908, %v1979
  %v1990 = vadd.f32 %v1909, %v1981
  %s1991 = scalar_lea.vmem %s7, 256
  %v1992 = vld [vmem:[%s1991] sm:$0xf]
  %v1993 = vld [vmem:[%s1991 + $0x4] sm:$0xf]
  %v1994 = vld [vmem:[%s1991 + $0x8] sm:$0xf]
  %v1995 = vld [vmem:[%s1991 + $0xc] sm:$0xf]
  %v1996 = vld [vmem:[%s1991 + $0x10] sm:$0xf]
  %v1997 = vld [vmem:[%s1991 + $0x14] sm:$0xf]
  %v1998 = vld [vmem:[%s1991 + $0x18] sm:$0xf]
  %v1999 = vld [vmem:[%s1991 + $0x1c] sm:$0xf]
  %v2008 = vunpack.c.l.b16 %v1992
  %v2009 = vunpack.c.l.b16 %v1993
  %v2010 = vunpack.c.l.b16 %v1994
  %v2011 = vunpack.c.l.b16 %v1995
  %v2012 = vunpack.c.l.b16 %v1996
  %v2013 = vunpack.c.l.b16 %v1997
  %v2014 = vunpack.c.l.b16 %v1998
  %v2015 = vunpack.c.l.b16 %v1999
  %v2016 = vpack.c.b16 %v2009, %v2008
  %v2017 = vpack.c.b16 %v2011, %v2010
  %v2018 = vpack.c.b16 %v2013, %v2012
  %v2019 = vpack.c.b16 %v2015, %v2014
  %v2020 = vunpack.c.h.b16 %v1354
  %v2021 = vunpack.c.h.b16 %v1355
  %v2022 = vpack.c.b16 %v2021, %v2020
  %v2025 = vsel %vm1401, %v2016, 0
  %v2028 = vsel %vm1401, %v2017, 0
  %v2031 = vsel %vm1401, %v2018, 0
  %v2034 = vsel %vm1401, %v2019, 0
  %2036 = vmatpush.bf16.msra.mxu0 0
  %2037 = vmatpush.bf16.msra.mxu0 0
  %2038 = vmatpush.bf16.msra.mxu0 0
  %2039 = vmatpush.bf16.msra.mxu0 0
  %2040 = vmatpush.bf16.msra.mxu0 0
  %2041 = vmatpush.bf16.msra.mxu0 0
  %2042 = vmatpush.bf16.msra.mxu0 0
  %2043 = vmatpush.bf16.msra.mxu0 %v2022
  %2044 = vmatmul.bf16.gmra.mxu0 %v2025
  %v2045 = vpop.f32.mrf.mxu0
  %v2046 = vadd.f32 0.0, %v2045
  %v2047 = vpop.f32.mrf.mxu0
  %v2048 = vadd.f32 0.0, %v2047
  %2049 = vmatmul.bf16.gmra.mxu0 %v2028
  %v2050 = vpop.f32.mrf.mxu0
  %v2051 = vadd.f32 0.0, %v2050
  %v2052 = vpop.f32.mrf.mxu0
  %v2053 = vadd.f32 0.0, %v2052
  %2054 = vmatmul.bf16.gmra.mxu0 %v2031
  %v2055 = vpop.f32.mrf.mxu0
  %v2056 = vadd.f32 0.0, %v2055
  %v2057 = vpop.f32.mrf.mxu0
  %v2058 = vadd.f32 0.0, %v2057
  %2059 = vmatmul.bf16.gmra.mxu0 %v2034
  %v2060 = vpop.f32.mrf.mxu0
  %v2061 = vadd.f32 0.0, %v2060
  %v2062 = vpop.f32.mrf.mxu0
  %v2063 = vadd.f32 0.0, %v2062
  %2064 = vdwg.mxu0
  %v2065 = vadd.f32 %v1983, %v2046
  %v2066 = vadd.f32 %v1984, %v2048
  %v2067 = vadd.f32 %v1985, %v2051
  %v2068 = vadd.f32 %v1986, %v2053
  %v2069 = vadd.f32 %v1987, %v2056
  %v2070 = vadd.f32 %v1988, %v2058
  %v2071 = vadd.f32 %v1989, %v2061
  %v2072 = vadd.f32 %v1990, %v2063
  %v2073 = vpack.c.bf16 %v2066, %v2065
  %v2074 = vpack.c.bf16 %v2068, %v2067
  %v2075 = vpack.c.bf16 %v2070, %v2069
  %v2076 = vpack.c.bf16 %v2072, %v2071
  %v2077 = vld [vmem:[%s3] sm:$0xff]
  %v2078 = vld [vmem:[%s3 + $0x8] sm:$0xff]
  %v2081 = vunpack.c.l.b16 %v2077
  %v2082 = vunpack.c.h.b16 %v2077
  %v2083 = vunpack.c.l.b16 %v2078
  %v2084 = vunpack.c.h.b16 %v2078
  %v2085 = vpack.c.b16 %v2083, %v2081
  %v2086 = vpack.c.b16 %v2084, %v2082
  %v2090 = vsel %vm1401, %v2073, 0
  %v2093 = vsel %vm1401, %v2074, 0
  %v2096 = vsel %vm1401, %v2075, 0
  %v2099 = vsel %vm1401, %v2076, 0
  %2101 = vmatpush.bf16.msra.mxu0 0
  %2102 = vmatpush.bf16.msra.mxu0 0
  %2103 = vmatpush.bf16.msra.mxu0 0
  %2104 = vmatpush.bf16.msra.mxu0 0
  %2105 = vmatpush.bf16.msra.mxu0 0
  %2106 = vmatpush.bf16.msra.mxu0 0
  %2107 = vmatpush.bf16.msra.mxu0 0
  %2108 = vmatpush.bf16.msra.mxu0 %v2085
  %2109 = vmatmul.bf16.gmra.mxu0 %v2090
  %v2110 = vpop.f32.mrf.mxu0
  %v2111 = vadd.f32 0.0, %v2110
  %v2112 = vpop.f32.mrf.mxu0
  %v2113 = vadd.f32 0.0, %v2112
  %2114 = vmatmul.bf16.gmra.mxu0 %v2093
  %v2115 = vpop.f32.mrf.mxu0
  %v2116 = vadd.f32 0.0, %v2115
  %v2117 = vpop.f32.mrf.mxu0
  %v2118 = vadd.f32 0.0, %v2117
  %2119 = vmatmul.bf16.gmra.mxu0 %v2096
  %v2120 = vpop.f32.mrf.mxu0
  %v2121 = vadd.f32 0.0, %v2120
  %v2122 = vpop.f32.mrf.mxu0
  %v2123 = vadd.f32 0.0, %v2122
  %2124 = vmatmul.bf16.gmra.mxu0 %v2099
  %v2125 = vpop.f32.mrf.mxu0
  %v2126 = vadd.f32 0.0, %v2125
  %v2127 = vpop.f32.mrf.mxu0
  %v2128 = vadd.f32 0.0, %v2127
  %2129 = vdwg.mxu0
  %2130 = vmatpush.bf16.msra.mxu0 0
  %2131 = vmatpush.bf16.msra.mxu0 0
  %2132 = vmatpush.bf16.msra.mxu0 0
  %2133 = vmatpush.bf16.msra.mxu0 0
  %2134 = vmatpush.bf16.msra.mxu0 0
  %2135 = vmatpush.bf16.msra.mxu0 0
  %2136 = vmatpush.bf16.msra.mxu0 0
  %2137 = vmatpush.bf16.msra.mxu0 %v2086
  %2138 = vmatmul.bf16.gmra.mxu0 %v2090
  %v2139 = vpop.f32.mrf.mxu0
  %v2140 = vadd.f32 0.0, %v2139
  %v2141 = vpop.f32.mrf.mxu0
  %v2142 = vadd.f32 0.0, %v2141
  %2143 = vmatmul.bf16.gmra.mxu0 %v2093
  %v2144 = vpop.f32.mrf.mxu0
  %v2145 = vadd.f32 0.0, %v2144
  %v2146 = vpop.f32.mrf.mxu0
  %v2147 = vadd.f32 0.0, %v2146
  %2148 = vmatmul.bf16.gmra.mxu0 %v2096
  %v2149 = vpop.f32.mrf.mxu0
  %v2150 = vadd.f32 0.0, %v2149
  %v2151 = vpop.f32.mrf.mxu0
  %v2152 = vadd.f32 0.0, %v2151
  %2153 = vmatmul.bf16.gmra.mxu0 %v2099
  %v2154 = vpop.f32.mrf.mxu0
  %v2155 = vadd.f32 0.0, %v2154
  %v2156 = vpop.f32.mrf.mxu0
  %v2157 = vadd.f32 0.0, %v2156
  %2158 = vdwg.mxu0
  %v2159 = vpack.c.bf16 %v2140, %v2111
  %v2160 = vpack.c.bf16 %v2142, %v2113
  %v2161 = vpack.c.bf16 %v2145, %v2116
  %v2162 = vpack.c.bf16 %v2147, %v2118
  %v2163 = vpack.c.bf16 %v2150, %v2121
  %v2164 = vpack.c.bf16 %v2152, %v2123
  %v2165 = vpack.c.bf16 %v2155, %v2126
  %v2166 = vpack.c.bf16 %v2157, %v2128
  %v2167 = vld [vmem:[%s8] sm:$0xf]
  %v2168 = vld [vmem:[%s8 + $0x4] sm:$0xf]
  %v2169 = vld [vmem:[%s8 + $0x8] sm:$0xf]
  %v2170 = vld [vmem:[%s8 + $0xc] sm:$0xf]
  %v2171 = vld [vmem:[%s8 + $0x10] sm:$0xf]
  %v2172 = vld [vmem:[%s8 + $0x14] sm:$0xf]
  %v2173 = vld [vmem:[%s8 + $0x18] sm:$0xf]
  %v2174 = vld [vmem:[%s8 + $0x1c] sm:$0xf]
  %v2175 = vld [vmem:[%s8 + $0x20] sm:$0xf]
  %v2176 = vld [vmem:[%s8 + $0x24] sm:$0xf]
  %v2177 = vld [vmem:[%s8 + $0x28] sm:$0xf]
  %v2178 = vld [vmem:[%s8 + $0x2c] sm:$0xf]
  %v2179 = vld [vmem:[%s8 + $0x30] sm:$0xf]
  %v2180 = vld [vmem:[%s8 + $0x34] sm:$0xf]
  %v2181 = vld [vmem:[%s8 + $0x38] sm:$0xf]
  %v2182 = vld [vmem:[%s8 + $0x3c] sm:$0xf]
  %s2183 = scalar_lea.vmem %s8, 64
  %v2184 = vld [vmem:[%s2183] sm:$0xf]
  %v2185 = vld [vmem:[%s2183 + $0x4] sm:$0xf]
  %v2186 = vld [vmem:[%s2183 + $0x8] sm:$0xf]
  %v2187 = vld [vmem:[%s2183 + $0xc] sm:$0xf]
  %v2188 = vld [vmem:[%s2183 + $0x10] sm:$0xf]
  %v2189 = vld [vmem:[%s2183 + $0x14] sm:$0xf]
  %v2190 = vld [vmem:[%s2183 + $0x18] sm:$0xf]
  %v2191 = vld [vmem:[%s2183 + $0x1c] sm:$0xf]
  %v2192 = vld [vmem:[%s2183 + $0x20] sm:$0xf]
  %v2193 = vld [vmem:[%s2183 + $0x24] sm:$0xf]
  %v2194 = vld [vmem:[%s2183 + $0x28] sm:$0xf]
  %v2195 = vld [vmem:[%s2183 + $0x2c] sm:$0xf]
  %v2196 = vld [vmem:[%s2183 + $0x30] sm:$0xf]
  %v2197 = vld [vmem:[%s2183 + $0x34] sm:$0xf]
  %v2198 = vld [vmem:[%s2183 + $0x38] sm:$0xf]
  %v2199 = vld [vmem:[%s2183 + $0x3c] sm:$0xf]
  %v2216 = vunpack.c.l.b16 %v2184
  %v2217 = vunpack.c.l.b16 %v2185
  %v2218 = vunpack.c.l.b16 %v2186
  %v2219 = vunpack.c.l.b16 %v2187
  %v2220 = vunpack.c.l.b16 %v2188
  %v2221 = vunpack.c.l.b16 %v2189
  %v2222 = vunpack.c.l.b16 %v2190
  %v2223 = vunpack.c.l.b16 %v2191
  %v2224 = vunpack.c.l.b16 %v2192
  %v2225 = vunpack.c.l.b16 %v2193
  %v2226 = vunpack.c.l.b16 %v2194
  %v2227 = vunpack.c.l.b16 %v2195
  %v2228 = vunpack.c.l.b16 %v2196
  %v2229 = vunpack.c.l.b16 %v2197
  %v2230 = vunpack.c.l.b16 %v2198
  %v2231 = vunpack.c.l.b16 %v2199
  %v2232 = vpack.c.b16 %v2217, %v2216
  %v2233 = vpack.c.b16 %v2219, %v2218
  %v2234 = vpack.c.b16 %v2221, %v2220
  %v2235 = vpack.c.b16 %v2223, %v2222
  %v2236 = vpack.c.b16 %v2225, %v2224
  %v2237 = vpack.c.b16 %v2227, %v2226
  %v2238 = vpack.c.b16 %v2229, %v2228
  %v2239 = vpack.c.b16 %v2231, %v2230
  %v2248 = vunpack.c.l.b16 %v2159
  %v2249 = vunpack.c.l.b16 %v2160
  %v2250 = vunpack.c.l.b16 %v2161
  %v2251 = vunpack.c.l.b16 %v2162
  %v2252 = vunpack.c.l.b16 %v2163
  %v2253 = vunpack.c.l.b16 %v2164
  %v2254 = vunpack.c.l.b16 %v2165
  %v2255 = vunpack.c.l.b16 %v2166
  %v2256 = vpack.c.b16 %v2249, %v2248
  %v2257 = vpack.c.b16 %v2251, %v2250
  %v2258 = vpack.c.b16 %v2253, %v2252
  %v2259 = vpack.c.b16 %v2255, %v2254
  %2260 = vrot.lane.b32.xlu0 %v2256, 112
  %v2261 = vpop.permute.xlu0 %2260
  %2262 = vrot.lane.b32.xlu0 %v2257, 112
  %v2263 = vpop.permute.xlu0 %2262
  %2264 = vrot.lane.b32.xlu0 %v2258, 112
  %v2265 = vpop.permute.xlu0 %2264
  %2266 = vrot.lane.b32.xlu0 %v2259, 112
  %v2267 = vpop.permute.xlu0 %2266
  %v2273 = vsel %vm925, %v2232, 0
  %v2276 = vsel %vm925, %v2233, 0
  %v2279 = vsel %vm925, %v2234, 0
  %v2282 = vsel %vm925, %v2235, 0
  %v2285 = vsel %vm925, %v2236, 0
  %v2288 = vsel %vm925, %v2237, 0
  %v2291 = vsel %vm925, %v2238, 0
  %v2294 = vsel %vm925, %v2239, 0
  %2296 = vmatpush.bf16.msra.mxu0 0
  %2297 = vmatpush.bf16.msra.mxu0 0
  %2298 = vmatpush.bf16.msra.mxu0 0
  %2299 = vmatpush.bf16.msra.mxu0 0
  %2300 = vmatpush.bf16.msra.mxu0 %v2267
  %2301 = vmatpush.bf16.msra.mxu0 %v2265
  %2302 = vmatpush.bf16.msra.mxu0 %v2263
  %2303 = vmatpush.bf16.msra.mxu0 %v2261
  %2304 = vmatmul.bf16.gmra.mxu0 %v2273
  %v2305 = vpop.f32.mrf.mxu0
  %v2306 = vadd.f32 0.0, %v2305
  %v2307 = vpop.f32.mrf.mxu0
  %v2308 = vadd.f32 0.0, %v2307
  %2309 = vmatmul.bf16.gmra.mxu0 %v2276
  %v2310 = vpop.f32.mrf.mxu0
  %v2311 = vadd.f32 0.0, %v2310
  %v2312 = vpop.f32.mrf.mxu0
  %v2313 = vadd.f32 0.0, %v2312
  %2314 = vmatmul.bf16.gmra.mxu0 %v2279
  %v2315 = vpop.f32.mrf.mxu0
  %v2316 = vadd.f32 0.0, %v2315
  %v2317 = vpop.f32.mrf.mxu0
  %v2318 = vadd.f32 0.0, %v2317
  %2319 = vmatmul.bf16.gmra.mxu0 %v2282
  %v2320 = vpop.f32.mrf.mxu0
  %v2321 = vadd.f32 0.0, %v2320
  %v2322 = vpop.f32.mrf.mxu0
  %v2323 = vadd.f32 0.0, %v2322
  %2324 = vmatmul.bf16.gmra.mxu0 %v2285
  %v2325 = vpop.f32.mrf.mxu0
  %v2326 = vadd.f32 0.0, %v2325
  %v2327 = vpop.f32.mrf.mxu0
  %v2328 = vadd.f32 0.0, %v2327
  %2329 = vmatmul.bf16.gmra.mxu0 %v2288
  %v2330 = vpop.f32.mrf.mxu0
  %v2331 = vadd.f32 0.0, %v2330
  %v2332 = vpop.f32.mrf.mxu0
  %v2333 = vadd.f32 0.0, %v2332
  %2334 = vmatmul.bf16.gmra.mxu0 %v2291
  %v2335 = vpop.f32.mrf.mxu0
  %v2336 = vadd.f32 0.0, %v2335
  %v2337 = vpop.f32.mrf.mxu0
  %v2338 = vadd.f32 0.0, %v2337
  %2339 = vmatmul.bf16.gmra.mxu0 %v2294
  %v2340 = vpop.f32.mrf.mxu0
  %v2341 = vadd.f32 0.0, %v2340
  %v2342 = vpop.f32.mrf.mxu0
  %v2343 = vadd.f32 0.0, %v2342
  %2344 = vdwg.mxu0
  %v2361 = vunpack.c.l.b16 %v2167
  %v2362 = vunpack.c.l.b16 %v2168
  %v2363 = vunpack.c.l.b16 %v2169
  %v2364 = vunpack.c.l.b16 %v2170
  %v2365 = vunpack.c.l.b16 %v2171
  %v2366 = vunpack.c.l.b16 %v2172
  %v2367 = vunpack.c.l.b16 %v2173
  %v2368 = vunpack.c.l.b16 %v2174
  %v2369 = vunpack.c.l.b16 %v2175
  %v2370 = vunpack.c.l.b16 %v2176
  %v2371 = vunpack.c.l.b16 %v2177
  %v2372 = vunpack.c.l.b16 %v2178
  %v2373 = vunpack.c.l.b16 %v2179
  %v2374 = vunpack.c.l.b16 %v2180
  %v2375 = vunpack.c.l.b16 %v2181
  %v2376 = vunpack.c.l.b16 %v2182
  %v2377 = vpack.c.b16 %v2362, %v2361
  %v2378 = vpack.c.b16 %v2364, %v2363
  %v2379 = vpack.c.b16 %v2366, %v2365
  %v2380 = vpack.c.b16 %v2368, %v2367
  %v2381 = vpack.c.b16 %v2370, %v2369
  %v2382 = vpack.c.b16 %v2372, %v2371
  %v2383 = vpack.c.b16 %v2374, %v2373
  %v2384 = vpack.c.b16 %v2376, %v2375
  %v2390 = vsel %vm925, %v2377, 0
  %v2393 = vsel %vm925, %v2378, 0
  %v2396 = vsel %vm925, %v2379, 0
  %v2399 = vsel %vm925, %v2380, 0
  %v2402 = vsel %vm925, %v2381, 0
  %v2405 = vsel %vm925, %v2382, 0
  %v2408 = vsel %vm925, %v2383, 0
  %v2411 = vsel %vm925, %v2384, 0
  %2413 = vmatpush.bf16.msra.mxu0 0
  %2414 = vmatpush.bf16.msra.mxu0 0
  %2415 = vmatpush.bf16.msra.mxu0 0
  %2416 = vmatpush.bf16.msra.mxu0 0
  %2417 = vmatpush.bf16.msra.mxu0 %v2259
  %2418 = vmatpush.bf16.msra.mxu0 %v2258
  %2419 = vmatpush.bf16.msra.mxu0 %v2257
  %2420 = vmatpush.bf16.msra.mxu0 %v2256
  %2421 = vmatmul.bf16.gmra.mxu0 %v2390
  %v2422 = vpop.f32.mrf.mxu0
  %v2423 = vadd.f32 %v2306, %v2422
  %v2424 = vpop.f32.mrf.mxu0
  %v2425 = vadd.f32 %v2308, %v2424
  %2426 = vmatmul.bf16.gmra.mxu0 %v2393
  %v2427 = vpop.f32.mrf.mxu0
  %v2428 = vadd.f32 %v2311, %v2427
  %v2429 = vpop.f32.mrf.mxu0
  %v2430 = vadd.f32 %v2313, %v2429
  %2431 = vmatmul.bf16.gmra.mxu0 %v2396
  %v2432 = vpop.f32.mrf.mxu0
  %v2433 = vadd.f32 %v2316, %v2432
  %v2434 = vpop.f32.mrf.mxu0
  %v2435 = vadd.f32 %v2318, %v2434
  %2436 = vmatmul.bf16.gmra.mxu0 %v2399
  %v2437 = vpop.f32.mrf.mxu0
  %v2438 = vadd.f32 %v2321, %v2437
  %v2439 = vpop.f32.mrf.mxu0
  %v2440 = vadd.f32 %v2323, %v2439
  %2441 = vmatmul.bf16.gmra.mxu0 %v2402
  %v2442 = vpop.f32.mrf.mxu0
  %v2443 = vadd.f32 %v2326, %v2442
  %v2444 = vpop.f32.mrf.mxu0
  %v2445 = vadd.f32 %v2328, %v2444
  %2446 = vmatmul.bf16.gmra.mxu0 %v2405
  %v2447 = vpop.f32.mrf.mxu0
  %v2448 = vadd.f32 %v2331, %v2447
  %v2449 = vpop.f32.mrf.mxu0
  %v2450 = vadd.f32 %v2333, %v2449
  %2451 = vmatmul.bf16.gmra.mxu0 %v2408
  %v2452 = vpop.f32.mrf.mxu0
  %v2453 = vadd.f32 %v2336, %v2452
  %v2454 = vpop.f32.mrf.mxu0
  %v2455 = vadd.f32 %v2338, %v2454
  %2456 = vmatmul.bf16.gmra.mxu0 %v2411
  %v2457 = vpop.f32.mrf.mxu0
  %v2458 = vadd.f32 %v2341, %v2457
  %v2459 = vpop.f32.mrf.mxu0
  %v2460 = vadd.f32 %v2343, %v2459
  %2461 = vdwg.mxu0
  %s2462 = scalar_lea.vmem %s8, 128
  %v2463 = vld [vmem:[%s2462] sm:$0xf]
  %v2464 = vld [vmem:[%s2462 + $0x4] sm:$0xf]
  %v2465 = vld [vmem:[%s2462 + $0x8] sm:$0xf]
  %v2466 = vld [vmem:[%s2462 + $0xc] sm:$0xf]
  %v2467 = vld [vmem:[%s2462 + $0x10] sm:$0xf]
  %v2468 = vld [vmem:[%s2462 + $0x14] sm:$0xf]
  %v2469 = vld [vmem:[%s2462 + $0x18] sm:$0xf]
  %v2470 = vld [vmem:[%s2462 + $0x1c] sm:$0xf]
  %v2471 = vld [vmem:[%s2462 + $0x20] sm:$0xf]
  %v2472 = vld [vmem:[%s2462 + $0x24] sm:$0xf]
  %v2473 = vld [vmem:[%s2462 + $0x28] sm:$0xf]
  %v2474 = vld [vmem:[%s2462 + $0x2c] sm:$0xf]
  %v2475 = vld [vmem:[%s2462 + $0x30] sm:$0xf]
  %v2476 = vld [vmem:[%s2462 + $0x34] sm:$0xf]
  %v2477 = vld [vmem:[%s2462 + $0x38] sm:$0xf]
  %v2478 = vld [vmem:[%s2462 + $0x3c] sm:$0xf]
  %v2495 = vunpack.c.l.b16 %v2463
  %v2496 = vunpack.c.l.b16 %v2464
  %v2497 = vunpack.c.l.b16 %v2465
  %v2498 = vunpack.c.l.b16 %v2466
  %v2499 = vunpack.c.l.b16 %v2467
  %v2500 = vunpack.c.l.b16 %v2468
  %v2501 = vunpack.c.l.b16 %v2469
  %v2502 = vunpack.c.l.b16 %v2470
  %v2503 = vunpack.c.l.b16 %v2471
  %v2504 = vunpack.c.l.b16 %v2472
  %v2505 = vunpack.c.l.b16 %v2473
  %v2506 = vunpack.c.l.b16 %v2474
  %v2507 = vunpack.c.l.b16 %v2475
  %v2508 = vunpack.c.l.b16 %v2476
  %v2509 = vunpack.c.l.b16 %v2477
  %v2510 = vunpack.c.l.b16 %v2478
  %v2511 = vpack.c.b16 %v2496, %v2495
  %v2512 = vpack.c.b16 %v2498, %v2497
  %v2513 = vpack.c.b16 %v2500, %v2499
  %v2514 = vpack.c.b16 %v2502, %v2501
  %v2515 = vpack.c.b16 %v2504, %v2503
  %v2516 = vpack.c.b16 %v2506, %v2505
  %v2517 = vpack.c.b16 %v2508, %v2507
  %v2518 = vpack.c.b16 %v2510, %v2509
  %2519 = vrot.lane.b32.xlu0 %v2256, 96
  %v2520 = vpop.permute.xlu0 %2519
  %2521 = vrot.lane.b32.xlu0 %v2257, 96
  %v2522 = vpop.permute.xlu0 %2521
  %2523 = vrot.lane.b32.xlu0 %v2258, 96
  %v2524 = vpop.permute.xlu0 %2523
  %2525 = vrot.lane.b32.xlu0 %v2259, 96
  %v2526 = vpop.permute.xlu0 %2525
  %v2532 = vsel %vm925, %v2511, 0
  %v2535 = vsel %vm925, %v2512, 0
  %v2538 = vsel %vm925, %v2513, 0
  %v2541 = vsel %vm925, %v2514, 0
  %v2544 = vsel %vm925, %v2515, 0
  %v2547 = vsel %vm925, %v2516, 0
  %v2550 = vsel %vm925, %v2517, 0
  %v2553 = vsel %vm925, %v2518, 0
  %2555 = vmatpush.bf16.msra.mxu0 0
  %2556 = vmatpush.bf16.msra.mxu0 0
  %2557 = vmatpush.bf16.msra.mxu0 0
  %2558 = vmatpush.bf16.msra.mxu0 0
  %2559 = vmatpush.bf16.msra.mxu0 %v2526
  %2560 = vmatpush.bf16.msra.mxu0 %v2524
  %2561 = vmatpush.bf16.msra.mxu0 %v2522
  %2562 = vmatpush.bf16.msra.mxu0 %v2520
  %2563 = vmatmul.bf16.gmra.mxu0 %v2532
  %v2564 = vpop.f32.mrf.mxu0
  %v2565 = vadd.f32 0.0, %v2564
  %v2566 = vpop.f32.mrf.mxu0
  %v2567 = vadd.f32 0.0, %v2566
  %2568 = vmatmul.bf16.gmra.mxu0 %v2535
  %v2569 = vpop.f32.mrf.mxu0
  %v2570 = vadd.f32 0.0, %v2569
  %v2571 = vpop.f32.mrf.mxu0
  %v2572 = vadd.f32 0.0, %v2571
  %2573 = vmatmul.bf16.gmra.mxu0 %v2538
  %v2574 = vpop.f32.mrf.mxu0
  %v2575 = vadd.f32 0.0, %v2574
  %v2576 = vpop.f32.mrf.mxu0
  %v2577 = vadd.f32 0.0, %v2576
  %2578 = vmatmul.bf16.gmra.mxu0 %v2541
  %v2579 = vpop.f32.mrf.mxu0
  %v2580 = vadd.f32 0.0, %v2579
  %v2581 = vpop.f32.mrf.mxu0
  %v2582 = vadd.f32 0.0, %v2581
  %2583 = vmatmul.bf16.gmra.mxu0 %v2544
  %v2584 = vpop.f32.mrf.mxu0
  %v2585 = vadd.f32 0.0, %v2584
  %v2586 = vpop.f32.mrf.mxu0
  %v2587 = vadd.f32 0.0, %v2586
  %2588 = vmatmul.bf16.gmra.mxu0 %v2547
  %v2589 = vpop.f32.mrf.mxu0
  %v2590 = vadd.f32 0.0, %v2589
  %v2591 = vpop.f32.mrf.mxu0
  %v2592 = vadd.f32 0.0, %v2591
  %2593 = vmatmul.bf16.gmra.mxu0 %v2550
  %v2594 = vpop.f32.mrf.mxu0
  %v2595 = vadd.f32 0.0, %v2594
  %v2596 = vpop.f32.mrf.mxu0
  %v2597 = vadd.f32 0.0, %v2596
  %2598 = vmatmul.bf16.gmra.mxu0 %v2553
  %v2599 = vpop.f32.mrf.mxu0
  %v2600 = vadd.f32 0.0, %v2599
  %v2601 = vpop.f32.mrf.mxu0
  %v2602 = vadd.f32 0.0, %v2601
  %2603 = vdwg.mxu0
  %v2604 = vadd.f32 %v2423, %v2565
  %v2605 = vadd.f32 %v2425, %v2567
  %v2606 = vadd.f32 %v2428, %v2570
  %v2607 = vadd.f32 %v2430, %v2572
  %v2608 = vadd.f32 %v2433, %v2575
  %v2609 = vadd.f32 %v2435, %v2577
  %v2610 = vadd.f32 %v2438, %v2580
  %v2611 = vadd.f32 %v2440, %v2582
  %v2612 = vadd.f32 %v2443, %v2585
  %v2613 = vadd.f32 %v2445, %v2587
  %v2614 = vadd.f32 %v2448, %v2590
  %v2615 = vadd.f32 %v2450, %v2592
  %v2616 = vadd.f32 %v2453, %v2595
  %v2617 = vadd.f32 %v2455, %v2597
  %v2618 = vadd.f32 %v2458, %v2600
  %v2619 = vadd.f32 %v2460, %v2602
  %s2620 = scalar_lea.vmem %s8, 192
  %v2621 = vld [vmem:[%s2620] sm:$0xf]
  %v2622 = vld [vmem:[%s2620 + $0x4] sm:$0xf]
  %v2623 = vld [vmem:[%s2620 + $0x8] sm:$0xf]
  %v2624 = vld [vmem:[%s2620 + $0xc] sm:$0xf]
  %v2625 = vld [vmem:[%s2620 + $0x10] sm:$0xf]
  %v2626 = vld [vmem:[%s2620 + $0x14] sm:$0xf]
  %v2627 = vld [vmem:[%s2620 + $0x18] sm:$0xf]
  %v2628 = vld [vmem:[%s2620 + $0x1c] sm:$0xf]
  %v2629 = vld [vmem:[%s2620 + $0x20] sm:$0xf]
  %v2630 = vld [vmem:[%s2620 + $0x24] sm:$0xf]
  %v2631 = vld [vmem:[%s2620 + $0x28] sm:$0xf]
  %v2632 = vld [vmem:[%s2620 + $0x2c] sm:$0xf]
  %v2633 = vld [vmem:[%s2620 + $0x30] sm:$0xf]
  %v2634 = vld [vmem:[%s2620 + $0x34] sm:$0xf]
  %v2635 = vld [vmem:[%s2620 + $0x38] sm:$0xf]
  %v2636 = vld [vmem:[%s2620 + $0x3c] sm:$0xf]
  %v2653 = vunpack.c.l.b16 %v2621
  %v2654 = vunpack.c.l.b16 %v2622
  %v2655 = vunpack.c.l.b16 %v2623
  %v2656 = vunpack.c.l.b16 %v2624
  %v2657 = vunpack.c.l.b16 %v2625
  %v2658 = vunpack.c.l.b16 %v2626
  %v2659 = vunpack.c.l.b16 %v2627
  %v2660 = vunpack.c.l.b16 %v2628
  %v2661 = vunpack.c.l.b16 %v2629
  %v2662 = vunpack.c.l.b16 %v2630
  %v2663 = vunpack.c.l.b16 %v2631
  %v2664 = vunpack.c.l.b16 %v2632
  %v2665 = vunpack.c.l.b16 %v2633
  %v2666 = vunpack.c.l.b16 %v2634
  %v2667 = vunpack.c.l.b16 %v2635
  %v2668 = vunpack.c.l.b16 %v2636
  %v2669 = vpack.c.b16 %v2654, %v2653
  %v2670 = vpack.c.b16 %v2656, %v2655
  %v2671 = vpack.c.b16 %v2658, %v2657
  %v2672 = vpack.c.b16 %v2660, %v2659
  %v2673 = vpack.c.b16 %v2662, %v2661
  %v2674 = vpack.c.b16 %v2664, %v2663
  %v2675 = vpack.c.b16 %v2666, %v2665
  %v2676 = vpack.c.b16 %v2668, %v2667
  %2677 = vrot.lane.b32.xlu0 %v2256, 80
  %v2678 = vpop.permute.xlu0 %2677
  %2679 = vrot.lane.b32.xlu0 %v2257, 80
  %v2680 = vpop.permute.xlu0 %2679
  %2681 = vrot.lane.b32.xlu0 %v2258, 80
  %v2682 = vpop.permute.xlu0 %2681
  %2683 = vrot.lane.b32.xlu0 %v2259, 80
  %v2684 = vpop.permute.xlu0 %2683
  %v2690 = vsel %vm925, %v2669, 0
  %v2693 = vsel %vm925, %v2670, 0
  %v2696 = vsel %vm925, %v2671, 0
  %v2699 = vsel %vm925, %v2672, 0
  %v2702 = vsel %vm925, %v2673, 0
  %v2705 = vsel %vm925, %v2674, 0
  %v2708 = vsel %vm925, %v2675, 0
  %v2711 = vsel %vm925, %v2676, 0
  %2713 = vmatpush.bf16.msra.mxu0 0
  %2714 = vmatpush.bf16.msra.mxu0 0
  %2715 = vmatpush.bf16.msra.mxu0 0
  %2716 = vmatpush.bf16.msra.mxu0 0
  %2717 = vmatpush.bf16.msra.mxu0 %v2684
  %2718 = vmatpush.bf16.msra.mxu0 %v2682
  %2719 = vmatpush.bf16.msra.mxu0 %v2680
  %2720 = vmatpush.bf16.msra.mxu0 %v2678
  %2721 = vmatmul.bf16.gmra.mxu0 %v2690
  %v2722 = vpop.f32.mrf.mxu0
  %v2723 = vadd.f32 0.0, %v2722
  %v2724 = vpop.f32.mrf.mxu0
  %v2725 = vadd.f32 0.0, %v2724
  %2726 = vmatmul.bf16.gmra.mxu0 %v2693
  %v2727 = vpop.f32.mrf.mxu0
  %v2728 = vadd.f32 0.0, %v2727
  %v2729 = vpop.f32.mrf.mxu0
  %v2730 = vadd.f32 0.0, %v2729
  %2731 = vmatmul.bf16.gmra.mxu0 %v2696
  %v2732 = vpop.f32.mrf.mxu0
  %v2733 = vadd.f32 0.0, %v2732
  %v2734 = vpop.f32.mrf.mxu0
  %v2735 = vadd.f32 0.0, %v2734
  %2736 = vmatmul.bf16.gmra.mxu0 %v2699
  %v2737 = vpop.f32.mrf.mxu0
  %v2738 = vadd.f32 0.0, %v2737
  %v2739 = vpop.f32.mrf.mxu0
  %v2740 = vadd.f32 0.0, %v2739
  %2741 = vmatmul.bf16.gmra.mxu0 %v2702
  %v2742 = vpop.f32.mrf.mxu0
  %v2743 = vadd.f32 0.0, %v2742
  %v2744 = vpop.f32.mrf.mxu0
  %v2745 = vadd.f32 0.0, %v2744
  %2746 = vmatmul.bf16.gmra.mxu0 %v2705
  %v2747 = vpop.f32.mrf.mxu0
  %v2748 = vadd.f32 0.0, %v2747
  %v2749 = vpop.f32.mrf.mxu0
  %v2750 = vadd.f32 0.0, %v2749
  %2751 = vmatmul.bf16.gmra.mxu0 %v2708
  %v2752 = vpop.f32.mrf.mxu0
  %v2753 = vadd.f32 0.0, %v2752
  %v2754 = vpop.f32.mrf.mxu0
  %v2755 = vadd.f32 0.0, %v2754
  %2756 = vmatmul.bf16.gmra.mxu0 %v2711
  %v2757 = vpop.f32.mrf.mxu0
  %v2758 = vadd.f32 0.0, %v2757
  %v2759 = vpop.f32.mrf.mxu0
  %v2760 = vadd.f32 0.0, %v2759
  %2761 = vdwg.mxu0
  %v2762 = vadd.f32 %v2604, %v2723
  %v2763 = vadd.f32 %v2605, %v2725
  %v2764 = vadd.f32 %v2606, %v2728
  %v2765 = vadd.f32 %v2607, %v2730
  %v2766 = vadd.f32 %v2608, %v2733
  %v2767 = vadd.f32 %v2609, %v2735
  %v2768 = vadd.f32 %v2610, %v2738
  %v2769 = vadd.f32 %v2611, %v2740
  %v2770 = vadd.f32 %v2612, %v2743
  %v2771 = vadd.f32 %v2613, %v2745
  %v2772 = vadd.f32 %v2614, %v2748
  %v2773 = vadd.f32 %v2615, %v2750
  %v2774 = vadd.f32 %v2616, %v2753
  %v2775 = vadd.f32 %v2617, %v2755
  %v2776 = vadd.f32 %v2618, %v2758
  %v2777 = vadd.f32 %v2619, %v2760
  %s2778 = scalar_lea.vmem %s8, 256
  %v2779 = vld [vmem:[%s2778] sm:$0xf]
  %v2780 = vld [vmem:[%s2778 + $0x4] sm:$0xf]
  %v2781 = vld [vmem:[%s2778 + $0x8] sm:$0xf]
  %v2782 = vld [vmem:[%s2778 + $0xc] sm:$0xf]
  %v2783 = vld [vmem:[%s2778 + $0x10] sm:$0xf]
  %v2784 = vld [vmem:[%s2778 + $0x14] sm:$0xf]
  %v2785 = vld [vmem:[%s2778 + $0x18] sm:$0xf]
  %v2786 = vld [vmem:[%s2778 + $0x1c] sm:$0xf]
  %v2787 = vld [vmem:[%s2778 + $0x20] sm:$0xf]
  %v2788 = vld [vmem:[%s2778 + $0x24] sm:$0xf]
  %v2789 = vld [vmem:[%s2778 + $0x28] sm:$0xf]
  %v2790 = vld [vmem:[%s2778 + $0x2c] sm:$0xf]
  %v2791 = vld [vmem:[%s2778 + $0x30] sm:$0xf]
  %v2792 = vld [vmem:[%s2778 + $0x34] sm:$0xf]
  %v2793 = vld [vmem:[%s2778 + $0x38] sm:$0xf]
  %v2794 = vld [vmem:[%s2778 + $0x3c] sm:$0xf]
  %v2811 = vunpack.c.l.b16 %v2779
  %v2812 = vunpack.c.l.b16 %v2780
  %v2813 = vunpack.c.l.b16 %v2781
  %v2814 = vunpack.c.l.b16 %v2782
  %v2815 = vunpack.c.l.b16 %v2783
  %v2816 = vunpack.c.l.b16 %v2784
  %v2817 = vunpack.c.l.b16 %v2785
  %v2818 = vunpack.c.l.b16 %v2786
  %v2819 = vunpack.c.l.b16 %v2787
  %v2820 = vunpack.c.l.b16 %v2788
  %v2821 = vunpack.c.l.b16 %v2789
  %v2822 = vunpack.c.l.b16 %v2790
  %v2823 = vunpack.c.l.b16 %v2791
  %v2824 = vunpack.c.l.b16 %v2792
  %v2825 = vunpack.c.l.b16 %v2793
  %v2826 = vunpack.c.l.b16 %v2794
  %v2827 = vpack.c.b16 %v2812, %v2811
  %v2828 = vpack.c.b16 %v2814, %v2813
  %v2829 = vpack.c.b16 %v2816, %v2815
  %v2830 = vpack.c.b16 %v2818, %v2817
  %v2831 = vpack.c.b16 %v2820, %v2819
  %v2832 = vpack.c.b16 %v2822, %v2821
  %v2833 = vpack.c.b16 %v2824, %v2823
  %v2834 = vpack.c.b16 %v2826, %v2825
  %2835 = vrot.lane.b32.xlu0 %v2256, 64
  %v2836 = vpop.permute.xlu0 %2835
  %2837 = vrot.lane.b32.xlu0 %v2257, 64
  %v2838 = vpop.permute.xlu0 %2837
  %2839 = vrot.lane.b32.xlu0 %v2258, 64
  %v2840 = vpop.permute.xlu0 %2839
  %2841 = vrot.lane.b32.xlu0 %v2259, 64
  %v2842 = vpop.permute.xlu0 %2841
  %v2848 = vsel %vm925, %v2827, 0
  %v2851 = vsel %vm925, %v2828, 0
  %v2854 = vsel %vm925, %v2829, 0
  %v2857 = vsel %vm925, %v2830, 0
  %v2860 = vsel %vm925, %v2831, 0
  %v2863 = vsel %vm925, %v2832, 0
  %v2866 = vsel %vm925, %v2833, 0
  %v2869 = vsel %vm925, %v2834, 0
  %2871 = vmatpush.bf16.msra.mxu0 0
  %2872 = vmatpush.bf16.msra.mxu0 0
  %2873 = vmatpush.bf16.msra.mxu0 0
  %2874 = vmatpush.bf16.msra.mxu0 0
  %2875 = vmatpush.bf16.msra.mxu0 %v2842
  %2876 = vmatpush.bf16.msra.mxu0 %v2840
  %2877 = vmatpush.bf16.msra.mxu0 %v2838
  %2878 = vmatpush.bf16.msra.mxu0 %v2836
  %2879 = vmatmul.bf16.gmra.mxu0 %v2848
  %v2880 = vpop.f32.mrf.mxu0
  %v2881 = vadd.f32 0.0, %v2880
  %v2882 = vpop.f32.mrf.mxu0
  %v2883 = vadd.f32 0.0, %v2882
  %2884 = vmatmul.bf16.gmra.mxu0 %v2851
  %v2885 = vpop.f32.mrf.mxu0
  %v2886 = vadd.f32 0.0, %v2885
  %v2887 = vpop.f32.mrf.mxu0
  %v2888 = vadd.f32 0.0, %v2887
  %2889 = vmatmul.bf16.gmra.mxu0 %v2854
  %v2890 = vpop.f32.mrf.mxu0
  %v2891 = vadd.f32 0.0, %v2890
  %v2892 = vpop.f32.mrf.mxu0
  %v2893 = vadd.f32 0.0, %v2892
  %2894 = vmatmul.bf16.gmra.mxu0 %v2857
  %v2895 = vpop.f32.mrf.mxu0
  %v2896 = vadd.f32 0.0, %v2895
  %v2897 = vpop.f32.mrf.mxu0
  %v2898 = vadd.f32 0.0, %v2897
  %2899 = vmatmul.bf16.gmra.mxu0 %v2860
  %v2900 = vpop.f32.mrf.mxu0
  %v2901 = vadd.f32 0.0, %v2900
  %v2902 = vpop.f32.mrf.mxu0
  %v2903 = vadd.f32 0.0, %v2902
  %2904 = vmatmul.bf16.gmra.mxu0 %v2863
  %v2905 = vpop.f32.mrf.mxu0
  %v2906 = vadd.f32 0.0, %v2905
  %v2907 = vpop.f32.mrf.mxu0
  %v2908 = vadd.f32 0.0, %v2907
  %2909 = vmatmul.bf16.gmra.mxu0 %v2866
  %v2910 = vpop.f32.mrf.mxu0
  %v2911 = vadd.f32 0.0, %v2910
  %v2912 = vpop.f32.mrf.mxu0
  %v2913 = vadd.f32 0.0, %v2912
  %2914 = vmatmul.bf16.gmra.mxu0 %v2869
  %v2915 = vpop.f32.mrf.mxu0
  %v2916 = vadd.f32 0.0, %v2915
  %v2917 = vpop.f32.mrf.mxu0
  %v2918 = vadd.f32 0.0, %v2917
  %2919 = vdwg.mxu0
  %v2920 = vadd.f32 %v2762, %v2881
  %v2921 = vadd.f32 %v2763, %v2883
  %v2922 = vadd.f32 %v2764, %v2886
  %v2923 = vadd.f32 %v2765, %v2888
  %v2924 = vadd.f32 %v2766, %v2891
  %v2925 = vadd.f32 %v2767, %v2893
  %v2926 = vadd.f32 %v2768, %v2896
  %v2927 = vadd.f32 %v2769, %v2898
  %v2928 = vadd.f32 %v2770, %v2901
  %v2929 = vadd.f32 %v2771, %v2903
  %v2930 = vadd.f32 %v2772, %v2906
  %v2931 = vadd.f32 %v2773, %v2908
  %v2932 = vadd.f32 %v2774, %v2911
  %v2933 = vadd.f32 %v2775, %v2913
  %v2934 = vadd.f32 %v2776, %v2916
  %v2935 = vadd.f32 %v2777, %v2918
  %s2936 = scalar_lea.vmem %s8, 320
  %v2937 = vld [vmem:[%s2936] sm:$0xf]
  %v2938 = vld [vmem:[%s2936 + $0x4] sm:$0xf]
  %v2939 = vld [vmem:[%s2936 + $0x8] sm:$0xf]
  %v2940 = vld [vmem:[%s2936 + $0xc] sm:$0xf]
  %v2941 = vld [vmem:[%s2936 + $0x10] sm:$0xf]
  %v2942 = vld [vmem:[%s2936 + $0x14] sm:$0xf]
  %v2943 = vld [vmem:[%s2936 + $0x18] sm:$0xf]
  %v2944 = vld [vmem:[%s2936 + $0x1c] sm:$0xf]
  %v2945 = vld [vmem:[%s2936 + $0x20] sm:$0xf]
  %v2946 = vld [vmem:[%s2936 + $0x24] sm:$0xf]
  %v2947 = vld [vmem:[%s2936 + $0x28] sm:$0xf]
  %v2948 = vld [vmem:[%s2936 + $0x2c] sm:$0xf]
  %v2949 = vld [vmem:[%s2936 + $0x30] sm:$0xf]
  %v2950 = vld [vmem:[%s2936 + $0x34] sm:$0xf]
  %v2951 = vld [vmem:[%s2936 + $0x38] sm:$0xf]
  %v2952 = vld [vmem:[%s2936 + $0x3c] sm:$0xf]
  %v2969 = vunpack.c.l.b16 %v2937
  %v2970 = vunpack.c.l.b16 %v2938
  %v2971 = vunpack.c.l.b16 %v2939
  %v2972 = vunpack.c.l.b16 %v2940
  %v2973 = vunpack.c.l.b16 %v2941
  %v2974 = vunpack.c.l.b16 %v2942
  %v2975 = vunpack.c.l.b16 %v2943
  %v2976 = vunpack.c.l.b16 %v2944
  %v2977 = vunpack.c.l.b16 %v2945
  %v2978 = vunpack.c.l.b16 %v2946
  %v2979 = vunpack.c.l.b16 %v2947
  %v2980 = vunpack.c.l.b16 %v2948
  %v2981 = vunpack.c.l.b16 %v2949
  %v2982 = vunpack.c.l.b16 %v2950
  %v2983 = vunpack.c.l.b16 %v2951
  %v2984 = vunpack.c.l.b16 %v2952
  %v2985 = vpack.c.b16 %v2970, %v2969
  %v2986 = vpack.c.b16 %v2972, %v2971
  %v2987 = vpack.c.b16 %v2974, %v2973
  %v2988 = vpack.c.b16 %v2976, %v2975
  %v2989 = vpack.c.b16 %v2978, %v2977
  %v2990 = vpack.c.b16 %v2980, %v2979
  %v2991 = vpack.c.b16 %v2982, %v2981
  %v2992 = vpack.c.b16 %v2984, %v2983
  %2993 = vrot.lane.b32.xlu0 %v2256, 48
  %v2994 = vpop.permute.xlu0 %2993
  %2995 = vrot.lane.b32.xlu0 %v2257, 48
  %v2996 = vpop.permute.xlu0 %2995
  %2997 = vrot.lane.b32.xlu0 %v2258, 48
  %v2998 = vpop.permute.xlu0 %2997
  %2999 = vrot.lane.b32.xlu0 %v2259, 48
  %v3000 = vpop.permute.xlu0 %2999
  %v3006 = vsel %vm925, %v2985, 0
  %v3009 = vsel %vm925, %v2986, 0
  %v3012 = vsel %vm925, %v2987, 0
  %v3015 = vsel %vm925, %v2988, 0
  %v3018 = vsel %vm925, %v2989, 0
  %v3021 = vsel %vm925, %v2990, 0
  %v3024 = vsel %vm925, %v2991, 0
  %v3027 = vsel %vm925, %v2992, 0
  %3029 = vmatpush.bf16.msra.mxu0 0
  %3030 = vmatpush.bf16.msra.mxu0 0
  %3031 = vmatpush.bf16.msra.mxu0 0
  %3032 = vmatpush.bf16.msra.mxu0 0
  %3033 = vmatpush.bf16.msra.mxu0 %v3000
  %3034 = vmatpush.bf16.msra.mxu0 %v2998
  %3035 = vmatpush.bf16.msra.mxu0 %v2996
  %3036 = vmatpush.bf16.msra.mxu0 %v2994
  %3037 = vmatmul.bf16.gmra.mxu0 %v3006
  %v3038 = vpop.f32.mrf.mxu0
  %v3039 = vadd.f32 0.0, %v3038
  %v3040 = vpop.f32.mrf.mxu0
  %v3041 = vadd.f32 0.0, %v3040
  %3042 = vmatmul.bf16.gmra.mxu0 %v3009
  %v3043 = vpop.f32.mrf.mxu0
  %v3044 = vadd.f32 0.0, %v3043
  %v3045 = vpop.f32.mrf.mxu0
  %v3046 = vadd.f32 0.0, %v3045
  %3047 = vmatmul.bf16.gmra.mxu0 %v3012
  %v3048 = vpop.f32.mrf.mxu0
  %v3049 = vadd.f32 0.0, %v3048
  %v3050 = vpop.f32.mrf.mxu0
  %v3051 = vadd.f32 0.0, %v3050
  %3052 = vmatmul.bf16.gmra.mxu0 %v3015
  %v3053 = vpop.f32.mrf.mxu0
  %v3054 = vadd.f32 0.0, %v3053
  %v3055 = vpop.f32.mrf.mxu0
  %v3056 = vadd.f32 0.0, %v3055
  %3057 = vmatmul.bf16.gmra.mxu0 %v3018
  %v3058 = vpop.f32.mrf.mxu0
  %v3059 = vadd.f32 0.0, %v3058
  %v3060 = vpop.f32.mrf.mxu0
  %v3061 = vadd.f32 0.0, %v3060
  %3062 = vmatmul.bf16.gmra.mxu0 %v3021
  %v3063 = vpop.f32.mrf.mxu0
  %v3064 = vadd.f32 0.0, %v3063
  %v3065 = vpop.f32.mrf.mxu0
  %v3066 = vadd.f32 0.0, %v3065
  %3067 = vmatmul.bf16.gmra.mxu0 %v3024
  %v3068 = vpop.f32.mrf.mxu0
  %v3069 = vadd.f32 0.0, %v3068
  %v3070 = vpop.f32.mrf.mxu0
  %v3071 = vadd.f32 0.0, %v3070
  %3072 = vmatmul.bf16.gmra.mxu0 %v3027
  %v3073 = vpop.f32.mrf.mxu0
  %v3074 = vadd.f32 0.0, %v3073
  %v3075 = vpop.f32.mrf.mxu0
  %v3076 = vadd.f32 0.0, %v3075
  %3077 = vdwg.mxu0
  %v3078 = vadd.f32 %v2920, %v3039
  %v3079 = vadd.f32 %v2921, %v3041
  %v3080 = vadd.f32 %v2922, %v3044
  %v3081 = vadd.f32 %v2923, %v3046
  %v3082 = vadd.f32 %v2924, %v3049
  %v3083 = vadd.f32 %v2925, %v3051
  %v3084 = vadd.f32 %v2926, %v3054
  %v3085 = vadd.f32 %v2927, %v3056
  %v3086 = vadd.f32 %v2928, %v3059
  %v3087 = vadd.f32 %v2929, %v3061
  %v3088 = vadd.f32 %v2930, %v3064
  %v3089 = vadd.f32 %v2931, %v3066
  %v3090 = vadd.f32 %v2932, %v3069
  %v3091 = vadd.f32 %v2933, %v3071
  %v3092 = vadd.f32 %v2934, %v3074
  %v3093 = vadd.f32 %v2935, %v3076
  %s3094 = scalar_lea.vmem %s8, 384
  %v3095 = vld [vmem:[%s3094] sm:$0xf]
  %v3096 = vld [vmem:[%s3094 + $0x4] sm:$0xf]
  %v3097 = vld [vmem:[%s3094 + $0x8] sm:$0xf]
  %v3098 = vld [vmem:[%s3094 + $0xc] sm:$0xf]
  %v3099 = vld [vmem:[%s3094 + $0x10] sm:$0xf]
  %v3100 = vld [vmem:[%s3094 + $0x14] sm:$0xf]
  %v3101 = vld [vmem:[%s3094 + $0x18] sm:$0xf]
  %v3102 = vld [vmem:[%s3094 + $0x1c] sm:$0xf]
  %v3103 = vld [vmem:[%s3094 + $0x20] sm:$0xf]
  %v3104 = vld [vmem:[%s3094 + $0x24] sm:$0xf]
  %v3105 = vld [vmem:[%s3094 + $0x28] sm:$0xf]
  %v3106 = vld [vmem:[%s3094 + $0x2c] sm:$0xf]
  %v3107 = vld [vmem:[%s3094 + $0x30] sm:$0xf]
  %v3108 = vld [vmem:[%s3094 + $0x34] sm:$0xf]
  %v3109 = vld [vmem:[%s3094 + $0x38] sm:$0xf]
  %v3110 = vld [vmem:[%s3094 + $0x3c] sm:$0xf]
  %v3127 = vunpack.c.l.b16 %v3095
  %v3128 = vunpack.c.l.b16 %v3096
  %v3129 = vunpack.c.l.b16 %v3097
  %v3130 = vunpack.c.l.b16 %v3098
  %v3131 = vunpack.c.l.b16 %v3099
  %v3132 = vunpack.c.l.b16 %v3100
  %v3133 = vunpack.c.l.b16 %v3101
  %v3134 = vunpack.c.l.b16 %v3102
  %v3135 = vunpack.c.l.b16 %v3103
  %v3136 = vunpack.c.l.b16 %v3104
  %v3137 = vunpack.c.l.b16 %v3105
  %v3138 = vunpack.c.l.b16 %v3106
  %v3139 = vunpack.c.l.b16 %v3107
  %v3140 = vunpack.c.l.b16 %v3108
  %v3141 = vunpack.c.l.b16 %v3109
  %v3142 = vunpack.c.l.b16 %v3110
  %v3143 = vpack.c.b16 %v3128, %v3127
  %v3144 = vpack.c.b16 %v3130, %v3129
  %v3145 = vpack.c.b16 %v3132, %v3131
  %v3146 = vpack.c.b16 %v3134, %v3133
  %v3147 = vpack.c.b16 %v3136, %v3135
  %v3148 = vpack.c.b16 %v3138, %v3137
  %v3149 = vpack.c.b16 %v3140, %v3139
  %v3150 = vpack.c.b16 %v3142, %v3141
  %3151 = vrot.lane.b32.xlu0 %v2256, 32
  %v3152 = vpop.permute.xlu0 %3151
  %3153 = vrot.lane.b32.xlu0 %v2257, 32
  %v3154 = vpop.permute.xlu0 %3153
  %3155 = vrot.lane.b32.xlu0 %v2258, 32
  %v3156 = vpop.permute.xlu0 %3155
  %3157 = vrot.lane.b32.xlu0 %v2259, 32
  %v3158 = vpop.permute.xlu0 %3157
  %v3164 = vsel %vm925, %v3143, 0
  %v3167 = vsel %vm925, %v3144, 0
  %v3170 = vsel %vm925, %v3145, 0
  %v3173 = vsel %vm925, %v3146, 0
  %v3176 = vsel %vm925, %v3147, 0
  %v3179 = vsel %vm925, %v3148, 0
  %v3182 = vsel %vm925, %v3149, 0
  %v3185 = vsel %vm925, %v3150, 0
  %3187 = vmatpush.bf16.msra.mxu0 0
  %3188 = vmatpush.bf16.msra.mxu0 0
  %3189 = vmatpush.bf16.msra.mxu0 0
  %3190 = vmatpush.bf16.msra.mxu0 0
  %3191 = vmatpush.bf16.msra.mxu0 %v3158
  %3192 = vmatpush.bf16.msra.mxu0 %v3156
  %3193 = vmatpush.bf16.msra.mxu0 %v3154
  %3194 = vmatpush.bf16.msra.mxu0 %v3152
  %3195 = vmatmul.bf16.gmra.mxu0 %v3164
  %v3196 = vpop.f32.mrf.mxu0
  %v3197 = vadd.f32 0.0, %v3196
  %v3198 = vpop.f32.mrf.mxu0
  %v3199 = vadd.f32 0.0, %v3198
  %3200 = vmatmul.bf16.gmra.mxu0 %v3167
  %v3201 = vpop.f32.mrf.mxu0
  %v3202 = vadd.f32 0.0, %v3201
  %v3203 = vpop.f32.mrf.mxu0
  %v3204 = vadd.f32 0.0, %v3203
  %3205 = vmatmul.bf16.gmra.mxu0 %v3170
  %v3206 = vpop.f32.mrf.mxu0
  %v3207 = vadd.f32 0.0, %v3206
  %v3208 = vpop.f32.mrf.mxu0
  %v3209 = vadd.f32 0.0, %v3208
  %3210 = vmatmul.bf16.gmra.mxu0 %v3173
  %v3211 = vpop.f32.mrf.mxu0
  %v3212 = vadd.f32 0.0, %v3211
  %v3213 = vpop.f32.mrf.mxu0
  %v3214 = vadd.f32 0.0, %v3213
  %3215 = vmatmul.bf16.gmra.mxu0 %v3176
  %v3216 = vpop.f32.mrf.mxu0
  %v3217 = vadd.f32 0.0, %v3216
  %v3218 = vpop.f32.mrf.mxu0
  %v3219 = vadd.f32 0.0, %v3218
  %3220 = vmatmul.bf16.gmra.mxu0 %v3179
  %v3221 = vpop.f32.mrf.mxu0
  %v3222 = vadd.f32 0.0, %v3221
  %v3223 = vpop.f32.mrf.mxu0
  %v3224 = vadd.f32 0.0, %v3223
  %3225 = vmatmul.bf16.gmra.mxu0 %v3182
  %v3226 = vpop.f32.mrf.mxu0
  %v3227 = vadd.f32 0.0, %v3226
  %v3228 = vpop.f32.mrf.mxu0
  %v3229 = vadd.f32 0.0, %v3228
  %3230 = vmatmul.bf16.gmra.mxu0 %v3185
  %v3231 = vpop.f32.mrf.mxu0
  %v3232 = vadd.f32 0.0, %v3231
  %v3233 = vpop.f32.mrf.mxu0
  %v3234 = vadd.f32 0.0, %v3233
  %3235 = vdwg.mxu0
  %v3236 = vadd.f32 %v3078, %v3197
  %v3237 = vadd.f32 %v3079, %v3199
  %v3238 = vadd.f32 %v3080, %v3202
  %v3239 = vadd.f32 %v3081, %v3204
  %v3240 = vadd.f32 %v3082, %v3207
  %v3241 = vadd.f32 %v3083, %v3209
  %v3242 = vadd.f32 %v3084, %v3212
  %v3243 = vadd.f32 %v3085, %v3214
  %v3244 = vadd.f32 %v3086, %v3217
  %v3245 = vadd.f32 %v3087, %v3219
  %v3246 = vadd.f32 %v3088, %v3222
  %v3247 = vadd.f32 %v3089, %v3224
  %v3248 = vadd.f32 %v3090, %v3227
  %v3249 = vadd.f32 %v3091, %v3229
  %v3250 = vadd.f32 %v3092, %v3232
  %v3251 = vadd.f32 %v3093, %v3234
  %s3252 = scalar_lea.vmem %s8, 448
  %v3253 = vld [vmem:[%s3252] sm:$0xf]
  %v3254 = vld [vmem:[%s3252 + $0x4] sm:$0xf]
  %v3255 = vld [vmem:[%s3252 + $0x8] sm:$0xf]
  %v3256 = vld [vmem:[%s3252 + $0xc] sm:$0xf]
  %v3257 = vld [vmem:[%s3252 + $0x10] sm:$0xf]
  %v3258 = vld [vmem:[%s3252 + $0x14] sm:$0xf]
  %v3259 = vld [vmem:[%s3252 + $0x18] sm:$0xf]
  %v3260 = vld [vmem:[%s3252 + $0x1c] sm:$0xf]
  %v3261 = vld [vmem:[%s3252 + $0x20] sm:$0xf]
  %v3262 = vld [vmem:[%s3252 + $0x24] sm:$0xf]
  %v3263 = vld [vmem:[%s3252 + $0x28] sm:$0xf]
  %v3264 = vld [vmem:[%s3252 + $0x2c] sm:$0xf]
  %v3265 = vld [vmem:[%s3252 + $0x30] sm:$0xf]
  %v3266 = vld [vmem:[%s3252 + $0x34] sm:$0xf]
  %v3267 = vld [vmem:[%s3252 + $0x38] sm:$0xf]
  %v3268 = vld [vmem:[%s3252 + $0x3c] sm:$0xf]
  %v3285 = vunpack.c.l.b16 %v3253
  %v3286 = vunpack.c.l.b16 %v3254
  %v3287 = vunpack.c.l.b16 %v3255
  %v3288 = vunpack.c.l.b16 %v3256
  %v3289 = vunpack.c.l.b16 %v3257
  %v3290 = vunpack.c.l.b16 %v3258
  %v3291 = vunpack.c.l.b16 %v3259
  %v3292 = vunpack.c.l.b16 %v3260
  %v3293 = vunpack.c.l.b16 %v3261
  %v3294 = vunpack.c.l.b16 %v3262
  %v3295 = vunpack.c.l.b16 %v3263
  %v3296 = vunpack.c.l.b16 %v3264
  %v3297 = vunpack.c.l.b16 %v3265
  %v3298 = vunpack.c.l.b16 %v3266
  %v3299 = vunpack.c.l.b16 %v3267
  %v3300 = vunpack.c.l.b16 %v3268
  %v3301 = vpack.c.b16 %v3286, %v3285
  %v3302 = vpack.c.b16 %v3288, %v3287
  %v3303 = vpack.c.b16 %v3290, %v3289
  %v3304 = vpack.c.b16 %v3292, %v3291
  %v3305 = vpack.c.b16 %v3294, %v3293
  %v3306 = vpack.c.b16 %v3296, %v3295
  %v3307 = vpack.c.b16 %v3298, %v3297
  %v3308 = vpack.c.b16 %v3300, %v3299
  %3309 = vrot.lane.b32.xlu0 %v2256, 16
  %v3310 = vpop.permute.xlu0 %3309
  %3311 = vrot.lane.b32.xlu0 %v2257, 16
  %v3312 = vpop.permute.xlu0 %3311
  %3313 = vrot.lane.b32.xlu0 %v2258, 16
  %v3314 = vpop.permute.xlu0 %3313
  %3315 = vrot.lane.b32.xlu0 %v2259, 16
  %v3316 = vpop.permute.xlu0 %3315
  %v3322 = vsel %vm925, %v3301, 0
  %v3325 = vsel %vm925, %v3302, 0
  %v3328 = vsel %vm925, %v3303, 0
  %v3331 = vsel %vm925, %v3304, 0
  %v3334 = vsel %vm925, %v3305, 0
  %v3337 = vsel %vm925, %v3306, 0
  %v3340 = vsel %vm925, %v3307, 0
  %v3343 = vsel %vm925, %v3308, 0
  %3345 = vmatpush.bf16.msra.mxu0 0
  %3346 = vmatpush.bf16.msra.mxu0 0
  %3347 = vmatpush.bf16.msra.mxu0 0
  %3348 = vmatpush.bf16.msra.mxu0 0
  %3349 = vmatpush.bf16.msra.mxu0 %v3316
  %3350 = vmatpush.bf16.msra.mxu0 %v3314
  %3351 = vmatpush.bf16.msra.mxu0 %v3312
  %3352 = vmatpush.bf16.msra.mxu0 %v3310
  %3353 = vmatmul.bf16.gmra.mxu0 %v3322
  %v3354 = vpop.f32.mrf.mxu0
  %v3355 = vadd.f32 0.0, %v3354
  %v3356 = vpop.f32.mrf.mxu0
  %v3357 = vadd.f32 0.0, %v3356
  %3358 = vmatmul.bf16.gmra.mxu0 %v3325
  %v3359 = vpop.f32.mrf.mxu0
  %v3360 = vadd.f32 0.0, %v3359
  %v3361 = vpop.f32.mrf.mxu0
  %v3362 = vadd.f32 0.0, %v3361
  %3363 = vmatmul.bf16.gmra.mxu0 %v3328
  %v3364 = vpop.f32.mrf.mxu0
  %v3365 = vadd.f32 0.0, %v3364
  %v3366 = vpop.f32.mrf.mxu0
  %v3367 = vadd.f32 0.0, %v3366
  %3368 = vmatmul.bf16.gmra.mxu0 %v3331
  %v3369 = vpop.f32.mrf.mxu0
  %v3370 = vadd.f32 0.0, %v3369
  %v3371 = vpop.f32.mrf.mxu0
  %v3372 = vadd.f32 0.0, %v3371
  %3373 = vmatmul.bf16.gmra.mxu0 %v3334
  %v3374 = vpop.f32.mrf.mxu0
  %v3375 = vadd.f32 0.0, %v3374
  %v3376 = vpop.f32.mrf.mxu0
  %v3377 = vadd.f32 0.0, %v3376
  %3378 = vmatmul.bf16.gmra.mxu0 %v3337
  %v3379 = vpop.f32.mrf.mxu0
  %v3380 = vadd.f32 0.0, %v3379
  %v3381 = vpop.f32.mrf.mxu0
  %v3382 = vadd.f32 0.0, %v3381
  %3383 = vmatmul.bf16.gmra.mxu0 %v3340
  %v3384 = vpop.f32.mrf.mxu0
  %v3385 = vadd.f32 0.0, %v3384
  %v3386 = vpop.f32.mrf.mxu0
  %v3387 = vadd.f32 0.0, %v3386
  %3388 = vmatmul.bf16.gmra.mxu0 %v3343
  %v3389 = vpop.f32.mrf.mxu0
  %v3390 = vadd.f32 0.0, %v3389
  %v3391 = vpop.f32.mrf.mxu0
  %v3392 = vadd.f32 0.0, %v3391
  %3393 = vdwg.mxu0
  %v3394 = vadd.f32 %v3236, %v3355
  %v3395 = vadd.f32 %v3237, %v3357
  %v3396 = vadd.f32 %v3238, %v3360
  %v3397 = vadd.f32 %v3239, %v3362
  %v3398 = vadd.f32 %v3240, %v3365
  %v3399 = vadd.f32 %v3241, %v3367
  %v3400 = vadd.f32 %v3242, %v3370
  %v3401 = vadd.f32 %v3243, %v3372
  %v3402 = vadd.f32 %v3244, %v3375
  %v3403 = vadd.f32 %v3245, %v3377
  %v3404 = vadd.f32 %v3246, %v3380
  %v3405 = vadd.f32 %v3247, %v3382
  %v3406 = vadd.f32 %v3248, %v3385
  %v3407 = vadd.f32 %v3249, %v3387
  %v3408 = vadd.f32 %v3250, %v3390
  %v3409 = vadd.f32 %v3251, %v3392
  %s3410 = scalar_lea.vmem %s8, 512
  %v3411 = vld [vmem:[%s3410] sm:$0xf]
  %v3412 = vld [vmem:[%s3410 + $0x4] sm:$0xf]
  %v3413 = vld [vmem:[%s3410 + $0x8] sm:$0xf]
  %v3414 = vld [vmem:[%s3410 + $0xc] sm:$0xf]
  %v3415 = vld [vmem:[%s3410 + $0x10] sm:$0xf]
  %v3416 = vld [vmem:[%s3410 + $0x14] sm:$0xf]
  %v3417 = vld [vmem:[%s3410 + $0x18] sm:$0xf]
  %v3418 = vld [vmem:[%s3410 + $0x1c] sm:$0xf]
  %v3419 = vld [vmem:[%s3410 + $0x20] sm:$0xf]
  %v3420 = vld [vmem:[%s3410 + $0x24] sm:$0xf]
  %v3421 = vld [vmem:[%s3410 + $0x28] sm:$0xf]
  %v3422 = vld [vmem:[%s3410 + $0x2c] sm:$0xf]
  %v3423 = vld [vmem:[%s3410 + $0x30] sm:$0xf]
  %v3424 = vld [vmem:[%s3410 + $0x34] sm:$0xf]
  %v3425 = vld [vmem:[%s3410 + $0x38] sm:$0xf]
  %v3426 = vld [vmem:[%s3410 + $0x3c] sm:$0xf]
  %v3443 = vunpack.c.l.b16 %v3411
  %v3444 = vunpack.c.l.b16 %v3412
  %v3445 = vunpack.c.l.b16 %v3413
  %v3446 = vunpack.c.l.b16 %v3414
  %v3447 = vunpack.c.l.b16 %v3415
  %v3448 = vunpack.c.l.b16 %v3416
  %v3449 = vunpack.c.l.b16 %v3417
  %v3450 = vunpack.c.l.b16 %v3418
  %v3451 = vunpack.c.l.b16 %v3419
  %v3452 = vunpack.c.l.b16 %v3420
  %v3453 = vunpack.c.l.b16 %v3421
  %v3454 = vunpack.c.l.b16 %v3422
  %v3455 = vunpack.c.l.b16 %v3423
  %v3456 = vunpack.c.l.b16 %v3424
  %v3457 = vunpack.c.l.b16 %v3425
  %v3458 = vunpack.c.l.b16 %v3426
  %v3459 = vpack.c.b16 %v3444, %v3443
  %v3460 = vpack.c.b16 %v3446, %v3445
  %v3461 = vpack.c.b16 %v3448, %v3447
  %v3462 = vpack.c.b16 %v3450, %v3449
  %v3463 = vpack.c.b16 %v3452, %v3451
  %v3464 = vpack.c.b16 %v3454, %v3453
  %v3465 = vpack.c.b16 %v3456, %v3455
  %v3466 = vpack.c.b16 %v3458, %v3457
  %v3467 = vunpack.c.h.b16 %v2159
  %v3468 = vunpack.c.h.b16 %v2160
  %v3469 = vunpack.c.h.b16 %v2161
  %v3470 = vunpack.c.h.b16 %v2162
  %v3471 = vunpack.c.h.b16 %v2163
  %v3472 = vunpack.c.h.b16 %v2164
  %v3473 = vunpack.c.h.b16 %v2165
  %v3474 = vunpack.c.h.b16 %v2166
  %v3475 = vpack.c.b16 %v3468, %v3467
  %v3476 = vpack.c.b16 %v3470, %v3469
  %v3477 = vpack.c.b16 %v3472, %v3471
  %v3478 = vpack.c.b16 %v3474, %v3473
  %v3484 = vsel %vm925, %v3459, 0
  %v3487 = vsel %vm925, %v3460, 0
  %v3490 = vsel %vm925, %v3461, 0
  %v3493 = vsel %vm925, %v3462, 0
  %v3496 = vsel %vm925, %v3463, 0
  %v3499 = vsel %vm925, %v3464, 0
  %v3502 = vsel %vm925, %v3465, 0
  %v3505 = vsel %vm925, %v3466, 0
  %3507 = vmatpush.bf16.msra.mxu0 0
  %3508 = vmatpush.bf16.msra.mxu0 0
  %3509 = vmatpush.bf16.msra.mxu0 0
  %3510 = vmatpush.bf16.msra.mxu0 0
  %3511 = vmatpush.bf16.msra.mxu0 %v3478
  %3512 = vmatpush.bf16.msra.mxu0 %v3477
  %3513 = vmatpush.bf16.msra.mxu0 %v3476
  %3514 = vmatpush.bf16.msra.mxu0 %v3475
  %3515 = vmatmul.bf16.gmra.mxu0 %v3484
  %v3516 = vpop.f32.mrf.mxu0
  %v3517 = vadd.f32 0.0, %v3516
  %v3518 = vpop.f32.mrf.mxu0
  %v3519 = vadd.f32 0.0, %v3518
  %3520 = vmatmul.bf16.gmra.mxu0 %v3487
  %v3521 = vpop.f32.mrf.mxu0
  %v3522 = vadd.f32 0.0, %v3521
  %v3523 = vpop.f32.mrf.mxu0
  %v3524 = vadd.f32 0.0, %v3523
  %3525 = vmatmul.bf16.gmra.mxu0 %v3490
  %v3526 = vpop.f32.mrf.mxu0
  %v3527 = vadd.f32 0.0, %v3526
  %v3528 = vpop.f32.mrf.mxu0
  %v3529 = vadd.f32 0.0, %v3528
  %3530 = vmatmul.bf16.gmra.mxu0 %v3493
  %v3531 = vpop.f32.mrf.mxu0
  %v3532 = vadd.f32 0.0, %v3531
  %v3533 = vpop.f32.mrf.mxu0
  %v3534 = vadd.f32 0.0, %v3533
  %3535 = vmatmul.bf16.gmra.mxu0 %v3496
  %v3536 = vpop.f32.mrf.mxu0
  %v3537 = vadd.f32 0.0, %v3536
  %v3538 = vpop.f32.mrf.mxu0
  %v3539 = vadd.f32 0.0, %v3538
  %3540 = vmatmul.bf16.gmra.mxu0 %v3499
  %v3541 = vpop.f32.mrf.mxu0
  %v3542 = vadd.f32 0.0, %v3541
  %v3543 = vpop.f32.mrf.mxu0
  %v3544 = vadd.f32 0.0, %v3543
  %3545 = vmatmul.bf16.gmra.mxu0 %v3502
  %v3546 = vpop.f32.mrf.mxu0
  %v3547 = vadd.f32 0.0, %v3546
  %v3548 = vpop.f32.mrf.mxu0
  %v3549 = vadd.f32 0.0, %v3548
  %3550 = vmatmul.bf16.gmra.mxu0 %v3505
  %v3551 = vpop.f32.mrf.mxu0
  %v3552 = vadd.f32 0.0, %v3551
  %v3553 = vpop.f32.mrf.mxu0
  %v3554 = vadd.f32 0.0, %v3553
  %3555 = vdwg.mxu0
  %v3556 = vadd.f32 %v3394, %v3517
  %v3557 = vadd.f32 %v3395, %v3519
  %v3558 = vadd.f32 %v3396, %v3522
  %v3559 = vadd.f32 %v3397, %v3524
  %v3560 = vadd.f32 %v3398, %v3527
  %v3561 = vadd.f32 %v3399, %v3529
  %v3562 = vadd.f32 %v3400, %v3532
  %v3563 = vadd.f32 %v3401, %v3534
  %v3564 = vadd.f32 %v3402, %v3537
  %v3565 = vadd.f32 %v3403, %v3539
  %v3566 = vadd.f32 %v3404, %v3542
  %v3567 = vadd.f32 %v3405, %v3544
  %v3568 = vadd.f32 %v3406, %v3547
  %v3569 = vadd.f32 %v3407, %v3549
  %v3570 = vadd.f32 %v3408, %v3552
  %v3571 = vadd.f32 %v3409, %v3554
  %v3572 = vld [vmem:[%s4] sm:$0xff]
  %v3573 = vld [vmem:[%s4 + $0x8] sm:$0xff]
  %v3574 = vld [vmem:[%s5] sm:$0x1]
  %v3576 = vperm.slane %v3574, 0
  %v3579 = vsel %vm1401, %v3556, 0
  %v3582 = vsel %vm1401, %v3557, 0
  %v3585 = vsel %vm1401, %v3558, 0
  %v3588 = vsel %vm1401, %v3559, 0
  %v3591 = vsel %vm1401, %v3560, 0
  %v3594 = vsel %vm1401, %v3561, 0
  %v3597 = vsel %vm1401, %v3562, 0
  %v3600 = vsel %vm1401, %v3563, 0
  %v3603 = vsel %vm1401, %v3564, 0
  %v3606 = vsel %vm1401, %v3565, 0
  %v3609 = vsel %vm1401, %v3566, 0
  %v3612 = vsel %vm1401, %v3567, 0
  %v3615 = vsel %vm1401, %v3568, 0
  %v3618 = vsel %vm1401, %v3569, 0
  %v3621 = vsel %vm1401, %v3570, 0
  %v3624 = vsel %vm1401, %v3571, 0
  %3626 = vmatpush.msra.mxu0 0.0
  %3627 = vmatpush.msra.mxu0 0.0
  %3628 = vmatpush.msra.mxu0 0.0
  %3629 = vmatpush.msra.mxu0 0.0
  %3630 = vmatpush.msra.mxu0 0.0
  %3631 = vmatpush.msra.mxu0 0.0
  %3632 = vmatpush.msra.mxu0 0.0
  %3633 = vmatpush.msra.mxu0 0.0
  %3634 = vmatpush.msra.mxu0 0.0
  %3635 = vmatpush.msra.mxu0 0.0
  %3636 = vmatpush.msra.mxu0 0.0
  %3637 = vmatpush.msra.mxu0 0.0
  %3638 = vmatpush.msra.mxu0 0.0
  %3639 = vmatpush.msra.mxu0 0.0
  %3640 = vmatpush.msra.mxu0 %v3573
  %3641 = vmatpush.msra.mxu0 %v3572
  %3642 = vmatmul.f32.gmra.mxu0 %v3579
  %v3643 = vpop.f32.mrf.mxu0
  %v3644 = vadd.f32 %v3576, %v3643
  %3645 = vmatmul.f32.gmra.mxu0 %v3582
  %v3646 = vpop.f32.mrf.mxu0
  %v3647 = vadd.f32 %v3576, %v3646
  %3648 = vmatmul.f32.gmra.mxu0 %v3585
  %v3649 = vpop.f32.mrf.mxu0
  %v3650 = vadd.f32 %v3576, %v3649
  %3651 = vmatmul.f32.gmra.mxu0 %v3588
  %v3652 = vpop.f32.mrf.mxu0
  %v3653 = vadd.f32 %v3576, %v3652
  %3654 = vmatmul.f32.gmra.mxu0 %v3591
  %v3655 = vpop.f32.mrf.mxu0
  %v3656 = vadd.f32 %v3576, %v3655
  %3657 = vmatmul.f32.gmra.mxu0 %v3594
  %v3658 = vpop.f32.mrf.mxu0
  %v3659 = vadd.f32 %v3576, %v3658
  %3660 = vmatmul.f32.gmra.mxu0 %v3597
  %v3661 = vpop.f32.mrf.mxu0
  %v3662 = vadd.f32 %v3576, %v3661
  %3663 = vmatmul.f32.gmra.mxu0 %v3600
  %v3664 = vpop.f32.mrf.mxu0
  %v3665 = vadd.f32 %v3576, %v3664
  %3666 = vmatmul.f32.gmra.mxu0 %v3603
  %v3667 = vpop.f32.mrf.mxu0
  %v3668 = vadd.f32 %v3576, %v3667
  %3669 = vmatmul.f32.gmra.mxu0 %v3606
  %v3670 = vpop.f32.mrf.mxu0
  %v3671 = vadd.f32 %v3576, %v3670
  %3672 = vmatmul.f32.gmra.mxu0 %v3609
  %v3673 = vpop.f32.mrf.mxu0
  %v3674 = vadd.f32 %v3576, %v3673
  %3675 = vmatmul.f32.gmra.mxu0 %v3612
  %v3676 = vpop.f32.mrf.mxu0
  %v3677 = vadd.f32 %v3576, %v3676
  %3678 = vmatmul.f32.gmra.mxu0 %v3615
  %v3679 = vpop.f32.mrf.mxu0
  %v3680 = vadd.f32 %v3576, %v3679
  %3681 = vmatmul.f32.gmra.mxu0 %v3618
  %v3682 = vpop.f32.mrf.mxu0
  %v3683 = vadd.f32 %v3576, %v3682
  %3684 = vmatmul.f32.gmra.mxu0 %v3621
  %v3685 = vpop.f32.mrf.mxu0
  %v3686 = vadd.f32 %v3576, %v3685
  %3687 = vmatmul.f32.gmra.mxu0 %v3624
  %v3688 = vpop.f32.mrf.mxu0
  %v3689 = vadd.f32 %v3576, %v3688
  %3690 = vdwg.mxu0
  %s3691 = scalar_lea.vmem %s4, 16
  %v3692 = vld [vmem:[%s3691] sm:$0xff]
  %v3693 = vld [vmem:[%s3691 + $0x8] sm:$0xff]
  %s3694 = scalar_lea.vmem %s5, 1
  %v3695 = vld [vmem:[%s3694] sm:$0x1]
  %v3697 = vperm.slane %v3695, 0
  %3699 = vmatpush.msra.mxu0 0.0
  %3700 = vmatpush.msra.mxu0 0.0
  %3701 = vmatpush.msra.mxu0 0.0
  %3702 = vmatpush.msra.mxu0 0.0
  %3703 = vmatpush.msra.mxu0 0.0
  %3704 = vmatpush.msra.mxu0 0.0
  %3705 = vmatpush.msra.mxu0 0.0
  %3706 = vmatpush.msra.mxu0 0.0
  %3707 = vmatpush.msra.mxu0 0.0
  %3708 = vmatpush.msra.mxu0 0.0
  %3709 = vmatpush.msra.mxu0 0.0
  %3710 = vmatpush.msra.mxu0 0.0
  %3711 = vmatpush.msra.mxu0 0.0
  %3712 = vmatpush.msra.mxu0 0.0
  %3713 = vmatpush.msra.mxu0 %v3693
  %3714 = vmatpush.msra.mxu0 %v3692
  %3715 = vmatmul.f32.gmra.mxu0 %v3579
  %v3716 = vpop.f32.mrf.mxu0
  %v3717 = vadd.f32 %v3697, %v3716
  %3718 = vmatmul.f32.gmra.mxu0 %v3582
  %v3719 = vpop.f32.mrf.mxu0
  %v3720 = vadd.f32 %v3697, %v3719
  %3721 = vmatmul.f32.gmra.mxu0 %v3585
  %v3722 = vpop.f32.mrf.mxu0
  %v3723 = vadd.f32 %v3697, %v3722
  %3724 = vmatmul.f32.gmra.mxu0 %v3588
  %v3725 = vpop.f32.mrf.mxu0
  %v3726 = vadd.f32 %v3697, %v3725
  %3727 = vmatmul.f32.gmra.mxu0 %v3591
  %v3728 = vpop.f32.mrf.mxu0
  %v3729 = vadd.f32 %v3697, %v3728
  %3730 = vmatmul.f32.gmra.mxu0 %v3594
  %v3731 = vpop.f32.mrf.mxu0
  %v3732 = vadd.f32 %v3697, %v3731
  %3733 = vmatmul.f32.gmra.mxu0 %v3597
  %v3734 = vpop.f32.mrf.mxu0
  %v3735 = vadd.f32 %v3697, %v3734
  %3736 = vmatmul.f32.gmra.mxu0 %v3600
  %v3737 = vpop.f32.mrf.mxu0
  %v3738 = vadd.f32 %v3697, %v3737
  %3739 = vmatmul.f32.gmra.mxu0 %v3603
  %v3740 = vpop.f32.mrf.mxu0
  %v3741 = vadd.f32 %v3697, %v3740
  %3742 = vmatmul.f32.gmra.mxu0 %v3606
  %v3743 = vpop.f32.mrf.mxu0
  %v3744 = vadd.f32 %v3697, %v3743
  %3745 = vmatmul.f32.gmra.mxu0 %v3609
  %v3746 = vpop.f32.mrf.mxu0
  %v3747 = vadd.f32 %v3697, %v3746
  %3748 = vmatmul.f32.gmra.mxu0 %v3612
  %v3749 = vpop.f32.mrf.mxu0
  %v3750 = vadd.f32 %v3697, %v3749
  %3751 = vmatmul.f32.gmra.mxu0 %v3615
  %v3752 = vpop.f32.mrf.mxu0
  %v3753 = vadd.f32 %v3697, %v3752
  %3754 = vmatmul.f32.gmra.mxu0 %v3618
  %v3755 = vpop.f32.mrf.mxu0
  %v3756 = vadd.f32 %v3697, %v3755
  %3757 = vmatmul.f32.gmra.mxu0 %v3621
  %v3758 = vpop.f32.mrf.mxu0
  %v3759 = vadd.f32 %v3697, %v3758
  %3760 = vmatmul.f32.gmra.mxu0 %v3624
  %v3761 = vpop.f32.mrf.mxu0
  %v3762 = vadd.f32 %v3697, %v3761
  %3763 = vdwg.mxu0
  %v3764 = vmax.f32 %v3644, %v3717
  %v3765 = vmax.f32 %v3647, %v3720
  %v3766 = vmax.f32 %v3650, %v3723
  %v3767 = vmax.f32 %v3653, %v3726
  %v3768 = vmax.f32 %v3656, %v3729
  %v3769 = vmax.f32 %v3659, %v3732
  %v3770 = vmax.f32 %v3662, %v3735
  %v3771 = vmax.f32 %v3665, %v3738
  %v3772 = vmax.f32 %v3668, %v3741
  %v3773 = vmax.f32 %v3671, %v3744
  %v3774 = vmax.f32 %v3674, %v3747
  %v3775 = vmax.f32 %v3677, %v3750
  %v3776 = vmax.f32 %v3680, %v3753
  %v3777 = vmax.f32 %v3683, %v3756
  %v3778 = vmax.f32 %v3686, %v3759
  %v3779 = vmax.f32 %v3689, %v3762
  %s3780 = scalar_lea.vmem %s4, 32
  %v3781 = vld [vmem:[%s3780] sm:$0xff]
  %v3782 = vld [vmem:[%s3780 + $0x8] sm:$0xff]
  %s3783 = scalar_lea.vmem %s5, 2
  %v3784 = vld [vmem:[%s3783] sm:$0x1]
  %v3786 = vperm.slane %v3784, 0
  %3788 = vmatpush.msra.mxu0 0.0
  %3789 = vmatpush.msra.mxu0 0.0
  %3790 = vmatpush.msra.mxu0 0.0
  %3791 = vmatpush.msra.mxu0 0.0
  %3792 = vmatpush.msra.mxu0 0.0
  %3793 = vmatpush.msra.mxu0 0.0
  %3794 = vmatpush.msra.mxu0 0.0
  %3795 = vmatpush.msra.mxu0 0.0
  %3796 = vmatpush.msra.mxu0 0.0
  %3797 = vmatpush.msra.mxu0 0.0
  %3798 = vmatpush.msra.mxu0 0.0
  %3799 = vmatpush.msra.mxu0 0.0
  %3800 = vmatpush.msra.mxu0 0.0
  %3801 = vmatpush.msra.mxu0 0.0
  %3802 = vmatpush.msra.mxu0 %v3782
  %3803 = vmatpush.msra.mxu0 %v3781
  %3804 = vmatmul.f32.gmra.mxu0 %v3579
  %v3805 = vpop.f32.mrf.mxu0
  %v3806 = vadd.f32 %v3786, %v3805
  %3807 = vmatmul.f32.gmra.mxu0 %v3582
  %v3808 = vpop.f32.mrf.mxu0
  %v3809 = vadd.f32 %v3786, %v3808
  %3810 = vmatmul.f32.gmra.mxu0 %v3585
  %v3811 = vpop.f32.mrf.mxu0
  %v3812 = vadd.f32 %v3786, %v3811
  %3813 = vmatmul.f32.gmra.mxu0 %v3588
  %v3814 = vpop.f32.mrf.mxu0
  %v3815 = vadd.f32 %v3786, %v3814
  %3816 = vmatmul.f32.gmra.mxu0 %v3591
  %v3817 = vpop.f32.mrf.mxu0
  %v3818 = vadd.f32 %v3786, %v3817
  %3819 = vmatmul.f32.gmra.mxu0 %v3594
  %v3820 = vpop.f32.mrf.mxu0
  %v3821 = vadd.f32 %v3786, %v3820
  %3822 = vmatmul.f32.gmra.mxu0 %v3597
  %v3823 = vpop.f32.mrf.mxu0
  %v3824 = vadd.f32 %v3786, %v3823
  %3825 = vmatmul.f32.gmra.mxu0 %v3600
  %v3826 = vpop.f32.mrf.mxu0
  %v3827 = vadd.f32 %v3786, %v3826
  %3828 = vmatmul.f32.gmra.mxu0 %v3603
  %v3829 = vpop.f32.mrf.mxu0
  %v3830 = vadd.f32 %v3786, %v3829
  %3831 = vmatmul.f32.gmra.mxu0 %v3606
  %v3832 = vpop.f32.mrf.mxu0
  %v3833 = vadd.f32 %v3786, %v3832
  %3834 = vmatmul.f32.gmra.mxu0 %v3609
  %v3835 = vpop.f32.mrf.mxu0
  %v3836 = vadd.f32 %v3786, %v3835
  %3837 = vmatmul.f32.gmra.mxu0 %v3612
  %v3838 = vpop.f32.mrf.mxu0
  %v3839 = vadd.f32 %v3786, %v3838
  %3840 = vmatmul.f32.gmra.mxu0 %v3615
  %v3841 = vpop.f32.mrf.mxu0
  %v3842 = vadd.f32 %v3786, %v3841
  %3843 = vmatmul.f32.gmra.mxu0 %v3618
  %v3844 = vpop.f32.mrf.mxu0
  %v3845 = vadd.f32 %v3786, %v3844
  %3846 = vmatmul.f32.gmra.mxu0 %v3621
  %v3847 = vpop.f32.mrf.mxu0
  %v3848 = vadd.f32 %v3786, %v3847
  %3849 = vmatmul.f32.gmra.mxu0 %v3624
  %v3850 = vpop.f32.mrf.mxu0
  %v3851 = vadd.f32 %v3786, %v3850
  %3852 = vdwg.mxu0
  %v3853 = vmax.f32 %v3764, %v3806
  %v3854 = vmax.f32 %v3765, %v3809
  %v3855 = vmax.f32 %v3766, %v3812
  %v3856 = vmax.f32 %v3767, %v3815
  %v3857 = vmax.f32 %v3768, %v3818
  %v3858 = vmax.f32 %v3769, %v3821
  %v3859 = vmax.f32 %v3770, %v3824
  %v3860 = vmax.f32 %v3771, %v3827
  %v3861 = vmax.f32 %v3772, %v3830
  %v3862 = vmax.f32 %v3773, %v3833
  %v3863 = vmax.f32 %v3774, %v3836
  %v3864 = vmax.f32 %v3775, %v3839
  %v3865 = vmax.f32 %v3776, %v3842
  %v3866 = vmax.f32 %v3777, %v3845
  %v3867 = vmax.f32 %v3778, %v3848
  %v3868 = vmax.f32 %v3779, %v3851
  %s3869 = scalar_lea.vmem %s4, 48
  %v3870 = vld [vmem:[%s3869] sm:$0xff]
  %v3871 = vld [vmem:[%s3869 + $0x8] sm:$0xff]
  %s3872 = scalar_lea.vmem %s5, 3
  %v3873 = vld [vmem:[%s3872] sm:$0x1]
  %v3875 = vperm.slane %v3873, 0
  %3877 = vmatpush.msra.mxu0 0.0
  %3878 = vmatpush.msra.mxu0 0.0
  %3879 = vmatpush.msra.mxu0 0.0
  %3880 = vmatpush.msra.mxu0 0.0
  %3881 = vmatpush.msra.mxu0 0.0
  %3882 = vmatpush.msra.mxu0 0.0
  %3883 = vmatpush.msra.mxu0 0.0
  %3884 = vmatpush.msra.mxu0 0.0
  %3885 = vmatpush.msra.mxu0 0.0
  %3886 = vmatpush.msra.mxu0 0.0
  %3887 = vmatpush.msra.mxu0 0.0
  %3888 = vmatpush.msra.mxu0 0.0
  %3889 = vmatpush.msra.mxu0 0.0
  %3890 = vmatpush.msra.mxu0 0.0
  %3891 = vmatpush.msra.mxu0 %v3871
  %3892 = vmatpush.msra.mxu0 %v3870
  %3893 = vmatmul.f32.gmra.mxu0 %v3579
  %v3894 = vpop.f32.mrf.mxu0
  %v3895 = vadd.f32 %v3875, %v3894
  %3896 = vmatmul.f32.gmra.mxu0 %v3582
  %v3897 = vpop.f32.mrf.mxu0
  %v3898 = vadd.f32 %v3875, %v3897
  %3899 = vmatmul.f32.gmra.mxu0 %v3585
  %v3900 = vpop.f32.mrf.mxu0
  %v3901 = vadd.f32 %v3875, %v3900
  %3902 = vmatmul.f32.gmra.mxu0 %v3588
  %v3903 = vpop.f32.mrf.mxu0
  %v3904 = vadd.f32 %v3875, %v3903
  %3905 = vmatmul.f32.gmra.mxu0 %v3591
  %v3906 = vpop.f32.mrf.mxu0
  %v3907 = vadd.f32 %v3875, %v3906
  %3908 = vmatmul.f32.gmra.mxu0 %v3594
  %v3909 = vpop.f32.mrf.mxu0
  %v3910 = vadd.f32 %v3875, %v3909
  %3911 = vmatmul.f32.gmra.mxu0 %v3597
  %v3912 = vpop.f32.mrf.mxu0
  %v3913 = vadd.f32 %v3875, %v3912
  %3914 = vmatmul.f32.gmra.mxu0 %v3600
  %v3915 = vpop.f32.mrf.mxu0
  %v3916 = vadd.f32 %v3875, %v3915
  %3917 = vmatmul.f32.gmra.mxu0 %v3603
  %v3918 = vpop.f32.mrf.mxu0
  %v3919 = vadd.f32 %v3875, %v3918
  %3920 = vmatmul.f32.gmra.mxu0 %v3606
  %v3921 = vpop.f32.mrf.mxu0
  %v3922 = vadd.f32 %v3875, %v3921
  %3923 = vmatmul.f32.gmra.mxu0 %v3609
  %v3924 = vpop.f32.mrf.mxu0
  %v3925 = vadd.f32 %v3875, %v3924
  %3926 = vmatmul.f32.gmra.mxu0 %v3612
  %v3927 = vpop.f32.mrf.mxu0
  %v3928 = vadd.f32 %v3875, %v3927
  %3929 = vmatmul.f32.gmra.mxu0 %v3615
  %v3930 = vpop.f32.mrf.mxu0
  %v3931 = vadd.f32 %v3875, %v3930
  %3932 = vmatmul.f32.gmra.mxu0 %v3618
  %v3933 = vpop.f32.mrf.mxu0
  %v3934 = vadd.f32 %v3875, %v3933
  %3935 = vmatmul.f32.gmra.mxu0 %v3621
  %v3936 = vpop.f32.mrf.mxu0
  %v3937 = vadd.f32 %v3875, %v3936
  %3938 = vmatmul.f32.gmra.mxu0 %v3624
  %v3939 = vpop.f32.mrf.mxu0
  %v3940 = vadd.f32 %v3875, %v3939
  %3941 = vdwg.mxu0
  %v3942 = vmax.f32 %v3853, %v3895
  %v3943 = vmax.f32 %v3854, %v3898
  %v3944 = vmax.f32 %v3855, %v3901
  %v3945 = vmax.f32 %v3856, %v3904
  %v3946 = vmax.f32 %v3857, %v3907
  %v3947 = vmax.f32 %v3858, %v3910
  %v3948 = vmax.f32 %v3859, %v3913
  %v3949 = vmax.f32 %v3860, %v3916
  %v3950 = vmax.f32 %v3861, %v3919
  %v3951 = vmax.f32 %v3862, %v3922
  %v3952 = vmax.f32 %v3863, %v3925
  %v3953 = vmax.f32 %v3864, %v3928
  %v3954 = vmax.f32 %v3865, %v3931
  %v3955 = vmax.f32 %v3866, %v3934
  %v3956 = vmax.f32 %v3867, %v3937
  %v3957 = vmax.f32 %v3868, %v3940
  %vm3958 = vcmask 72704
  %3959 = vst.msk [vmem:[%s9] sm:$0xff] %vm3958, %v3942
  %3960 = vst.msk [vmem:[%s9 + $0x8] sm:$0xff] %vm3958, %v3943
  %3961 = vst.msk [vmem:[%s9 + $0x10] sm:$0xff] %vm3958, %v3944
  %3962 = vst.msk [vmem:[%s9 + $0x18] sm:$0xff] %vm3958, %v3945
  %3963 = vst.msk [vmem:[%s9 + $0x20] sm:$0xff] %vm3958, %v3946
  %3964 = vst.msk [vmem:[%s9 + $0x28] sm:$0xff] %vm3958, %v3947
  %3965 = vst.msk [vmem:[%s9 + $0x30] sm:$0xff] %vm3958, %v3948
  %3966 = vst.msk [vmem:[%s9 + $0x38] sm:$0xff] %vm3958, %v3949
  %3967 = vst.msk [vmem:[%s9 + $0x40] sm:$0xff] %vm3958, %v3950
  %3968 = vst.msk [vmem:[%s9 + $0x48] sm:$0xff] %vm3958, %v3951
  %3969 = vst.msk [vmem:[%s9 + $0x50] sm:$0xff] %vm3958, %v3952
  %3970 = vst.msk [vmem:[%s9 + $0x58] sm:$0xff] %vm3958, %v3953
  %3971 = vst.msk [vmem:[%s9 + $0x60] sm:$0xff] %vm3958, %v3954
  %3972 = vst.msk [vmem:[%s9 + $0x68] sm:$0xff] %vm3958, %v3955
  %3973 = vst.msk [vmem:[%s9 + $0x70] sm:$0xff] %vm3958, %v3956
  %3974 = vst.msk [vmem:[%s9 + $0x78] sm:$0xff] %vm3958, %v3957
  // Predicated region
  $region38: #{simple_conv_model.1} parent=0 // pred_check
    _
  $region39: #{simple_conv_model.1} parent=0 // pred_check_branch
    %3976 = sbr.rel (0) target = $region41
  $region40: #{simple_conv_model.1} parent=0 // pred_region
    _
  $region41: #{simple_conv_model.1} parent=0 // pred_fallthru
    _
  // Predicated region
  $region42: #{simple_conv_model.1} parent=0 // pred_check
    _
  $region43: #{simple_conv_model.1} parent=0 // pred_check_branch
    %3978 = sbr.rel (0) target = $region45
  $region44: #{simple_conv_model.1} parent=0 // pred_region
    _
  $region45: #{simple_conv_model.1} parent=0 // pred_fallthru
    _

</llo_original>
